<compile_context>
chip_gen: v7x
topology: tpu7x:2x2x1
jax: 0.10.0
libtpu: 0.0.40
codegen_flags: <defaults>
</compile_context>

<pallas_src>
import functools

import jax
import jax.numpy as jnp
import numpy as np
from jax import lax
from jax.experimental import pallas as pl
from jax.experimental.pallas import tpu as pltpu


# ----------------------------------------------------------------------------
# Fused forward kernel (one batch element per grid step)
# ----------------------------------------------------------------------------
def _fused_forward_kernel(x_ref, *refs, K, n_blocks):
    # refs = [conv0_w, bn0_s, bn0_b,
    #         (w1, s1, b1, w2, s2, b2) * n_blocks,
    #         fcT, fcb, o_ref]
    o_ref = refs[-1]
    prm = refs[:-1]
    pad = K // 2
    margin = 2 * pad                       # zero margin kept on each side of valid data

    def conv_bn(feat, off, length, w_ref, s_ref, b_ref):
        """Conv1d(padding=K//2, bias=False) + folded BatchNorm.

        `feat` is a (C_in, W) f32 buffer whose columns [off, off+length) hold the
        activation; every other column is exactly zero, so the conv's zero padding
        is already materialized.  Returns the raw (C_out, W-K+1) buffer (garbage
        outside the new valid range -- the caller masks it or pools past it) plus
        the new static (off, length)."""
        c_in, W = feat.shape
        w_out = W - K + 1
        c_out = w_ref.shape[1]
        assert off >= pad and (off - pad) + (length + 2 * pad - K + 1) <= w_out
        xb = feat.astype(w_ref.dtype)               # bf16 (or f32) matmul inputs
        acc = jnp.zeros((c_out, w_out), dtype=jnp.float32)
        for k in range(K):                          # static unroll over taps (MXU)
            acc = acc + jnp.dot(w_ref[k], xb[:, k:k + w_out],
                                preferred_element_type=jnp.float32)
        y = acc * s_ref[...] + b_ref[...]           # BN epilogue in f32
        return y, off - pad, length + 2 * pad - K + 1

    def mask_valid(y, off, length):
        # Zero everything outside the valid range to restore the buffer invariant.
        c = lax.broadcasted_iota(jnp.int32, y.shape, 1)
        return jnp.where((c >= off) & (c < off + length), y, 0.0)

    def maxpool2_relu(y, off, length):
        """MaxPool1d(2) (floor) + ReLU, re-centred into a fresh buffer with `margin`
        zero columns on each side.  Down-sampling via two 0/1 selection matmuls on
        the MXU (strided lane gathers don't lower reliably on TPU); only valid
        columns of `y` are ever selected, so no pre-mask is needed."""
        W_in = y.shape[1]
        lp = length // 2
        W_new = lp + 2 * margin
        r = lax.broadcasted_iota(jnp.int32, (W_in, W_new), 0)
        c = lax.broadcasted_iota(jnp.int32, (W_in, W_new), 1)
        j = c - margin
        in_rng = (j >= 0) & (j < lp)
        s_even = jnp.where(in_rng & (r == off + 2 * j), 1.0, 0.0)
        s_odd = jnp.where(in_rng & (r == off + 2 * j + 1), 1.0, 0.0)
        pooled = jnp.maximum(
            jnp.dot(y, s_even, preferred_element_type=jnp.float32),
            jnp.dot(y, s_odd, preferred_element_type=jnp.float32))
        return jnp.maximum(pooled, 0.0), margin, lp

    x = x_ref[0].astype(jnp.float32)               # (C0, L0 + 2*margin), zero margins
    off, length = margin, x.shape[1] - 2 * margin

    # Stem: Conv + BN + ReLU
    y, off, length = conv_bn(x, off, length, prm[0], prm[1], prm[2])
    feat = mask_valid(jnp.maximum(y, 0.0), off, length)

    i = 3
    for _ in range(n_blocks):
        w1, s1, b1, w2, s2, b2 = prm[i:i + 6]
        i += 6
        # Conv + BN + MaxPool(2) + ReLU
        y, off, length = conv_bn(feat, off, length, w1, s1, b1)
        feat, off, length = maxpool2_relu(y, off, length)
        # Conv + BN + ReLU
        y, off, length = conv_bn(feat, off, length, w2, s2, b2)
        feat = mask_valid(jnp.maximum(y, 0.0), off, length)

    # Global average pool over time + Linear head (f32).  FC is linear, so apply it
    # first and reduce over time afterwards; zero margins contribute nothing.
    fcT, fcb = prm[i], prm[i + 1]                  # (n_out, C_last), (n_out, 1)
    z = jnp.dot(fcT[...], feat, preferred_element_type=jnp.float32)   # (n_out, W)
    out = jnp.sum(z, axis=1, keepdims=True) * (1.0 / float(length)) + fcb[...]
    o_ref[0] = out.astype(o_ref.dtype)             # (n_out, 1)


def _full_block_spec(arr):
    nd = arr.ndim
    return pl.BlockSpec(arr.shape, lambda b, _nd=nd: (0,) * _nd)


# ----------------------------------------------------------------------------
# Wrapper
# ----------------------------------------------------------------------------
def eegsimpleconv_forward(x, params, kernel_size, compute_dtype=jnp.bfloat16):
    """Full EEGSimpleConv forward as one fused Pallas kernel (resample == Identity)."""
    B, C0, L0 = x.shape
    K = kernel_size
    margin = 2 * (K // 2)
    W0 = L0 + 2 * margin
    # One-time zero margin around the raw network input (tiny; all intermediate
    # padding is handled inside the kernel via the zero-margin buffer invariant).
    x_buf = jnp.pad(x.astype(jnp.float32), ((0, 0), (0, 0), (margin, margin)))

    ops = [params["conv0_w"].astype(compute_dtype),
           params["bn0_scale"], params["bn0_bias"]]
    for blk in params["blocks"]:
        ops += [blk["w1"].astype(compute_dtype), blk["s1"], blk["b1"],
                blk["w2"].astype(compute_dtype), blk["s2"], blk["b2"]]
    fcT = jnp.transpose(params["fc_w"], (1, 0)).astype(jnp.float32)   # (n_out, C_last)
    fcb = params["fc_b"].reshape(-1, 1).astype(jnp.float32)           # (n_out, 1)
    ops += [fcT, fcb]

    n_out = fcT.shape[0]
    n_blocks = len(params["blocks"])
    kernel = functools.partial(_fused_forward_kernel, K=K, n_blocks=n_blocks)

    out = pl.pallas_call(
        kernel,
        out_shape=jax.ShapeDtypeStruct((B, n_out, 1), jnp.float32),
        grid_spec=pltpu.PrefetchScalarGridSpec(
            num_scalar_prefetch=0,
            grid=(B,),
            in_specs=[pl.BlockSpec((1, C0, W0), lambda b: (b, 0, 0))]
                     + [_full_block_spec(o) for o in ops],
            out_specs=pl.BlockSpec((1, n_out, 1), lambda b: (b, 0, 0)),
        ),
        compiler_params=pltpu.CompilerParams(
            dimension_semantics=("parallel",),          # batch across TCs (v7x)
            vmem_limit_bytes=48 * 1024 * 1024,          # headroom on all generations
        ),
    )(x_buf, *ops)
    return out[:, :, 0]


# ----------------------------------------------------------------------------
# Deterministic parameter initialization (synthetic weights, no checkpoint)
# ----------------------------------------------------------------------------
def _bn_fold(c):
    gamma = 1.0 + 0.01 * jnp.arange(c, dtype=jnp.float32)
    beta = 0.02 * jnp.arange(c, dtype=jnp.float32) - 0.01 * c
    running_mean = 0.005 * jnp.arange(c, dtype=jnp.float32)
    running_var = 1.0 + 0.03 * jnp.arange(c, dtype=jnp.float32)
    eps = 1e-5
    scale = gamma / jnp.sqrt(running_var + eps)
    bias = beta - running_mean * scale
    return scale.reshape(c, 1), bias.reshape(c, 1)


def init_params(key, n_chans, n_outputs, feature_maps, n_convs, kernel_size):
    n_keys = 1 + 2 * n_convs + 2
    keys = list(jax.random.split(key, n_keys))
    ki = 0

    params = {}
    params["conv0_w"] = 0.1 * jax.random.normal(
        keys[ki], (kernel_size, feature_maps, n_chans), dtype=jnp.float32); ki += 1
    params["bn0_scale"], params["bn0_bias"] = _bn_fold(feature_maps)

    blocks = []
    old_fm = feature_maps
    new_fm = feature_maps
    for i in range(n_convs):
        if i > 0:
            new_fm = int(1.414 * new_fm)
        w1 = 0.1 * jax.random.normal(keys[ki], (kernel_size, new_fm, old_fm),
                                     dtype=jnp.float32); ki += 1
        s1, b1 = _bn_fold(new_fm)
        w2 = 0.1 * jax.random.normal(keys[ki], (kernel_size, new_fm, new_fm),
                                     dtype=jnp.float32); ki += 1
        s2, b2 = _bn_fold(new_fm)
        blocks.append(dict(w1=w1, s1=s1, b1=b1, w2=w2, s2=s2, b2=b2))
        old_fm = new_fm
    params["blocks"] = blocks

    params["fc_w"] = 0.1 * jax.random.normal(keys[ki], (old_fm, n_outputs),
                                             dtype=jnp.float32); ki += 1
    params["fc_b"] = 0.1 * jax.random.normal(keys[ki], (n_outputs,),
                                             dtype=jnp.float32); ki += 1
    return params


# ----------------------------------------------------------------------------
# Pure-JAX reference (mirrors the PyTorch forward) for the correctness check
# ----------------------------------------------------------------------------
def maxpool1d_2(x):
    # MaxPool1d(kernel=2, stride=2), floor mode (drops last sample if L is odd).
    B, C, L = x.shape
    Lp = L // 2
    return jnp.max(x[:, :, : 2 * Lp].reshape(B, C, Lp, 2), axis=-1)


def ref_forward(x, params, kernel_size):
    pad = kernel_size // 2

    def conv(x, w_koi):
        w_oik = jnp.transpose(w_koi, (1, 2, 0))             # (C_out, C_in, K)
        return lax.conv_general_dilated(
            x, w_oik, window_strides=(1,), padding=[(pad, pad)],
            dimension_numbers=("NCH", "OIH", "NCH"))

    def bn(x, s, b):
        return x * s[None, :, :] + b[None, :, :]

    feat = jax.nn.relu(bn(conv(x, params["conv0_w"]),
                          params["bn0_scale"], params["bn0_bias"]))
    for blk in params["blocks"]:
        feat = bn(conv(feat, blk["w1"]), blk["s1"], blk["b1"])
        feat = maxpool1d_2(feat)
        feat = jax.nn.relu(feat)
        feat = jax.nn.relu(bn(conv(feat, blk["w2"]), blk["s2"], blk["b2"]))
    pooled = feat.mean(axis=2)
    return pooled @ params["fc_w"] + params["fc_b"]


# ----------------------------------------------------------------------------
if __name__ == "__main__":
    # Small, forward-consistent shapes: (batch, n_chans, n_times)
    B, n_chans, n_times = 2, 4, 16
    feature_maps, n_convs, kernel_size, n_outputs = 16, 2, 8, 3

    key = jax.random.PRNGKey(0)
    k_x, k_p = jax.random.split(key)
    x = jax.random.normal(k_x, (B, n_chans, n_times), dtype=jnp.float32)
    params = init_params(k_p, n_chans, n_outputs, feature_maps, n_convs, kernel_size)

    ref = ref_forward(x, params, kernel_size)

    # f32 path: algorithmically exact (tolerance covers MXU f32 pass differences).
    out_f32 = jax.block_until_ready(
        eegsimpleconv_forward(x, params, kernel_size, compute_dtype=jnp.float32))
    assert out_f32.shape == (B, n_outputs)
    np.testing.assert_allclose(np.asarray(out_f32), np.asarray(ref),
                               rtol=1e-3, atol=1e-3)

    # Default bf16-matmul path (f32 accumulation + f32 epilogues): loose tolerance.
    out_bf16 = jax.block_until_ready(
        eegsimpleconv_forward(x, params, kernel_size, compute_dtype=jnp.bfloat16))
    np.testing.assert_allclose(np.asarray(out_bf16), np.asarray(ref),
                               rtol=1e-1, atol=1e-1)

    print("KERNEL_OK")
</pallas_src>

<mosaic_0001>
module attributes {stable_mosaic.version = 11 : i64} {
  func.func @_fused_forward_kernel(%arg0: i32, %arg1: memref<1x4x32xf32, #tpu.memory_space<vmem>>, %arg2: memref<8x16x4xf32, #tpu.memory_space<vmem>>, %arg3: memref<16x1xf32, #tpu.memory_space<vmem>>, %arg4: memref<16x1xf32, #tpu.memory_space<vmem>>, %arg5: memref<8x16x16xf32, #tpu.memory_space<vmem>>, %arg6: memref<16x1xf32, #tpu.memory_space<vmem>>, %arg7: memref<16x1xf32, #tpu.memory_space<vmem>>, %arg8: memref<8x16x16xf32, #tpu.memory_space<vmem>>, %arg9: memref<16x1xf32, #tpu.memory_space<vmem>>, %arg10: memref<16x1xf32, #tpu.memory_space<vmem>>, %arg11: memref<8x22x16xf32, #tpu.memory_space<vmem>>, %arg12: memref<22x1xf32, #tpu.memory_space<vmem>>, %arg13: memref<22x1xf32, #tpu.memory_space<vmem>>, %arg14: memref<8x22x22xf32, #tpu.memory_space<vmem>>, %arg15: memref<22x1xf32, #tpu.memory_space<vmem>>, %arg16: memref<22x1xf32, #tpu.memory_space<vmem>>, %arg17: memref<3x22xf32, #tpu.memory_space<vmem>>, %arg18: memref<3x1xf32, #tpu.memory_space<vmem>>, %arg19: memref<1x3x1xf32, #tpu.memory_space<vmem>>) attributes {dimension_semantics = [#tpu.dimension_semantics<parallel>], iteration_bounds = array<i64: 2>, scalar_prefetch = 0 : i64, scratch_operands = 0 : i64, tpu.core_type = #tpu.core_type<tc>, window_params = [{transform_indices = @transform_0, window_bounds = array<i64: 1, 4, 32>}, {pipeline_mode = #tpu.pipeline_mode<synchronous>, transform_indices = @transform_1, window_bounds = array<i64: 8, 16, 4>}, {pipeline_mode = #tpu.pipeline_mode<synchronous>, transform_indices = @transform_2, window_bounds = array<i64: 16, 1>}, {pipeline_mode = #tpu.pipeline_mode<synchronous>, transform_indices = @transform_3, window_bounds = array<i64: 16, 1>}, {pipeline_mode = #tpu.pipeline_mode<synchronous>, transform_indices = @transform_4, window_bounds = array<i64: 8, 16, 16>}, {pipeline_mode = #tpu.pipeline_mode<synchronous>, transform_indices = @transform_5, window_bounds = array<i64: 16, 1>}, {pipeline_mode = #tpu.pipeline_mode<synchronous>, transform_indices = @transform_6, window_bounds = array<i64: 16, 1>}, {pipeline_mode = #tpu.pipeline_mode<synchronous>, transform_indices = @transform_7, window_bounds = array<i64: 8, 16, 16>}, {pipeline_mode = #tpu.pipeline_mode<synchronous>, transform_indices = @transform_8, window_bounds = array<i64: 16, 1>}, {pipeline_mode = #tpu.pipeline_mode<synchronous>, transform_indices = @transform_9, window_bounds = array<i64: 16, 1>}, {pipeline_mode = #tpu.pipeline_mode<synchronous>, transform_indices = @transform_10, window_bounds = array<i64: 8, 22, 16>}, {pipeline_mode = #tpu.pipeline_mode<synchronous>, transform_indices = @transform_11, window_bounds = array<i64: 22, 1>}, {pipeline_mode = #tpu.pipeline_mode<synchronous>, transform_indices = @transform_12, window_bounds = array<i64: 22, 1>}, {pipeline_mode = #tpu.pipeline_mode<synchronous>, transform_indices = @transform_13, window_bounds = array<i64: 8, 22, 22>}, {pipeline_mode = #tpu.pipeline_mode<synchronous>, transform_indices = @transform_14, window_bounds = array<i64: 22, 1>}, {pipeline_mode = #tpu.pipeline_mode<synchronous>, transform_indices = @transform_15, window_bounds = array<i64: 22, 1>}, {pipeline_mode = #tpu.pipeline_mode<synchronous>, transform_indices = @transform_16, window_bounds = array<i64: 3, 22>}, {pipeline_mode = #tpu.pipeline_mode<synchronous>, transform_indices = @transform_17, window_bounds = array<i64: 3, 1>}, {transform_indices = @transform_18, window_bounds = array<i64: 1, 3, 1>}]} {
    %c0 = arith.constant 0 : index
    %c0_0 = arith.constant 0 : index
    %c0_1 = arith.constant 0 : index
    %0 = vector.load %arg1[%c0, %c0_0, %c0_1] : memref<1x4x32xf32, #tpu.memory_space<vmem>>, vector<1x4x32xf32>
    %1 = vector.shape_cast %0 : vector<1x4x32xf32> to vector<4x32xf32>
    %cst = arith.constant 0.000000e+00 : f32
    %2 = vector.broadcast %cst : f32 to vector<16x25xf32>
    %c0_2 = arith.constant 0 : index
    %c0_3 = arith.constant 0 : index
    %c0_4 = arith.constant 0 : index
    %3 = vector.load %arg2[%c0_2, %c0_3, %c0_4] : memref<8x16x4xf32, #tpu.memory_space<vmem>>, vector<1x16x4xf32>
    %4 = vector.shape_cast %3 : vector<1x16x4xf32> to vector<16x4xf32>
    %5 = vector.extract_strided_slice %1 {offsets = [0, 0], sizes = [4, 25], strides = [1, 1]} : vector<4x32xf32> to vector<4x25xf32>
    %cst_5 = arith.constant dense<0.000000e+00> : vector<16x25xf32>
    %6 = tpu.matmul %4, %5, %cst_5 {dimension_numbers = #tpu.dot_dimension_numbers<[1], [0], [0], [1], [0, 0, 1, 1], [], []>} : vector<16x4xf32>, vector<4x25xf32>, vector<16x25xf32> -> vector<16x25xf32>
    %7 = arith.addf %2, %6 : vector<16x25xf32>
    %c1 = arith.constant 1 : index
    %c0_6 = arith.constant 0 : index
    %c0_7 = arith.constant 0 : index
    %8 = vector.load %arg2[%c1, %c0_6, %c0_7] : memref<8x16x4xf32, #tpu.memory_space<vmem>>, vector<1x16x4xf32>
    %9 = vector.shape_cast %8 : vector<1x16x4xf32> to vector<16x4xf32>
    %10 = vector.extract_strided_slice %1 {offsets = [0, 1], sizes = [4, 25], strides = [1, 1]} : vector<4x32xf32> to vector<4x25xf32>
    %cst_8 = arith.constant dense<0.000000e+00> : vector<16x25xf32>
    %11 = tpu.matmul %9, %10, %cst_8 {dimension_numbers = #tpu.dot_dimension_numbers<[1], [0], [0], [1], [0, 0, 1, 1], [], []>} : vector<16x4xf32>, vector<4x25xf32>, vector<16x25xf32> -> vector<16x25xf32>
    %12 = arith.addf %7, %11 : vector<16x25xf32>
    %c2 = arith.constant 2 : index
    %c0_9 = arith.constant 0 : index
    %c0_10 = arith.constant 0 : index
    %13 = vector.load %arg2[%c2, %c0_9, %c0_10] : memref<8x16x4xf32, #tpu.memory_space<vmem>>, vector<1x16x4xf32>
    %14 = vector.shape_cast %13 : vector<1x16x4xf32> to vector<16x4xf32>
    %15 = vector.extract_strided_slice %1 {offsets = [0, 2], sizes = [4, 25], strides = [1, 1]} : vector<4x32xf32> to vector<4x25xf32>
    %cst_11 = arith.constant dense<0.000000e+00> : vector<16x25xf32>
    %16 = tpu.matmul %14, %15, %cst_11 {dimension_numbers = #tpu.dot_dimension_numbers<[1], [0], [0], [1], [0, 0, 1, 1], [], []>} : vector<16x4xf32>, vector<4x25xf32>, vector<16x25xf32> -> vector<16x25xf32>
    %17 = arith.addf %12, %16 : vector<16x25xf32>
    %c3 = arith.constant 3 : index
    %c0_12 = arith.constant 0 : index
    %c0_13 = arith.constant 0 : index
    %18 = vector.load %arg2[%c3, %c0_12, %c0_13] : memref<8x16x4xf32, #tpu.memory_space<vmem>>, vector<1x16x4xf32>
    %19 = vector.shape_cast %18 : vector<1x16x4xf32> to vector<16x4xf32>
    %20 = vector.extract_strided_slice %1 {offsets = [0, 3], sizes = [4, 25], strides = [1, 1]} : vector<4x32xf32> to vector<4x25xf32>
    %cst_14 = arith.constant dense<0.000000e+00> : vector<16x25xf32>
    %21 = tpu.matmul %19, %20, %cst_14 {dimension_numbers = #tpu.dot_dimension_numbers<[1], [0], [0], [1], [0, 0, 1, 1], [], []>} : vector<16x4xf32>, vector<4x25xf32>, vector<16x25xf32> -> vector<16x25xf32>
    %22 = arith.addf %17, %21 : vector<16x25xf32>
    %c4 = arith.constant 4 : index
    %c0_15 = arith.constant 0 : index
    %c0_16 = arith.constant 0 : index
    %23 = vector.load %arg2[%c4, %c0_15, %c0_16] : memref<8x16x4xf32, #tpu.memory_space<vmem>>, vector<1x16x4xf32>
    %24 = vector.shape_cast %23 : vector<1x16x4xf32> to vector<16x4xf32>
    %25 = vector.extract_strided_slice %1 {offsets = [0, 4], sizes = [4, 25], strides = [1, 1]} : vector<4x32xf32> to vector<4x25xf32>
    %cst_17 = arith.constant dense<0.000000e+00> : vector<16x25xf32>
    %26 = tpu.matmul %24, %25, %cst_17 {dimension_numbers = #tpu.dot_dimension_numbers<[1], [0], [0], [1], [0, 0, 1, 1], [], []>} : vector<16x4xf32>, vector<4x25xf32>, vector<16x25xf32> -> vector<16x25xf32>
    %27 = arith.addf %22, %26 : vector<16x25xf32>
    %c5 = arith.constant 5 : index
    %c0_18 = arith.constant 0 : index
    %c0_19 = arith.constant 0 : index
    %28 = vector.load %arg2[%c5, %c0_18, %c0_19] : memref<8x16x4xf32, #tpu.memory_space<vmem>>, vector<1x16x4xf32>
    %29 = vector.shape_cast %28 : vector<1x16x4xf32> to vector<16x4xf32>
    %30 = vector.extract_strided_slice %1 {offsets = [0, 5], sizes = [4, 25], strides = [1, 1]} : vector<4x32xf32> to vector<4x25xf32>
    %cst_20 = arith.constant dense<0.000000e+00> : vector<16x25xf32>
    %31 = tpu.matmul %29, %30, %cst_20 {dimension_numbers = #tpu.dot_dimension_numbers<[1], [0], [0], [1], [0, 0, 1, 1], [], []>} : vector<16x4xf32>, vector<4x25xf32>, vector<16x25xf32> -> vector<16x25xf32>
    %32 = arith.addf %27, %31 : vector<16x25xf32>
    %c6 = arith.constant 6 : index
    %c0_21 = arith.constant 0 : index
    %c0_22 = arith.constant 0 : index
    %33 = vector.load %arg2[%c6, %c0_21, %c0_22] : memref<8x16x4xf32, #tpu.memory_space<vmem>>, vector<1x16x4xf32>
    %34 = vector.shape_cast %33 : vector<1x16x4xf32> to vector<16x4xf32>
    %35 = vector.extract_strided_slice %1 {offsets = [0, 6], sizes = [4, 25], strides = [1, 1]} : vector<4x32xf32> to vector<4x25xf32>
    %cst_23 = arith.constant dense<0.000000e+00> : vector<16x25xf32>
    %36 = tpu.matmul %34, %35, %cst_23 {dimension_numbers = #tpu.dot_dimension_numbers<[1], [0], [0], [1], [0, 0, 1, 1], [], []>} : vector<16x4xf32>, vector<4x25xf32>, vector<16x25xf32> -> vector<16x25xf32>
    %37 = arith.addf %32, %36 : vector<16x25xf32>
    %c7 = arith.constant 7 : index
    %c0_24 = arith.constant 0 : index
    %c0_25 = arith.constant 0 : index
    %38 = vector.load %arg2[%c7, %c0_24, %c0_25] : memref<8x16x4xf32, #tpu.memory_space<vmem>>, vector<1x16x4xf32>
    %39 = vector.shape_cast %38 : vector<1x16x4xf32> to vector<16x4xf32>
    %40 = vector.extract_strided_slice %1 {offsets = [0, 7], sizes = [4, 25], strides = [1, 1]} : vector<4x32xf32> to vector<4x25xf32>
    %cst_26 = arith.constant dense<0.000000e+00> : vector<16x25xf32>
    %41 = tpu.matmul %39, %40, %cst_26 {dimension_numbers = #tpu.dot_dimension_numbers<[1], [0], [0], [1], [0, 0, 1, 1], [], []>} : vector<16x4xf32>, vector<4x25xf32>, vector<16x25xf32> -> vector<16x25xf32>
    %42 = arith.addf %37, %41 : vector<16x25xf32>
    %c0_27 = arith.constant 0 : index
    %c0_28 = arith.constant 0 : index
    %43 = vector.load %arg3[%c0_27, %c0_28] : memref<16x1xf32, #tpu.memory_space<vmem>>, vector<16x1xf32>
    %44 = vector.broadcast %43 : vector<16x1xf32> to vector<16x25xf32>
    %45 = arith.mulf %42, %44 : vector<16x25xf32>
    %c0_29 = arith.constant 0 : index
    %c0_30 = arith.constant 0 : index
    %46 = vector.load %arg4[%c0_29, %c0_30] : memref<16x1xf32, #tpu.memory_space<vmem>>, vector<16x1xf32>
    %47 = vector.broadcast %46 : vector<16x1xf32> to vector<16x25xf32>
    %48 = arith.addf %45, %47 : vector<16x25xf32>
    %cst_31 = arith.constant 0.000000e+00 : f32
    %49 = vector.broadcast %cst_31 : f32 to vector<16x25xf32>
    %50 = arith.maximumf %48, %49 : vector<16x25xf32>
    %51 = tpu.iota {dimensions = array<i32: 1>} : vector<16x25xi32>
    %c4_i32 = arith.constant 4 : i32
    %52 = vector.broadcast %c4_i32 : i32 to vector<16x25xi32>
    %53 = arith.cmpi sge, %51, %52 : vector<16x25xi32>
    %c21_i32 = arith.constant 21 : i32
    %54 = vector.broadcast %c21_i32 : i32 to vector<16x25xi32>
    %55 = arith.cmpi slt, %51, %54 : vector<16x25xi32>
    %56 = arith.andi %53, %55 : vector<16x25xi1>
    %cst_32 = arith.constant 0.000000e+00 : f32
    %57 = vector.broadcast %cst_32 : f32 to vector<16x25xf32>
    %58 = arith.select %56, %50, %57 : vector<16x25xi1>, vector<16x25xf32>
    %cst_33 = arith.constant 0.000000e+00 : f32
    %59 = vector.broadcast %cst_33 : f32 to vector<16x18xf32>
    %c0_34 = arith.constant 0 : index
    %c0_35 = arith.constant 0 : index
    %c0_36 = arith.constant 0 : index
    %60 = vector.load %arg5[%c0_34, %c0_35, %c0_36] : memref<8x16x16xf32, #tpu.memory_space<vmem>>, vector<1x16x16xf32>
    %61 = vector.shape_cast %60 : vector<1x16x16xf32> to vector<16x16xf32>
    %62 = vector.extract_strided_slice %58 {offsets = [0, 0], sizes = [16, 18], strides = [1, 1]} : vector<16x25xf32> to vector<16x18xf32>
    %cst_37 = arith.constant dense<0.000000e+00> : vector<16x18xf32>
    %63 = tpu.matmul %61, %62, %cst_37 {dimension_numbers = #tpu.dot_dimension_numbers<[1], [0], [0], [1], [0, 0, 1, 1], [], []>} : vector<16x16xf32>, vector<16x18xf32>, vector<16x18xf32> -> vector<16x18xf32>
    %64 = arith.addf %59, %63 : vector<16x18xf32>
    %c1_38 = arith.constant 1 : index
    %c0_39 = arith.constant 0 : index
    %c0_40 = arith.constant 0 : index
    %65 = vector.load %arg5[%c1_38, %c0_39, %c0_40] : memref<8x16x16xf32, #tpu.memory_space<vmem>>, vector<1x16x16xf32>
    %66 = vector.shape_cast %65 : vector<1x16x16xf32> to vector<16x16xf32>
    %67 = vector.extract_strided_slice %58 {offsets = [0, 1], sizes = [16, 18], strides = [1, 1]} : vector<16x25xf32> to vector<16x18xf32>
    %cst_41 = arith.constant dense<0.000000e+00> : vector<16x18xf32>
    %68 = tpu.matmul %66, %67, %cst_41 {dimension_numbers = #tpu.dot_dimension_numbers<[1], [0], [0], [1], [0, 0, 1, 1], [], []>} : vector<16x16xf32>, vector<16x18xf32>, vector<16x18xf32> -> vector<16x18xf32>
    %69 = arith.addf %64, %68 : vector<16x18xf32>
    %c2_42 = arith.constant 2 : index
    %c0_43 = arith.constant 0 : index
    %c0_44 = arith.constant 0 : index
    %70 = vector.load %arg5[%c2_42, %c0_43, %c0_44] : memref<8x16x16xf32, #tpu.memory_space<vmem>>, vector<1x16x16xf32>
    %71 = vector.shape_cast %70 : vector<1x16x16xf32> to vector<16x16xf32>
    %72 = vector.extract_strided_slice %58 {offsets = [0, 2], sizes = [16, 18], strides = [1, 1]} : vector<16x25xf32> to vector<16x18xf32>
    %cst_45 = arith.constant dense<0.000000e+00> : vector<16x18xf32>
    %73 = tpu.matmul %71, %72, %cst_45 {dimension_numbers = #tpu.dot_dimension_numbers<[1], [0], [0], [1], [0, 0, 1, 1], [], []>} : vector<16x16xf32>, vector<16x18xf32>, vector<16x18xf32> -> vector<16x18xf32>
    %74 = arith.addf %69, %73 : vector<16x18xf32>
    %c3_46 = arith.constant 3 : index
    %c0_47 = arith.constant 0 : index
    %c0_48 = arith.constant 0 : index
    %75 = vector.load %arg5[%c3_46, %c0_47, %c0_48] : memref<8x16x16xf32, #tpu.memory_space<vmem>>, vector<1x16x16xf32>
    %76 = vector.shape_cast %75 : vector<1x16x16xf32> to vector<16x16xf32>
    %77 = vector.extract_strided_slice %58 {offsets = [0, 3], sizes = [16, 18], strides = [1, 1]} : vector<16x25xf32> to vector<16x18xf32>
    %cst_49 = arith.constant dense<0.000000e+00> : vector<16x18xf32>
    %78 = tpu.matmul %76, %77, %cst_49 {dimension_numbers = #tpu.dot_dimension_numbers<[1], [0], [0], [1], [0, 0, 1, 1], [], []>} : vector<16x16xf32>, vector<16x18xf32>, vector<16x18xf32> -> vector<16x18xf32>
    %79 = arith.addf %74, %78 : vector<16x18xf32>
    %c4_50 = arith.constant 4 : index
    %c0_51 = arith.constant 0 : index
    %c0_52 = arith.constant 0 : index
    %80 = vector.load %arg5[%c4_50, %c0_51, %c0_52] : memref<8x16x16xf32, #tpu.memory_space<vmem>>, vector<1x16x16xf32>
    %81 = vector.shape_cast %80 : vector<1x16x16xf32> to vector<16x16xf32>
    %82 = vector.extract_strided_slice %58 {offsets = [0, 4], sizes = [16, 18], strides = [1, 1]} : vector<16x25xf32> to vector<16x18xf32>
    %cst_53 = arith.constant dense<0.000000e+00> : vector<16x18xf32>
    %83 = tpu.matmul %81, %82, %cst_53 {dimension_numbers = #tpu.dot_dimension_numbers<[1], [0], [0], [1], [0, 0, 1, 1], [], []>} : vector<16x16xf32>, vector<16x18xf32>, vector<16x18xf32> -> vector<16x18xf32>
    %84 = arith.addf %79, %83 : vector<16x18xf32>
    %c5_54 = arith.constant 5 : index
    %c0_55 = arith.constant 0 : index
    %c0_56 = arith.constant 0 : index
    %85 = vector.load %arg5[%c5_54, %c0_55, %c0_56] : memref<8x16x16xf32, #tpu.memory_space<vmem>>, vector<1x16x16xf32>
    %86 = vector.shape_cast %85 : vector<1x16x16xf32> to vector<16x16xf32>
    %87 = vector.extract_strided_slice %58 {offsets = [0, 5], sizes = [16, 18], strides = [1, 1]} : vector<16x25xf32> to vector<16x18xf32>
    %cst_57 = arith.constant dense<0.000000e+00> : vector<16x18xf32>
    %88 = tpu.matmul %86, %87, %cst_57 {dimension_numbers = #tpu.dot_dimension_numbers<[1], [0], [0], [1], [0, 0, 1, 1], [], []>} : vector<16x16xf32>, vector<16x18xf32>, vector<16x18xf32> -> vector<16x18xf32>
    %89 = arith.addf %84, %88 : vector<16x18xf32>
    %c6_58 = arith.constant 6 : index
    %c0_59 = arith.constant 0 : index
    %c0_60 = arith.constant 0 : index
    %90 = vector.load %arg5[%c6_58, %c0_59, %c0_60] : memref<8x16x16xf32, #tpu.memory_space<vmem>>, vector<1x16x16xf32>
    %91 = vector.shape_cast %90 : vector<1x16x16xf32> to vector<16x16xf32>
    %92 = vector.extract_strided_slice %58 {offsets = [0, 6], sizes = [16, 18], strides = [1, 1]} : vector<16x25xf32> to vector<16x18xf32>
    %cst_61 = arith.constant dense<0.000000e+00> : vector<16x18xf32>
    %93 = tpu.matmul %91, %92, %cst_61 {dimension_numbers = #tpu.dot_dimension_numbers<[1], [0], [0], [1], [0, 0, 1, 1], [], []>} : vector<16x16xf32>, vector<16x18xf32>, vector<16x18xf32> -> vector<16x18xf32>
    %94 = arith.addf %89, %93 : vector<16x18xf32>
    %c7_62 = arith.constant 7 : index
    %c0_63 = arith.constant 0 : index
    %c0_64 = arith.constant 0 : index
    %95 = vector.load %arg5[%c7_62, %c0_63, %c0_64] : memref<8x16x16xf32, #tpu.memory_space<vmem>>, vector<1x16x16xf32>
    %96 = vector.shape_cast %95 : vector<1x16x16xf32> to vector<16x16xf32>
    %97 = vector.extract_strided_slice %58 {offsets = [0, 7], sizes = [16, 18], strides = [1, 1]} : vector<16x25xf32> to vector<16x18xf32>
    %cst_65 = arith.constant dense<0.000000e+00> : vector<16x18xf32>
    %98 = tpu.matmul %96, %97, %cst_65 {dimension_numbers = #tpu.dot_dimension_numbers<[1], [0], [0], [1], [0, 0, 1, 1], [], []>} : vector<16x16xf32>, vector<16x18xf32>, vector<16x18xf32> -> vector<16x18xf32>
    %99 = arith.addf %94, %98 : vector<16x18xf32>
    %c0_66 = arith.constant 0 : index
    %c0_67 = arith.constant 0 : index
    %100 = vector.load %arg6[%c0_66, %c0_67] : memref<16x1xf32, #tpu.memory_space<vmem>>, vector<16x1xf32>
    %101 = vector.broadcast %100 : vector<16x1xf32> to vector<16x18xf32>
    %102 = arith.mulf %99, %101 : vector<16x18xf32>
    %c0_68 = arith.constant 0 : index
    %c0_69 = arith.constant 0 : index
    %103 = vector.load %arg7[%c0_68, %c0_69] : memref<16x1xf32, #tpu.memory_space<vmem>>, vector<16x1xf32>
    %104 = vector.broadcast %103 : vector<16x1xf32> to vector<16x18xf32>
    %105 = arith.addf %102, %104 : vector<16x18xf32>
    %106 = tpu.iota {dimensions = array<i32: 0>} : vector<18x25xi32>
    %107 = tpu.iota {dimensions = array<i32: 1>} : vector<18x25xi32>
    %c8_i32 = arith.constant 8 : i32
    %108 = vector.broadcast %c8_i32 : i32 to vector<18x25xi32>
    %109 = arith.subi %107, %108 : vector<18x25xi32>
    %c0_i32 = arith.constant 0 : i32
    %110 = vector.broadcast %c0_i32 : i32 to vector<18x25xi32>
    %111 = arith.cmpi sge, %109, %110 : vector<18x25xi32>
    %c9_i32 = arith.constant 9 : i32
    %112 = vector.broadcast %c9_i32 : i32 to vector<18x25xi32>
    %113 = arith.cmpi slt, %109, %112 : vector<18x25xi32>
    %114 = arith.andi %111, %113 : vector<18x25xi1>
    %c2_i32 = arith.constant 2 : i32
    %115 = vector.broadcast %c2_i32 : i32 to vector<18x25xi32>
    %116 = arith.muli %115, %109 : vector<18x25xi32>
    %c0_i32_70 = arith.constant 0 : i32
    %117 = vector.broadcast %c0_i32_70 : i32 to vector<18x25xi32>
    %118 = arith.addi %117, %116 : vector<18x25xi32>
    %119 = arith.cmpi eq, %106, %118 : vector<18x25xi32>
    %120 = arith.andi %114, %119 : vector<18x25xi1>
    %cst_71 = arith.constant 1.000000e+00 : f32
    %cst_72 = arith.constant 0.000000e+00 : f32
    %121 = vector.broadcast %cst_71 : f32 to vector<18x25xf32>
    %122 = vector.broadcast %cst_72 : f32 to vector<18x25xf32>
    %123 = arith.select %120, %121, %122 : vector<18x25xi1>, vector<18x25xf32>
    %c2_i32_73 = arith.constant 2 : i32
    %124 = vector.broadcast %c2_i32_73 : i32 to vector<18x25xi32>
    %125 = arith.muli %124, %109 : vector<18x25xi32>
    %c0_i32_74 = arith.constant 0 : i32
    %126 = vector.broadcast %c0_i32_74 : i32 to vector<18x25xi32>
    %127 = arith.addi %126, %125 : vector<18x25xi32>
    %c1_i32 = arith.constant 1 : i32
    %128 = vector.broadcast %c1_i32 : i32 to vector<18x25xi32>
    %129 = arith.addi %127, %128 : vector<18x25xi32>
    %130 = arith.cmpi eq, %106, %129 : vector<18x25xi32>
    %131 = arith.andi %114, %130 : vector<18x25xi1>
    %cst_75 = arith.constant 1.000000e+00 : f32
    %cst_76 = arith.constant 0.000000e+00 : f32
    %132 = vector.broadcast %cst_75 : f32 to vector<18x25xf32>
    %133 = vector.broadcast %cst_76 : f32 to vector<18x25xf32>
    %134 = arith.select %131, %132, %133 : vector<18x25xi1>, vector<18x25xf32>
    %cst_77 = arith.constant dense<0.000000e+00> : vector<16x25xf32>
    %135 = tpu.matmul %105, %123, %cst_77 {dimension_numbers = #tpu.dot_dimension_numbers<[1], [0], [0], [1], [0, 0, 1, 1], [], []>} : vector<16x18xf32>, vector<18x25xf32>, vector<16x25xf32> -> vector<16x25xf32>
    %cst_78 = arith.constant dense<0.000000e+00> : vector<16x25xf32>
    %136 = tpu.matmul %105, %134, %cst_78 {dimension_numbers = #tpu.dot_dimension_numbers<[1], [0], [0], [1], [0, 0, 1, 1], [], []>} : vector<16x18xf32>, vector<18x25xf32>, vector<16x25xf32> -> vector<16x25xf32>
    %137 = arith.maximumf %135, %136 : vector<16x25xf32>
    %cst_79 = arith.constant 0.000000e+00 : f32
    %138 = vector.broadcast %cst_79 : f32 to vector<16x25xf32>
    %139 = arith.maximumf %137, %138 : vector<16x25xf32>
    %cst_80 = arith.constant 0.000000e+00 : f32
    %140 = vector.broadcast %cst_80 : f32 to vector<16x18xf32>
    %c0_81 = arith.constant 0 : index
    %c0_82 = arith.constant 0 : index
    %c0_83 = arith.constant 0 : index
    %141 = vector.load %arg8[%c0_81, %c0_82, %c0_83] : memref<8x16x16xf32, #tpu.memory_space<vmem>>, vector<1x16x16xf32>
    %142 = vector.shape_cast %141 : vector<1x16x16xf32> to vector<16x16xf32>
    %143 = vector.extract_strided_slice %139 {offsets = [0, 0], sizes = [16, 18], strides = [1, 1]} : vector<16x25xf32> to vector<16x18xf32>
    %cst_84 = arith.constant dense<0.000000e+00> : vector<16x18xf32>
    %144 = tpu.matmul %142, %143, %cst_84 {dimension_numbers = #tpu.dot_dimension_numbers<[1], [0], [0], [1], [0, 0, 1, 1], [], []>} : vector<16x16xf32>, vector<16x18xf32>, vector<16x18xf32> -> vector<16x18xf32>
    %145 = arith.addf %140, %144 : vector<16x18xf32>
    %c1_85 = arith.constant 1 : index
    %c0_86 = arith.constant 0 : index
    %c0_87 = arith.constant 0 : index
    %146 = vector.load %arg8[%c1_85, %c0_86, %c0_87] : memref<8x16x16xf32, #tpu.memory_space<vmem>>, vector<1x16x16xf32>
    %147 = vector.shape_cast %146 : vector<1x16x16xf32> to vector<16x16xf32>
    %148 = vector.extract_strided_slice %139 {offsets = [0, 1], sizes = [16, 18], strides = [1, 1]} : vector<16x25xf32> to vector<16x18xf32>
    %cst_88 = arith.constant dense<0.000000e+00> : vector<16x18xf32>
    %149 = tpu.matmul %147, %148, %cst_88 {dimension_numbers = #tpu.dot_dimension_numbers<[1], [0], [0], [1], [0, 0, 1, 1], [], []>} : vector<16x16xf32>, vector<16x18xf32>, vector<16x18xf32> -> vector<16x18xf32>
    %150 = arith.addf %145, %149 : vector<16x18xf32>
    %c2_89 = arith.constant 2 : index
    %c0_90 = arith.constant 0 : index
    %c0_91 = arith.constant 0 : index
    %151 = vector.load %arg8[%c2_89, %c0_90, %c0_91] : memref<8x16x16xf32, #tpu.memory_space<vmem>>, vector<1x16x16xf32>
    %152 = vector.shape_cast %151 : vector<1x16x16xf32> to vector<16x16xf32>
    %153 = vector.extract_strided_slice %139 {offsets = [0, 2], sizes = [16, 18], strides = [1, 1]} : vector<16x25xf32> to vector<16x18xf32>
    %cst_92 = arith.constant dense<0.000000e+00> : vector<16x18xf32>
    %154 = tpu.matmul %152, %153, %cst_92 {dimension_numbers = #tpu.dot_dimension_numbers<[1], [0], [0], [1], [0, 0, 1, 1], [], []>} : vector<16x16xf32>, vector<16x18xf32>, vector<16x18xf32> -> vector<16x18xf32>
    %155 = arith.addf %150, %154 : vector<16x18xf32>
    %c3_93 = arith.constant 3 : index
    %c0_94 = arith.constant 0 : index
    %c0_95 = arith.constant 0 : index
    %156 = vector.load %arg8[%c3_93, %c0_94, %c0_95] : memref<8x16x16xf32, #tpu.memory_space<vmem>>, vector<1x16x16xf32>
    %157 = vector.shape_cast %156 : vector<1x16x16xf32> to vector<16x16xf32>
    %158 = vector.extract_strided_slice %139 {offsets = [0, 3], sizes = [16, 18], strides = [1, 1]} : vector<16x25xf32> to vector<16x18xf32>
    %cst_96 = arith.constant dense<0.000000e+00> : vector<16x18xf32>
    %159 = tpu.matmul %157, %158, %cst_96 {dimension_numbers = #tpu.dot_dimension_numbers<[1], [0], [0], [1], [0, 0, 1, 1], [], []>} : vector<16x16xf32>, vector<16x18xf32>, vector<16x18xf32> -> vector<16x18xf32>
    %160 = arith.addf %155, %159 : vector<16x18xf32>
    %c4_97 = arith.constant 4 : index
    %c0_98 = arith.constant 0 : index
    %c0_99 = arith.constant 0 : index
    %161 = vector.load %arg8[%c4_97, %c0_98, %c0_99] : memref<8x16x16xf32, #tpu.memory_space<vmem>>, vector<1x16x16xf32>
    %162 = vector.shape_cast %161 : vector<1x16x16xf32> to vector<16x16xf32>
    %163 = vector.extract_strided_slice %139 {offsets = [0, 4], sizes = [16, 18], strides = [1, 1]} : vector<16x25xf32> to vector<16x18xf32>
    %cst_100 = arith.constant dense<0.000000e+00> : vector<16x18xf32>
    %164 = tpu.matmul %162, %163, %cst_100 {dimension_numbers = #tpu.dot_dimension_numbers<[1], [0], [0], [1], [0, 0, 1, 1], [], []>} : vector<16x16xf32>, vector<16x18xf32>, vector<16x18xf32> -> vector<16x18xf32>
    %165 = arith.addf %160, %164 : vector<16x18xf32>
    %c5_101 = arith.constant 5 : index
    %c0_102 = arith.constant 0 : index
    %c0_103 = arith.constant 0 : index
    %166 = vector.load %arg8[%c5_101, %c0_102, %c0_103] : memref<8x16x16xf32, #tpu.memory_space<vmem>>, vector<1x16x16xf32>
    %167 = vector.shape_cast %166 : vector<1x16x16xf32> to vector<16x16xf32>
    %168 = vector.extract_strided_slice %139 {offsets = [0, 5], sizes = [16, 18], strides = [1, 1]} : vector<16x25xf32> to vector<16x18xf32>
    %cst_104 = arith.constant dense<0.000000e+00> : vector<16x18xf32>
    %169 = tpu.matmul %167, %168, %cst_104 {dimension_numbers = #tpu.dot_dimension_numbers<[1], [0], [0], [1], [0, 0, 1, 1], [], []>} : vector<16x16xf32>, vector<16x18xf32>, vector<16x18xf32> -> vector<16x18xf32>
    %170 = arith.addf %165, %169 : vector<16x18xf32>
    %c6_105 = arith.constant 6 : index
    %c0_106 = arith.constant 0 : index
    %c0_107 = arith.constant 0 : index
    %171 = vector.load %arg8[%c6_105, %c0_106, %c0_107] : memref<8x16x16xf32, #tpu.memory_space<vmem>>, vector<1x16x16xf32>
    %172 = vector.shape_cast %171 : vector<1x16x16xf32> to vector<16x16xf32>
    %173 = vector.extract_strided_slice %139 {offsets = [0, 6], sizes = [16, 18], strides = [1, 1]} : vector<16x25xf32> to vector<16x18xf32>
    %cst_108 = arith.constant dense<0.000000e+00> : vector<16x18xf32>
    %174 = tpu.matmul %172, %173, %cst_108 {dimension_numbers = #tpu.dot_dimension_numbers<[1], [0], [0], [1], [0, 0, 1, 1], [], []>} : vector<16x16xf32>, vector<16x18xf32>, vector<16x18xf32> -> vector<16x18xf32>
    %175 = arith.addf %170, %174 : vector<16x18xf32>
    %c7_109 = arith.constant 7 : index
    %c0_110 = arith.constant 0 : index
    %c0_111 = arith.constant 0 : index
    %176 = vector.load %arg8[%c7_109, %c0_110, %c0_111] : memref<8x16x16xf32, #tpu.memory_space<vmem>>, vector<1x16x16xf32>
    %177 = vector.shape_cast %176 : vector<1x16x16xf32> to vector<16x16xf32>
    %178 = vector.extract_strided_slice %139 {offsets = [0, 7], sizes = [16, 18], strides = [1, 1]} : vector<16x25xf32> to vector<16x18xf32>
    %cst_112 = arith.constant dense<0.000000e+00> : vector<16x18xf32>
    %179 = tpu.matmul %177, %178, %cst_112 {dimension_numbers = #tpu.dot_dimension_numbers<[1], [0], [0], [1], [0, 0, 1, 1], [], []>} : vector<16x16xf32>, vector<16x18xf32>, vector<16x18xf32> -> vector<16x18xf32>
    %180 = arith.addf %175, %179 : vector<16x18xf32>
    %c0_113 = arith.constant 0 : index
    %c0_114 = arith.constant 0 : index
    %181 = vector.load %arg9[%c0_113, %c0_114] : memref<16x1xf32, #tpu.memory_space<vmem>>, vector<16x1xf32>
    %182 = vector.broadcast %181 : vector<16x1xf32> to vector<16x18xf32>
    %183 = arith.mulf %180, %182 : vector<16x18xf32>
    %c0_115 = arith.constant 0 : index
    %c0_116 = arith.constant 0 : index
    %184 = vector.load %arg10[%c0_115, %c0_116] : memref<16x1xf32, #tpu.memory_space<vmem>>, vector<16x1xf32>
    %185 = vector.broadcast %184 : vector<16x1xf32> to vector<16x18xf32>
    %186 = arith.addf %183, %185 : vector<16x18xf32>
    %cst_117 = arith.constant 0.000000e+00 : f32
    %187 = vector.broadcast %cst_117 : f32 to vector<16x18xf32>
    %188 = arith.maximumf %186, %187 : vector<16x18xf32>
    %189 = tpu.iota {dimensions = array<i32: 1>} : vector<16x18xi32>
    %c4_i32_118 = arith.constant 4 : i32
    %190 = vector.broadcast %c4_i32_118 : i32 to vector<16x18xi32>
    %191 = arith.cmpi sge, %189, %190 : vector<16x18xi32>
    %c14_i32 = arith.constant 14 : i32
    %192 = vector.broadcast %c14_i32 : i32 to vector<16x18xi32>
    %193 = arith.cmpi slt, %189, %192 : vector<16x18xi32>
    %194 = arith.andi %191, %193 : vector<16x18xi1>
    %cst_119 = arith.constant 0.000000e+00 : f32
    %195 = vector.broadcast %cst_119 : f32 to vector<16x18xf32>
    %196 = arith.select %194, %188, %195 : vector<16x18xi1>, vector<16x18xf32>
    %cst_120 = arith.constant 0.000000e+00 : f32
    %197 = vector.broadcast %cst_120 : f32 to vector<22x11xf32>
    %c0_121 = arith.constant 0 : index
    %c0_122 = arith.constant 0 : index
    %c0_123 = arith.constant 0 : index
    %198 = vector.load %arg11[%c0_121, %c0_122, %c0_123] : memref<8x22x16xf32, #tpu.memory_space<vmem>>, vector<1x22x16xf32>
    %199 = vector.shape_cast %198 : vector<1x22x16xf32> to vector<22x16xf32>
    %200 = vector.extract_strided_slice %196 {offsets = [0, 0], sizes = [16, 11], strides = [1, 1]} : vector<16x18xf32> to vector<16x11xf32>
    %cst_124 = arith.constant dense<0.000000e+00> : vector<22x11xf32>
    %201 = tpu.matmul %199, %200, %cst_124 {dimension_numbers = #tpu.dot_dimension_numbers<[1], [0], [0], [1], [0, 0, 1, 1], [], []>} : vector<22x16xf32>, vector<16x11xf32>, vector<22x11xf32> -> vector<22x11xf32>
    %202 = arith.addf %197, %201 : vector<22x11xf32>
    %c1_125 = arith.constant 1 : index
    %c0_126 = arith.constant 0 : index
    %c0_127 = arith.constant 0 : index
    %203 = vector.load %arg11[%c1_125, %c0_126, %c0_127] : memref<8x22x16xf32, #tpu.memory_space<vmem>>, vector<1x22x16xf32>
    %204 = vector.shape_cast %203 : vector<1x22x16xf32> to vector<22x16xf32>
    %205 = vector.extract_strided_slice %196 {offsets = [0, 1], sizes = [16, 11], strides = [1, 1]} : vector<16x18xf32> to vector<16x11xf32>
    %cst_128 = arith.constant dense<0.000000e+00> : vector<22x11xf32>
    %206 = tpu.matmul %204, %205, %cst_128 {dimension_numbers = #tpu.dot_dimension_numbers<[1], [0], [0], [1], [0, 0, 1, 1], [], []>} : vector<22x16xf32>, vector<16x11xf32>, vector<22x11xf32> -> vector<22x11xf32>
    %207 = arith.addf %202, %206 : vector<22x11xf32>
    %c2_129 = arith.constant 2 : index
    %c0_130 = arith.constant 0 : index
    %c0_131 = arith.constant 0 : index
    %208 = vector.load %arg11[%c2_129, %c0_130, %c0_131] : memref<8x22x16xf32, #tpu.memory_space<vmem>>, vector<1x22x16xf32>
    %209 = vector.shape_cast %208 : vector<1x22x16xf32> to vector<22x16xf32>
    %210 = vector.extract_strided_slice %196 {offsets = [0, 2], sizes = [16, 11], strides = [1, 1]} : vector<16x18xf32> to vector<16x11xf32>
    %cst_132 = arith.constant dense<0.000000e+00> : vector<22x11xf32>
    %211 = tpu.matmul %209, %210, %cst_132 {dimension_numbers = #tpu.dot_dimension_numbers<[1], [0], [0], [1], [0, 0, 1, 1], [], []>} : vector<22x16xf32>, vector<16x11xf32>, vector<22x11xf32> -> vector<22x11xf32>
    %212 = arith.addf %207, %211 : vector<22x11xf32>
    %c3_133 = arith.constant 3 : index
    %c0_134 = arith.constant 0 : index
    %c0_135 = arith.constant 0 : index
    %213 = vector.load %arg11[%c3_133, %c0_134, %c0_135] : memref<8x22x16xf32, #tpu.memory_space<vmem>>, vector<1x22x16xf32>
    %214 = vector.shape_cast %213 : vector<1x22x16xf32> to vector<22x16xf32>
    %215 = vector.extract_strided_slice %196 {offsets = [0, 3], sizes = [16, 11], strides = [1, 1]} : vector<16x18xf32> to vector<16x11xf32>
    %cst_136 = arith.constant dense<0.000000e+00> : vector<22x11xf32>
    %216 = tpu.matmul %214, %215, %cst_136 {dimension_numbers = #tpu.dot_dimension_numbers<[1], [0], [0], [1], [0, 0, 1, 1], [], []>} : vector<22x16xf32>, vector<16x11xf32>, vector<22x11xf32> -> vector<22x11xf32>
    %217 = arith.addf %212, %216 : vector<22x11xf32>
    %c4_137 = arith.constant 4 : index
    %c0_138 = arith.constant 0 : index
    %c0_139 = arith.constant 0 : index
    %218 = vector.load %arg11[%c4_137, %c0_138, %c0_139] : memref<8x22x16xf32, #tpu.memory_space<vmem>>, vector<1x22x16xf32>
    %219 = vector.shape_cast %218 : vector<1x22x16xf32> to vector<22x16xf32>
    %220 = vector.extract_strided_slice %196 {offsets = [0, 4], sizes = [16, 11], strides = [1, 1]} : vector<16x18xf32> to vector<16x11xf32>
    %cst_140 = arith.constant dense<0.000000e+00> : vector<22x11xf32>
    %221 = tpu.matmul %219, %220, %cst_140 {dimension_numbers = #tpu.dot_dimension_numbers<[1], [0], [0], [1], [0, 0, 1, 1], [], []>} : vector<22x16xf32>, vector<16x11xf32>, vector<22x11xf32> -> vector<22x11xf32>
    %222 = arith.addf %217, %221 : vector<22x11xf32>
    %c5_141 = arith.constant 5 : index
    %c0_142 = arith.constant 0 : index
    %c0_143 = arith.constant 0 : index
    %223 = vector.load %arg11[%c5_141, %c0_142, %c0_143] : memref<8x22x16xf32, #tpu.memory_space<vmem>>, vector<1x22x16xf32>
    %224 = vector.shape_cast %223 : vector<1x22x16xf32> to vector<22x16xf32>
    %225 = vector.extract_strided_slice %196 {offsets = [0, 5], sizes = [16, 11], strides = [1, 1]} : vector<16x18xf32> to vector<16x11xf32>
    %cst_144 = arith.constant dense<0.000000e+00> : vector<22x11xf32>
    %226 = tpu.matmul %224, %225, %cst_144 {dimension_numbers = #tpu.dot_dimension_numbers<[1], [0], [0], [1], [0, 0, 1, 1], [], []>} : vector<22x16xf32>, vector<16x11xf32>, vector<22x11xf32> -> vector<22x11xf32>
    %227 = arith.addf %222, %226 : vector<22x11xf32>
    %c6_145 = arith.constant 6 : index
    %c0_146 = arith.constant 0 : index
    %c0_147 = arith.constant 0 : index
    %228 = vector.load %arg11[%c6_145, %c0_146, %c0_147] : memref<8x22x16xf32, #tpu.memory_space<vmem>>, vector<1x22x16xf32>
    %229 = vector.shape_cast %228 : vector<1x22x16xf32> to vector<22x16xf32>
    %230 = vector.extract_strided_slice %196 {offsets = [0, 6], sizes = [16, 11], strides = [1, 1]} : vector<16x18xf32> to vector<16x11xf32>
    %cst_148 = arith.constant dense<0.000000e+00> : vector<22x11xf32>
    %231 = tpu.matmul %229, %230, %cst_148 {dimension_numbers = #tpu.dot_dimension_numbers<[1], [0], [0], [1], [0, 0, 1, 1], [], []>} : vector<22x16xf32>, vector<16x11xf32>, vector<22x11xf32> -> vector<22x11xf32>
    %232 = arith.addf %227, %231 : vector<22x11xf32>
    %c7_149 = arith.constant 7 : index
    %c0_150 = arith.constant 0 : index
    %c0_151 = arith.constant 0 : index
    %233 = vector.load %arg11[%c7_149, %c0_150, %c0_151] : memref<8x22x16xf32, #tpu.memory_space<vmem>>, vector<1x22x16xf32>
    %234 = vector.shape_cast %233 : vector<1x22x16xf32> to vector<22x16xf32>
    %235 = vector.extract_strided_slice %196 {offsets = [0, 7], sizes = [16, 11], strides = [1, 1]} : vector<16x18xf32> to vector<16x11xf32>
    %cst_152 = arith.constant dense<0.000000e+00> : vector<22x11xf32>
    %236 = tpu.matmul %234, %235, %cst_152 {dimension_numbers = #tpu.dot_dimension_numbers<[1], [0], [0], [1], [0, 0, 1, 1], [], []>} : vector<22x16xf32>, vector<16x11xf32>, vector<22x11xf32> -> vector<22x11xf32>
    %237 = arith.addf %232, %236 : vector<22x11xf32>
    %c0_153 = arith.constant 0 : index
    %c0_154 = arith.constant 0 : index
    %238 = vector.load %arg12[%c0_153, %c0_154] : memref<22x1xf32, #tpu.memory_space<vmem>>, vector<22x1xf32>
    %239 = vector.broadcast %238 : vector<22x1xf32> to vector<22x11xf32>
    %240 = arith.mulf %237, %239 : vector<22x11xf32>
    %c0_155 = arith.constant 0 : index
    %c0_156 = arith.constant 0 : index
    %241 = vector.load %arg13[%c0_155, %c0_156] : memref<22x1xf32, #tpu.memory_space<vmem>>, vector<22x1xf32>
    %242 = vector.broadcast %241 : vector<22x1xf32> to vector<22x11xf32>
    %243 = arith.addf %240, %242 : vector<22x11xf32>
    %244 = tpu.iota {dimensions = array<i32: 0>} : vector<11x21xi32>
    %245 = tpu.iota {dimensions = array<i32: 1>} : vector<11x21xi32>
    %c8_i32_157 = arith.constant 8 : i32
    %246 = vector.broadcast %c8_i32_157 : i32 to vector<11x21xi32>
    %247 = arith.subi %245, %246 : vector<11x21xi32>
    %c0_i32_158 = arith.constant 0 : i32
    %248 = vector.broadcast %c0_i32_158 : i32 to vector<11x21xi32>
    %249 = arith.cmpi sge, %247, %248 : vector<11x21xi32>
    %c5_i32 = arith.constant 5 : i32
    %250 = vector.broadcast %c5_i32 : i32 to vector<11x21xi32>
    %251 = arith.cmpi slt, %247, %250 : vector<11x21xi32>
    %252 = arith.andi %249, %251 : vector<11x21xi1>
    %c2_i32_159 = arith.constant 2 : i32
    %253 = vector.broadcast %c2_i32_159 : i32 to vector<11x21xi32>
    %254 = arith.muli %253, %247 : vector<11x21xi32>
    %c0_i32_160 = arith.constant 0 : i32
    %255 = vector.broadcast %c0_i32_160 : i32 to vector<11x21xi32>
    %256 = arith.addi %255, %254 : vector<11x21xi32>
    %257 = arith.cmpi eq, %244, %256 : vector<11x21xi32>
    %258 = arith.andi %252, %257 : vector<11x21xi1>
    %cst_161 = arith.constant 1.000000e+00 : f32
    %cst_162 = arith.constant 0.000000e+00 : f32
    %259 = vector.broadcast %cst_161 : f32 to vector<11x21xf32>
    %260 = vector.broadcast %cst_162 : f32 to vector<11x21xf32>
    %261 = arith.select %258, %259, %260 : vector<11x21xi1>, vector<11x21xf32>
    %c2_i32_163 = arith.constant 2 : i32
    %262 = vector.broadcast %c2_i32_163 : i32 to vector<11x21xi32>
    %263 = arith.muli %262, %247 : vector<11x21xi32>
    %c0_i32_164 = arith.constant 0 : i32
    %264 = vector.broadcast %c0_i32_164 : i32 to vector<11x21xi32>
    %265 = arith.addi %264, %263 : vector<11x21xi32>
    %c1_i32_165 = arith.constant 1 : i32
    %266 = vector.broadcast %c1_i32_165 : i32 to vector<11x21xi32>
    %267 = arith.addi %265, %266 : vector<11x21xi32>
    %268 = arith.cmpi eq, %244, %267 : vector<11x21xi32>
    %269 = arith.andi %252, %268 : vector<11x21xi1>
    %cst_166 = arith.constant 1.000000e+00 : f32
    %cst_167 = arith.constant 0.000000e+00 : f32
    %270 = vector.broadcast %cst_166 : f32 to vector<11x21xf32>
    %271 = vector.broadcast %cst_167 : f32 to vector<11x21xf32>
    %272 = arith.select %269, %270, %271 : vector<11x21xi1>, vector<11x21xf32>
    %cst_168 = arith.constant dense<0.000000e+00> : vector<22x21xf32>
    %273 = tpu.matmul %243, %261, %cst_168 {dimension_numbers = #tpu.dot_dimension_numbers<[1], [0], [0], [1], [0, 0, 1, 1], [], []>} : vector<22x11xf32>, vector<11x21xf32>, vector<22x21xf32> -> vector<22x21xf32>
    %cst_169 = arith.constant dense<0.000000e+00> : vector<22x21xf32>
    %274 = tpu.matmul %243, %272, %cst_169 {dimension_numbers = #tpu.dot_dimension_numbers<[1], [0], [0], [1], [0, 0, 1, 1], [], []>} : vector<22x11xf32>, vector<11x21xf32>, vector<22x21xf32> -> vector<22x21xf32>
    %275 = arith.maximumf %273, %274 : vector<22x21xf32>
    %cst_170 = arith.constant 0.000000e+00 : f32
    %276 = vector.broadcast %cst_170 : f32 to vector<22x21xf32>
    %277 = arith.maximumf %275, %276 : vector<22x21xf32>
    %cst_171 = arith.constant 0.000000e+00 : f32
    %278 = vector.broadcast %cst_171 : f32 to vector<22x14xf32>
    %c0_172 = arith.constant 0 : index
    %c0_173 = arith.constant 0 : index
    %c0_174 = arith.constant 0 : index
    %279 = vector.load %arg14[%c0_172, %c0_173, %c0_174] : memref<8x22x22xf32, #tpu.memory_space<vmem>>, vector<1x22x22xf32>
    %280 = vector.shape_cast %279 : vector<1x22x22xf32> to vector<22x22xf32>
    %281 = vector.extract_strided_slice %277 {offsets = [0, 0], sizes = [22, 14], strides = [1, 1]} : vector<22x21xf32> to vector<22x14xf32>
    %cst_175 = arith.constant dense<0.000000e+00> : vector<22x14xf32>
    %282 = tpu.matmul %280, %281, %cst_175 {dimension_numbers = #tpu.dot_dimension_numbers<[1], [0], [0], [1], [0, 0, 1, 1], [], []>} : vector<22x22xf32>, vector<22x14xf32>, vector<22x14xf32> -> vector<22x14xf32>
    %283 = arith.addf %278, %282 : vector<22x14xf32>
    %c1_176 = arith.constant 1 : index
    %c0_177 = arith.constant 0 : index
    %c0_178 = arith.constant 0 : index
    %284 = vector.load %arg14[%c1_176, %c0_177, %c0_178] : memref<8x22x22xf32, #tpu.memory_space<vmem>>, vector<1x22x22xf32>
    %285 = vector.shape_cast %284 : vector<1x22x22xf32> to vector<22x22xf32>
    %286 = vector.extract_strided_slice %277 {offsets = [0, 1], sizes = [22, 14], strides = [1, 1]} : vector<22x21xf32> to vector<22x14xf32>
    %cst_179 = arith.constant dense<0.000000e+00> : vector<22x14xf32>
    %287 = tpu.matmul %285, %286, %cst_179 {dimension_numbers = #tpu.dot_dimension_numbers<[1], [0], [0], [1], [0, 0, 1, 1], [], []>} : vector<22x22xf32>, vector<22x14xf32>, vector<22x14xf32> -> vector<22x14xf32>
    %288 = arith.addf %283, %287 : vector<22x14xf32>
    %c2_180 = arith.constant 2 : index
    %c0_181 = arith.constant 0 : index
    %c0_182 = arith.constant 0 : index
    %289 = vector.load %arg14[%c2_180, %c0_181, %c0_182] : memref<8x22x22xf32, #tpu.memory_space<vmem>>, vector<1x22x22xf32>
    %290 = vector.shape_cast %289 : vector<1x22x22xf32> to vector<22x22xf32>
    %291 = vector.extract_strided_slice %277 {offsets = [0, 2], sizes = [22, 14], strides = [1, 1]} : vector<22x21xf32> to vector<22x14xf32>
    %cst_183 = arith.constant dense<0.000000e+00> : vector<22x14xf32>
    %292 = tpu.matmul %290, %291, %cst_183 {dimension_numbers = #tpu.dot_dimension_numbers<[1], [0], [0], [1], [0, 0, 1, 1], [], []>} : vector<22x22xf32>, vector<22x14xf32>, vector<22x14xf32> -> vector<22x14xf32>
    %293 = arith.addf %288, %292 : vector<22x14xf32>
    %c3_184 = arith.constant 3 : index
    %c0_185 = arith.constant 0 : index
    %c0_186 = arith.constant 0 : index
    %294 = vector.load %arg14[%c3_184, %c0_185, %c0_186] : memref<8x22x22xf32, #tpu.memory_space<vmem>>, vector<1x22x22xf32>
    %295 = vector.shape_cast %294 : vector<1x22x22xf32> to vector<22x22xf32>
    %296 = vector.extract_strided_slice %277 {offsets = [0, 3], sizes = [22, 14], strides = [1, 1]} : vector<22x21xf32> to vector<22x14xf32>
    %cst_187 = arith.constant dense<0.000000e+00> : vector<22x14xf32>
    %297 = tpu.matmul %295, %296, %cst_187 {dimension_numbers = #tpu.dot_dimension_numbers<[1], [0], [0], [1], [0, 0, 1, 1], [], []>} : vector<22x22xf32>, vector<22x14xf32>, vector<22x14xf32> -> vector<22x14xf32>
    %298 = arith.addf %293, %297 : vector<22x14xf32>
    %c4_188 = arith.constant 4 : index
    %c0_189 = arith.constant 0 : index
    %c0_190 = arith.constant 0 : index
    %299 = vector.load %arg14[%c4_188, %c0_189, %c0_190] : memref<8x22x22xf32, #tpu.memory_space<vmem>>, vector<1x22x22xf32>
    %300 = vector.shape_cast %299 : vector<1x22x22xf32> to vector<22x22xf32>
    %301 = vector.extract_strided_slice %277 {offsets = [0, 4], sizes = [22, 14], strides = [1, 1]} : vector<22x21xf32> to vector<22x14xf32>
    %cst_191 = arith.constant dense<0.000000e+00> : vector<22x14xf32>
    %302 = tpu.matmul %300, %301, %cst_191 {dimension_numbers = #tpu.dot_dimension_numbers<[1], [0], [0], [1], [0, 0, 1, 1], [], []>} : vector<22x22xf32>, vector<22x14xf32>, vector<22x14xf32> -> vector<22x14xf32>
    %303 = arith.addf %298, %302 : vector<22x14xf32>
    %c5_192 = arith.constant 5 : index
    %c0_193 = arith.constant 0 : index
    %c0_194 = arith.constant 0 : index
    %304 = vector.load %arg14[%c5_192, %c0_193, %c0_194] : memref<8x22x22xf32, #tpu.memory_space<vmem>>, vector<1x22x22xf32>
    %305 = vector.shape_cast %304 : vector<1x22x22xf32> to vector<22x22xf32>
    %306 = vector.extract_strided_slice %277 {offsets = [0, 5], sizes = [22, 14], strides = [1, 1]} : vector<22x21xf32> to vector<22x14xf32>
    %cst_195 = arith.constant dense<0.000000e+00> : vector<22x14xf32>
    %307 = tpu.matmul %305, %306, %cst_195 {dimension_numbers = #tpu.dot_dimension_numbers<[1], [0], [0], [1], [0, 0, 1, 1], [], []>} : vector<22x22xf32>, vector<22x14xf32>, vector<22x14xf32> -> vector<22x14xf32>
    %308 = arith.addf %303, %307 : vector<22x14xf32>
    %c6_196 = arith.constant 6 : index
    %c0_197 = arith.constant 0 : index
    %c0_198 = arith.constant 0 : index
    %309 = vector.load %arg14[%c6_196, %c0_197, %c0_198] : memref<8x22x22xf32, #tpu.memory_space<vmem>>, vector<1x22x22xf32>
    %310 = vector.shape_cast %309 : vector<1x22x22xf32> to vector<22x22xf32>
    %311 = vector.extract_strided_slice %277 {offsets = [0, 6], sizes = [22, 14], strides = [1, 1]} : vector<22x21xf32> to vector<22x14xf32>
    %cst_199 = arith.constant dense<0.000000e+00> : vector<22x14xf32>
    %312 = tpu.matmul %310, %311, %cst_199 {dimension_numbers = #tpu.dot_dimension_numbers<[1], [0], [0], [1], [0, 0, 1, 1], [], []>} : vector<22x22xf32>, vector<22x14xf32>, vector<22x14xf32> -> vector<22x14xf32>
    %313 = arith.addf %308, %312 : vector<22x14xf32>
    %c7_200 = arith.constant 7 : index
    %c0_201 = arith.constant 0 : index
    %c0_202 = arith.constant 0 : index
    %314 = vector.load %arg14[%c7_200, %c0_201, %c0_202] : memref<8x22x22xf32, #tpu.memory_space<vmem>>, vector<1x22x22xf32>
    %315 = vector.shape_cast %314 : vector<1x22x22xf32> to vector<22x22xf32>
    %316 = vector.extract_strided_slice %277 {offsets = [0, 7], sizes = [22, 14], strides = [1, 1]} : vector<22x21xf32> to vector<22x14xf32>
    %cst_203 = arith.constant dense<0.000000e+00> : vector<22x14xf32>
    %317 = tpu.matmul %315, %316, %cst_203 {dimension_numbers = #tpu.dot_dimension_numbers<[1], [0], [0], [1], [0, 0, 1, 1], [], []>} : vector<22x22xf32>, vector<22x14xf32>, vector<22x14xf32> -> vector<22x14xf32>
    %318 = arith.addf %313, %317 : vector<22x14xf32>
    %c0_204 = arith.constant 0 : index
    %c0_205 = arith.constant 0 : index
    %319 = vector.load %arg15[%c0_204, %c0_205] : memref<22x1xf32, #tpu.memory_space<vmem>>, vector<22x1xf32>
    %320 = vector.broadcast %319 : vector<22x1xf32> to vector<22x14xf32>
    %321 = arith.mulf %318, %320 : vector<22x14xf32>
    %c0_206 = arith.constant 0 : index
    %c0_207 = arith.constant 0 : index
    %322 = vector.load %arg16[%c0_206, %c0_207] : memref<22x1xf32, #tpu.memory_space<vmem>>, vector<22x1xf32>
    %323 = vector.broadcast %322 : vector<22x1xf32> to vector<22x14xf32>
    %324 = arith.addf %321, %323 : vector<22x14xf32>
    %cst_208 = arith.constant 0.000000e+00 : f32
    %325 = vector.broadcast %cst_208 : f32 to vector<22x14xf32>
    %326 = arith.maximumf %324, %325 : vector<22x14xf32>
    %327 = tpu.iota {dimensions = array<i32: 1>} : vector<22x14xi32>
    %c4_i32_209 = arith.constant 4 : i32
    %328 = vector.broadcast %c4_i32_209 : i32 to vector<22x14xi32>
    %329 = arith.cmpi sge, %327, %328 : vector<22x14xi32>
    %c10_i32 = arith.constant 10 : i32
    %330 = vector.broadcast %c10_i32 : i32 to vector<22x14xi32>
    %331 = arith.cmpi slt, %327, %330 : vector<22x14xi32>
    %332 = arith.andi %329, %331 : vector<22x14xi1>
    %cst_210 = arith.constant 0.000000e+00 : f32
    %333 = vector.broadcast %cst_210 : f32 to vector<22x14xf32>
    %334 = arith.select %332, %326, %333 : vector<22x14xi1>, vector<22x14xf32>
    %c0_211 = arith.constant 0 : index
    %c0_212 = arith.constant 0 : index
    %335 = vector.load %arg17[%c0_211, %c0_212] : memref<3x22xf32, #tpu.memory_space<vmem>>, vector<3x22xf32>
    %cst_213 = arith.constant dense<0.000000e+00> : vector<3x14xf32>
    %336 = tpu.matmul %335, %334, %cst_213 {dimension_numbers = #tpu.dot_dimension_numbers<[1], [0], [0], [1], [0, 0, 1, 1], [], []>} : vector<3x22xf32>, vector<22x14xf32>, vector<3x14xf32> -> vector<3x14xf32>
    %cst_214 = arith.constant dense<0.000000e+00> : vector<3xf32>
    %337 = vector.multi_reduction <add>, %336, %cst_214 [1] : vector<3x14xf32> to vector<3xf32>
    %338 = vector.shape_cast %337 : vector<3xf32> to vector<3x1xf32>
    %cst_215 = arith.constant 0.166666672 : f32
    %339 = vector.broadcast %cst_215 : f32 to vector<3x1xf32>
    %340 = arith.mulf %338, %339 : vector<3x1xf32>
    %c0_216 = arith.constant 0 : index
    %c0_217 = arith.constant 0 : index
    %341 = vector.load %arg18[%c0_216, %c0_217] : memref<3x1xf32, #tpu.memory_space<vmem>>, vector<3x1xf32>
    %342 = arith.addf %340, %341 : vector<3x1xf32>
    %c0_218 = arith.constant 0 : index
    %c0_219 = arith.constant 0 : index
    %c0_220 = arith.constant 0 : index
    %343 = vector.load %arg19[%c0_218, %c0_219, %c0_220] : memref<1x3x1xf32, #tpu.memory_space<vmem>>, vector<1x3x1xf32>
    %344 = vector.shape_cast %343 : vector<1x3x1xf32> to vector<3x1xf32>
    %345 = vector.shape_cast %342 : vector<3x1xf32> to vector<1x3x1xf32>
    tpu.vector_store %arg19[%c0_218, %c0_219, %c0_220], %345 {strides = array<i32>} : memref<1x3x1xf32, #tpu.memory_space<vmem>>, vector<1x3x1xf32>,
    return
  }
  func.func @transform_0(%arg0: i32) -> (i32, i32, i32) {
    %c0_i32 = arith.constant 0 : i32
    %c0_i32_0 = arith.constant 0 : i32
    %c0_i32_1 = arith.constant 0 : i32
    return %arg0, %c0_i32, %c0_i32_0 : i32, i32, i32
  }
  func.func @transform_1(%arg0: i32) -> (i32, i32, i32) {
    %c0_i32 = arith.constant 0 : i32
    %c0_i32_0 = arith.constant 0 : i32
    %c0_i32_1 = arith.constant 0 : i32
    %c0_i32_2 = arith.constant 0 : i32
    return %c0_i32, %c0_i32_0, %c0_i32_1 : i32, i32, i32
  }
  func.func @transform_2(%arg0: i32) -> (i32, i32) {
    %c0_i32 = arith.constant 0 : i32
    %c0_i32_0 = arith.constant 0 : i32
    %c0_i32_1 = arith.constant 0 : i32
    return %c0_i32, %c0_i32_0 : i32, i32
  }
  func.func @transform_3(%arg0: i32) -> (i32, i32) {
    %c0_i32 = arith.constant 0 : i32
    %c0_i32_0 = arith.constant 0 : i32
    %c0_i32_1 = arith.constant 0 : i32
    return %c0_i32, %c0_i32_0 : i32, i32
  }
  func.func @transform_4(%arg0: i32) -> (i32, i32, i32) {
    %c0_i32 = arith.constant 0 : i32
    %c0_i32_0 = arith.constant 0 : i32
    %c0_i32_1 = arith.constant 0 : i32
    %c0_i32_2 = arith.constant 0 : i32
    return %c0_i32, %c0_i32_0, %c0_i32_1 : i32, i32, i32
  }
  func.func @transform_5(%arg0: i32) -> (i32, i32) {
    %c0_i32 = arith.constant 0 : i32
    %c0_i32_0 = arith.constant 0 : i32
    %c0_i32_1 = arith.constant 0 : i32
    return %c0_i32, %c0_i32_0 : i32, i32
  }
  func.func @transform_6(%arg0: i32) -> (i32, i32) {
    %c0_i32 = arith.constant 0 : i32
    %c0_i32_0 = arith.constant 0 : i32
    %c0_i32_1 = arith.constant 0 : i32
    return %c0_i32, %c0_i32_0 : i32, i32
  }
  func.func @transform_7(%arg0: i32) -> (i32, i32, i32) {
    %c0_i32 = arith.constant 0 : i32
    %c0_i32_0 = arith.constant 0 : i32
    %c0_i32_1 = arith.constant 0 : i32
    %c0_i32_2 = arith.constant 0 : i32
    return %c0_i32, %c0_i32_0, %c0_i32_1 : i32, i32, i32
  }
  func.func @transform_8(%arg0: i32) -> (i32, i32) {
    %c0_i32 = arith.constant 0 : i32
    %c0_i32_0 = arith.constant 0 : i32
    %c0_i32_1 = arith.constant 0 : i32
    return %c0_i32, %c0_i32_0 : i32, i32
  }
  func.func @transform_9(%arg0: i32) -> (i32, i32) {
    %c0_i32 = arith.constant 0 : i32
    %c0_i32_0 = arith.constant 0 : i32
    %c0_i32_1 = arith.constant 0 : i32
    return %c0_i32, %c0_i32_0 : i32, i32
  }
  func.func @transform_10(%arg0: i32) -> (i32, i32, i32) {
    %c0_i32 = arith.constant 0 : i32
    %c0_i32_0 = arith.constant 0 : i32
    %c0_i32_1 = arith.constant 0 : i32
    %c0_i32_2 = arith.constant 0 : i32
    return %c0_i32, %c0_i32_0, %c0_i32_1 : i32, i32, i32
  }
  func.func @transform_11(%arg0: i32) -> (i32, i32) {
    %c0_i32 = arith.constant 0 : i32
    %c0_i32_0 = arith.constant 0 : i32
    %c0_i32_1 = arith.constant 0 : i32
    return %c0_i32, %c0_i32_0 : i32, i32
  }
  func.func @transform_12(%arg0: i32) -> (i32, i32) {
    %c0_i32 = arith.constant 0 : i32
    %c0_i32_0 = arith.constant 0 : i32
    %c0_i32_1 = arith.constant 0 : i32
    return %c0_i32, %c0_i32_0 : i32, i32
  }
  func.func @transform_13(%arg0: i32) -> (i32, i32, i32) {
    %c0_i32 = arith.constant 0 : i32
    %c0_i32_0 = arith.constant 0 : i32
    %c0_i32_1 = arith.constant 0 : i32
    %c0_i32_2 = arith.constant 0 : i32
    return %c0_i32, %c0_i32_0, %c0_i32_1 : i32, i32, i32
  }
  func.func @transform_14(%arg0: i32) -> (i32, i32) {
    %c0_i32 = arith.constant 0 : i32
    %c0_i32_0 = arith.constant 0 : i32
    %c0_i32_1 = arith.constant 0 : i32
    return %c0_i32, %c0_i32_0 : i32, i32
  }
  func.func @transform_15(%arg0: i32) -> (i32, i32) {
    %c0_i32 = arith.constant 0 : i32
    %c0_i32_0 = arith.constant 0 : i32
    %c0_i32_1 = arith.constant 0 : i32
    return %c0_i32, %c0_i32_0 : i32, i32
  }
  func.func @transform_16(%arg0: i32) -> (i32, i32) {
    %c0_i32 = arith.constant 0 : i32
    %c0_i32_0 = arith.constant 0 : i32
    %c0_i32_1 = arith.constant 0 : i32
    return %c0_i32, %c0_i32_0 : i32, i32
  }
  func.func @transform_17(%arg0: i32) -> (i32, i32) {
    %c0_i32 = arith.constant 0 : i32
    %c0_i32_0 = arith.constant 0 : i32
    %c0_i32_1 = arith.constant 0 : i32
    return %c0_i32, %c0_i32_0 : i32, i32
  }
  func.func @transform_18(%arg0: i32) -> (i32, i32, i32) {
    %c0_i32 = arith.constant 0 : i32
    %c0_i32_0 = arith.constant 0 : i32
    %c0_i32_1 = arith.constant 0 : i32
    return %arg0, %c0_i32, %c0_i32_0 : i32, i32, i32
  }
}

</mosaic_0001>

<llo_original>
// kernel: tpu_custom_call.1
$region0: #{tpu_custom_call.1}
  #allocation0 [shape = 'u32[]', space=smem, size = 0x4, offset = 0x4, fixed_abs, tag = 'smem constant byte address 0x4 - core index']
  #allocation1 [shape = 'u32[144,128]{1,0:T(1,128)}', space=vmem, size = 0x12000, scoped, tag = 'internal scratch']
  %s0 = inlined_call_operand.vmem [shape: f32[2,4,32], index: 0, kind: input, shape index: {}]
  %s1 = inlined_call_operand.vmem [shape: f32[8,16,4], index: 1, kind: input, shape index: {}]
  %s2 = inlined_call_operand.vmem [shape: f32[16,1], index: 2, kind: input, shape index: {}]
  %s3 = inlined_call_operand.vmem [shape: f32[16,1], index: 3, kind: input, shape index: {}]
  %s4 = inlined_call_operand.vmem [shape: f32[8,16,16], index: 4, kind: input, shape index: {}]
  %s5 = inlined_call_operand.vmem [shape: f32[16,1], index: 5, kind: input, shape index: {}]
  %s6 = inlined_call_operand.vmem [shape: f32[16,1], index: 6, kind: input, shape index: {}]
  %s7 = inlined_call_operand.vmem [shape: f32[8,16,16], index: 7, kind: input, shape index: {}]
  %s8 = inlined_call_operand.vmem [shape: f32[16,1], index: 8, kind: input, shape index: {}]
  %s9 = inlined_call_operand.vmem [shape: f32[16,1], index: 9, kind: input, shape index: {}]
  %s10 = inlined_call_operand.vmem [shape: f32[8,22,16], index: 10, kind: input, shape index: {}]
  %s11 = inlined_call_operand.vmem [shape: f32[22,1], index: 11, kind: input, shape index: {}]
  %s12 = inlined_call_operand.vmem [shape: f32[22,1], index: 12, kind: input, shape index: {}]
  %s13 = inlined_call_operand.vmem [shape: f32[8,22,22], index: 13, kind: input, shape index: {}]
  %s14 = inlined_call_operand.vmem [shape: f32[22,1], index: 14, kind: input, shape index: {}]
  %s15 = inlined_call_operand.vmem [shape: f32[22,1], index: 15, kind: input, shape index: {}]
  %s16 = inlined_call_operand.vmem [shape: f32[3,22], index: 16, kind: input, shape index: {}]
  %s17 = inlined_call_operand.vmem [shape: f32[3,1], index: 17, kind: input, shape index: {}]
  %s18 = inlined_call_operand.vmem [shape: f32[2,3,1], index: 18, kind: output, shape index: {}]
  %s19 = sld [smem:[#allocation0]]
  $region105: #{tpu_custom_call.1} parent=0
    _
  %s21 = ssub.s32 1, %s19
  %s22 = scalar_select 0, %s21, %s19
  loop: start=0, step=1, limit=4
  $region2: #{tpu_custom_call.1} parent=0 // loop_pre_header
    _
  $region3: #{tpu_custom_call.1} parent=0 // loop_header
    %s24 = sphi 0, %s28
    %p25 = scmp.ge.s32.totalorder %s24, 4
    %s34 = sphi 0, %s36
    %s37 = sphi 0, %s34
    %s38 = sphi 0, %s37
    %s54 = sphi 0, %s38
    %s58 = sphi 0, %s58
    %s60 = sphi 0, %s58
    %s61 = sphi 0, %s60
    %s75 = sphi 0, %s61
    %s79 = sphi 0, %s79
    %s81 = sphi 0, %s79
    %s82 = sphi 0, %s81
    %s96 = sphi 0, %s82
    %s100 = sphi 0, %s100
    %s102 = sphi 0, %s100
    %s103 = sphi 0, %s102
    %s117 = sphi 0, %s103
    %s121 = sphi 0, %s121
    %s123 = sphi 0, %s121
    %s124 = sphi 0, %s123
    %s138 = sphi 0, %s124
    %s142 = sphi 0, %s142
    %s144 = sphi 0, %s142
    %s145 = sphi 0, %s144
    %s159 = sphi 0, %s145
    %s163 = sphi 0, %s163
    %s165 = sphi 0, %s163
    %s166 = sphi 0, %s165
    %s180 = sphi 0, %s166
    %s184 = sphi 0, %s184
    %s186 = sphi 0, %s184
    %s187 = sphi 0, %s186
    %s201 = sphi 0, %s187
    %s205 = sphi 0, %s205
    %s207 = sphi 0, %s205
    %s208 = sphi 0, %s207
    %s222 = sphi 0, %s208
    %s226 = sphi 0, %s226
    %s228 = sphi 0, %s226
    %s229 = sphi 0, %s228
    %s243 = sphi 0, %s229
    %s247 = sphi 0, %s247
    %s249 = sphi 0, %s247
    %s250 = sphi 0, %s249
    %s264 = sphi 0, %s250
    %s268 = sphi 0, %s268
    %s270 = sphi 0, %s268
    %s271 = sphi 0, %s270
    %s285 = sphi 0, %s271
    %s289 = sphi 0, %s289
    %s291 = sphi 0, %s289
    %s292 = sphi 0, %s291
    %s306 = sphi 0, %s292
    %s310 = sphi 0, %s310
    %s312 = sphi 0, %s310
    %s313 = sphi 0, %s312
    %s327 = sphi 0, %s313
    %s331 = sphi 0, %s331
    %s333 = sphi 0, %s331
    %s334 = sphi 0, %s333
    %s348 = sphi 0, %s334
    %s352 = sphi 0, %s352
    %s354 = sphi 0, %s352
    %s355 = sphi 0, %s354
    %s369 = sphi 0, %s355
    %s373 = sphi 0, %s373
    %s375 = sphi 0, %s373
    %s376 = sphi 0, %s375
    %s390 = sphi 0, %s376
    %s394 = sphi 0, %s394
    %s396 = sphi 0, %s394
    %s397 = sphi 0, %s396
    %s411 = sphi 0, %s397
    %s417 = sphi 0, %s419
    %s420 = sphi 0, %s417
    %s421 = sphi 0, %s420
    %s437 = sphi 0, %s421
  $region4: #{tpu_custom_call.1} parent=0 // loop_header_branch
    %27 = sbr.rel (%p25) target = $region8
  $region5: #{tpu_custom_call.1} parent=0 // loop_body
    %s29 = ssub.s32 %s24, 1
    %s30 = ssub.s32 %s24, 2
    %s31 = sadd.s32 %s24, 1
    %s32 = ssub.s32 %s24, %s31
    %p33 = scmp.eq.s32.totalorder %s32, 0
    %s35 = sadd.s32 %s34, 1
    %s36 = scalar_select %p33, %s34, %s35
    %p39 = pneg %p33
    %p40 = scmp.eq.s32.totalorder %s24, 1
    %p41 = por %p39, %p40
    %p42 = scmp.ne.s32.totalorder %s34, %s37
    %p43 = scmp.eq.s32.totalorder %s24, 0
    %p44 = por %p42, %p43
    %p45 = scmp.ne.s32.totalorder %s34, %s37
    %p46 = scmp.eq.s32.totalorder %s29, 1
    %p47 = por %p45, %p46
    %p48 = scmp.ne.s32.totalorder %s37, %s38
    %p49 = scmp.eq.s32.totalorder %s29, 0
    %p50 = por %p48, %p49
    %p51 = scmp.ne.s32.totalorder %s37, %s38
    %p52 = scmp.eq.s32.totalorder %s30, 1
    %p53 = por %p51, %p52
    %p55 = scmp.ne.s32.totalorder %s38, %s54
    %p56 = scmp.eq.s32.totalorder %s30, 0
    %p57 = por %p55, %p56
    %s59 = sadd.s32 %s58, 1
    %p62 = scmp.eq.s32.totalorder %s24, 1
    %p63 = scmp.ne.s32.totalorder %s58, %s60
    %p64 = scmp.eq.s32.totalorder %s24, 0
    %p65 = por %p63, %p64
    %p66 = scmp.ne.s32.totalorder %s58, %s60
    %p67 = scmp.eq.s32.totalorder %s29, 1
    %p68 = por %p66, %p67
    %p69 = scmp.ne.s32.totalorder %s60, %s61
    %p70 = scmp.eq.s32.totalorder %s29, 0
    %p71 = por %p69, %p70
    %p72 = scmp.ne.s32.totalorder %s60, %s61
    %p73 = scmp.eq.s32.totalorder %s30, 1
    %p74 = por %p72, %p73
    %p76 = scmp.ne.s32.totalorder %s61, %s75
    %p77 = scmp.eq.s32.totalorder %s30, 0
    %p78 = por %p76, %p77
    %s80 = sadd.s32 %s79, 1
    %p83 = scmp.eq.s32.totalorder %s24, 1
    %p84 = scmp.ne.s32.totalorder %s79, %s81
    %p85 = scmp.eq.s32.totalorder %s24, 0
    %p86 = por %p84, %p85
    %p87 = scmp.ne.s32.totalorder %s79, %s81
    %p88 = scmp.eq.s32.totalorder %s29, 1
    %p89 = por %p87, %p88
    %p90 = scmp.ne.s32.totalorder %s81, %s82
    %p91 = scmp.eq.s32.totalorder %s29, 0
    %p92 = por %p90, %p91
    %p93 = scmp.ne.s32.totalorder %s81, %s82
    %p94 = scmp.eq.s32.totalorder %s30, 1
    %p95 = por %p93, %p94
    %p97 = scmp.ne.s32.totalorder %s82, %s96
    %p98 = scmp.eq.s32.totalorder %s30, 0
    %p99 = por %p97, %p98
    %s101 = sadd.s32 %s100, 1
    %p104 = scmp.eq.s32.totalorder %s24, 1
    %p105 = scmp.ne.s32.totalorder %s100, %s102
    %p106 = scmp.eq.s32.totalorder %s24, 0
    %p107 = por %p105, %p106
    %p108 = scmp.ne.s32.totalorder %s100, %s102
    %p109 = scmp.eq.s32.totalorder %s29, 1
    %p110 = por %p108, %p109
    %p111 = scmp.ne.s32.totalorder %s102, %s103
    %p112 = scmp.eq.s32.totalorder %s29, 0
    %p113 = por %p111, %p112
    %p114 = scmp.ne.s32.totalorder %s102, %s103
    %p115 = scmp.eq.s32.totalorder %s30, 1
    %p116 = por %p114, %p115
    %p118 = scmp.ne.s32.totalorder %s103, %s117
    %p119 = scmp.eq.s32.totalorder %s30, 0
    %p120 = por %p118, %p119
    %s122 = sadd.s32 %s121, 1
    %p125 = scmp.eq.s32.totalorder %s24, 1
    %p126 = scmp.ne.s32.totalorder %s121, %s123
    %p127 = scmp.eq.s32.totalorder %s24, 0
    %p128 = por %p126, %p127
    %p129 = scmp.ne.s32.totalorder %s121, %s123
    %p130 = scmp.eq.s32.totalorder %s29, 1
    %p131 = por %p129, %p130
    %p132 = scmp.ne.s32.totalorder %s123, %s124
    %p133 = scmp.eq.s32.totalorder %s29, 0
    %p134 = por %p132, %p133
    %p135 = scmp.ne.s32.totalorder %s123, %s124
    %p136 = scmp.eq.s32.totalorder %s30, 1
    %p137 = por %p135, %p136
    %p139 = scmp.ne.s32.totalorder %s124, %s138
    %p140 = scmp.eq.s32.totalorder %s30, 0
    %p141 = por %p139, %p140
    %s143 = sadd.s32 %s142, 1
    %p146 = scmp.eq.s32.totalorder %s24, 1
    %p147 = scmp.ne.s32.totalorder %s142, %s144
    %p148 = scmp.eq.s32.totalorder %s24, 0
    %p149 = por %p147, %p148
    %p150 = scmp.ne.s32.totalorder %s142, %s144
    %p151 = scmp.eq.s32.totalorder %s29, 1
    %p152 = por %p150, %p151
    %p153 = scmp.ne.s32.totalorder %s144, %s145
    %p154 = scmp.eq.s32.totalorder %s29, 0
    %p155 = por %p153, %p154
    %p156 = scmp.ne.s32.totalorder %s144, %s145
    %p157 = scmp.eq.s32.totalorder %s30, 1
    %p158 = por %p156, %p157
    %p160 = scmp.ne.s32.totalorder %s145, %s159
    %p161 = scmp.eq.s32.totalorder %s30, 0
    %p162 = por %p160, %p161
    %s164 = sadd.s32 %s163, 1
    %p167 = scmp.eq.s32.totalorder %s24, 1
    %p168 = scmp.ne.s32.totalorder %s163, %s165
    %p169 = scmp.eq.s32.totalorder %s24, 0
    %p170 = por %p168, %p169
    %p171 = scmp.ne.s32.totalorder %s163, %s165
    %p172 = scmp.eq.s32.totalorder %s29, 1
    %p173 = por %p171, %p172
    %p174 = scmp.ne.s32.totalorder %s165, %s166
    %p175 = scmp.eq.s32.totalorder %s29, 0
    %p176 = por %p174, %p175
    %p177 = scmp.ne.s32.totalorder %s165, %s166
    %p178 = scmp.eq.s32.totalorder %s30, 1
    %p179 = por %p177, %p178
    %p181 = scmp.ne.s32.totalorder %s166, %s180
    %p182 = scmp.eq.s32.totalorder %s30, 0
    %p183 = por %p181, %p182
    %s185 = sadd.s32 %s184, 1
    %p188 = scmp.eq.s32.totalorder %s24, 1
    %p189 = scmp.ne.s32.totalorder %s184, %s186
    %p190 = scmp.eq.s32.totalorder %s24, 0
    %p191 = por %p189, %p190
    %p192 = scmp.ne.s32.totalorder %s184, %s186
    %p193 = scmp.eq.s32.totalorder %s29, 1
    %p194 = por %p192, %p193
    %p195 = scmp.ne.s32.totalorder %s186, %s187
    %p196 = scmp.eq.s32.totalorder %s29, 0
    %p197 = por %p195, %p196
    %p198 = scmp.ne.s32.totalorder %s186, %s187
    %p199 = scmp.eq.s32.totalorder %s30, 1
    %p200 = por %p198, %p199
    %p202 = scmp.ne.s32.totalorder %s187, %s201
    %p203 = scmp.eq.s32.totalorder %s30, 0
    %p204 = por %p202, %p203
    %s206 = sadd.s32 %s205, 1
    %p209 = scmp.eq.s32.totalorder %s24, 1
    %p210 = scmp.ne.s32.totalorder %s205, %s207
    %p211 = scmp.eq.s32.totalorder %s24, 0
    %p212 = por %p210, %p211
    %p213 = scmp.ne.s32.totalorder %s205, %s207
    %p214 = scmp.eq.s32.totalorder %s29, 1
    %p215 = por %p213, %p214
    %p216 = scmp.ne.s32.totalorder %s207, %s208
    %p217 = scmp.eq.s32.totalorder %s29, 0
    %p218 = por %p216, %p217
    %p219 = scmp.ne.s32.totalorder %s207, %s208
    %p220 = scmp.eq.s32.totalorder %s30, 1
    %p221 = por %p219, %p220
    %p223 = scmp.ne.s32.totalorder %s208, %s222
    %p224 = scmp.eq.s32.totalorder %s30, 0
    %p225 = por %p223, %p224
    %s227 = sadd.s32 %s226, 1
    %p230 = scmp.eq.s32.totalorder %s24, 1
    %p231 = scmp.ne.s32.totalorder %s226, %s228
    %p232 = scmp.eq.s32.totalorder %s24, 0
    %p233 = por %p231, %p232
    %p234 = scmp.ne.s32.totalorder %s226, %s228
    %p235 = scmp.eq.s32.totalorder %s29, 1
    %p236 = por %p234, %p235
    %p237 = scmp.ne.s32.totalorder %s228, %s229
    %p238 = scmp.eq.s32.totalorder %s29, 0
    %p239 = por %p237, %p238
    %p240 = scmp.ne.s32.totalorder %s228, %s229
    %p241 = scmp.eq.s32.totalorder %s30, 1
    %p242 = por %p240, %p241
    %p244 = scmp.ne.s32.totalorder %s229, %s243
    %p245 = scmp.eq.s32.totalorder %s30, 0
    %p246 = por %p244, %p245
    %s248 = sadd.s32 %s247, 1
    %p251 = scmp.eq.s32.totalorder %s24, 1
    %p252 = scmp.ne.s32.totalorder %s247, %s249
    %p253 = scmp.eq.s32.totalorder %s24, 0
    %p254 = por %p252, %p253
    %p255 = scmp.ne.s32.totalorder %s247, %s249
    %p256 = scmp.eq.s32.totalorder %s29, 1
    %p257 = por %p255, %p256
    %p258 = scmp.ne.s32.totalorder %s249, %s250
    %p259 = scmp.eq.s32.totalorder %s29, 0
    %p260 = por %p258, %p259
    %p261 = scmp.ne.s32.totalorder %s249, %s250
    %p262 = scmp.eq.s32.totalorder %s30, 1
    %p263 = por %p261, %p262
    %p265 = scmp.ne.s32.totalorder %s250, %s264
    %p266 = scmp.eq.s32.totalorder %s30, 0
    %p267 = por %p265, %p266
    %s269 = sadd.s32 %s268, 1
    %p272 = scmp.eq.s32.totalorder %s24, 1
    %p273 = scmp.ne.s32.totalorder %s268, %s270
    %p274 = scmp.eq.s32.totalorder %s24, 0
    %p275 = por %p273, %p274
    %p276 = scmp.ne.s32.totalorder %s268, %s270
    %p277 = scmp.eq.s32.totalorder %s29, 1
    %p278 = por %p276, %p277
    %p279 = scmp.ne.s32.totalorder %s270, %s271
    %p280 = scmp.eq.s32.totalorder %s29, 0
    %p281 = por %p279, %p280
    %p282 = scmp.ne.s32.totalorder %s270, %s271
    %p283 = scmp.eq.s32.totalorder %s30, 1
    %p284 = por %p282, %p283
    %p286 = scmp.ne.s32.totalorder %s271, %s285
    %p287 = scmp.eq.s32.totalorder %s30, 0
    %p288 = por %p286, %p287
    %s290 = sadd.s32 %s289, 1
    %p293 = scmp.eq.s32.totalorder %s24, 1
    %p294 = scmp.ne.s32.totalorder %s289, %s291
    %p295 = scmp.eq.s32.totalorder %s24, 0
    %p296 = por %p294, %p295
    %p297 = scmp.ne.s32.totalorder %s289, %s291
    %p298 = scmp.eq.s32.totalorder %s29, 1
    %p299 = por %p297, %p298
    %p300 = scmp.ne.s32.totalorder %s291, %s292
    %p301 = scmp.eq.s32.totalorder %s29, 0
    %p302 = por %p300, %p301
    %p303 = scmp.ne.s32.totalorder %s291, %s292
    %p304 = scmp.eq.s32.totalorder %s30, 1
    %p305 = por %p303, %p304
    %p307 = scmp.ne.s32.totalorder %s292, %s306
    %p308 = scmp.eq.s32.totalorder %s30, 0
    %p309 = por %p307, %p308
    %s311 = sadd.s32 %s310, 1
    %p314 = scmp.eq.s32.totalorder %s24, 1
    %p315 = scmp.ne.s32.totalorder %s310, %s312
    %p316 = scmp.eq.s32.totalorder %s24, 0
    %p317 = por %p315, %p316
    %p318 = scmp.ne.s32.totalorder %s310, %s312
    %p319 = scmp.eq.s32.totalorder %s29, 1
    %p320 = por %p318, %p319
    %p321 = scmp.ne.s32.totalorder %s312, %s313
    %p322 = scmp.eq.s32.totalorder %s29, 0
    %p323 = por %p321, %p322
    %p324 = scmp.ne.s32.totalorder %s312, %s313
    %p325 = scmp.eq.s32.totalorder %s30, 1
    %p326 = por %p324, %p325
    %p328 = scmp.ne.s32.totalorder %s313, %s327
    %p329 = scmp.eq.s32.totalorder %s30, 0
    %p330 = por %p328, %p329
    %s332 = sadd.s32 %s331, 1
    %p335 = scmp.eq.s32.totalorder %s24, 1
    %p336 = scmp.ne.s32.totalorder %s331, %s333
    %p337 = scmp.eq.s32.totalorder %s24, 0
    %p338 = por %p336, %p337
    %p339 = scmp.ne.s32.totalorder %s331, %s333
    %p340 = scmp.eq.s32.totalorder %s29, 1
    %p341 = por %p339, %p340
    %p342 = scmp.ne.s32.totalorder %s333, %s334
    %p343 = scmp.eq.s32.totalorder %s29, 0
    %p344 = por %p342, %p343
    %p345 = scmp.ne.s32.totalorder %s333, %s334
    %p346 = scmp.eq.s32.totalorder %s30, 1
    %p347 = por %p345, %p346
    %p349 = scmp.ne.s32.totalorder %s334, %s348
    %p350 = scmp.eq.s32.totalorder %s30, 0
    %p351 = por %p349, %p350
    %s353 = sadd.s32 %s352, 1
    %p356 = scmp.eq.s32.totalorder %s24, 1
    %p357 = scmp.ne.s32.totalorder %s352, %s354
    %p358 = scmp.eq.s32.totalorder %s24, 0
    %p359 = por %p357, %p358
    %p360 = scmp.ne.s32.totalorder %s352, %s354
    %p361 = scmp.eq.s32.totalorder %s29, 1
    %p362 = por %p360, %p361
    %p363 = scmp.ne.s32.totalorder %s354, %s355
    %p364 = scmp.eq.s32.totalorder %s29, 0
    %p365 = por %p363, %p364
    %p366 = scmp.ne.s32.totalorder %s354, %s355
    %p367 = scmp.eq.s32.totalorder %s30, 1
    %p368 = por %p366, %p367
    %p370 = scmp.ne.s32.totalorder %s355, %s369
    %p371 = scmp.eq.s32.totalorder %s30, 0
    %p372 = por %p370, %p371
    %s374 = sadd.s32 %s373, 1
    %p377 = scmp.eq.s32.totalorder %s24, 1
    %p378 = scmp.ne.s32.totalorder %s373, %s375
    %p379 = scmp.eq.s32.totalorder %s24, 0
    %p380 = por %p378, %p379
    %p381 = scmp.ne.s32.totalorder %s373, %s375
    %p382 = scmp.eq.s32.totalorder %s29, 1
    %p383 = por %p381, %p382
    %p384 = scmp.ne.s32.totalorder %s375, %s376
    %p385 = scmp.eq.s32.totalorder %s29, 0
    %p386 = por %p384, %p385
    %p387 = scmp.ne.s32.totalorder %s375, %s376
    %p388 = scmp.eq.s32.totalorder %s30, 1
    %p389 = por %p387, %p388
    %p391 = scmp.ne.s32.totalorder %s376, %s390
    %p392 = scmp.eq.s32.totalorder %s30, 0
    %p393 = por %p391, %p392
    %s395 = sadd.s32 %s394, 1
    %p398 = scmp.eq.s32.totalorder %s24, 1
    %p399 = scmp.ne.s32.totalorder %s394, %s396
    %p400 = scmp.eq.s32.totalorder %s24, 0
    %p401 = por %p399, %p400
    %p402 = scmp.ne.s32.totalorder %s394, %s396
    %p403 = scmp.eq.s32.totalorder %s29, 1
    %p404 = por %p402, %p403
    %p405 = scmp.ne.s32.totalorder %s396, %s397
    %p406 = scmp.eq.s32.totalorder %s29, 0
    %p407 = por %p405, %p406
    %p408 = scmp.ne.s32.totalorder %s396, %s397
    %p409 = scmp.eq.s32.totalorder %s30, 1
    %p410 = por %p408, %p409
    %p412 = scmp.ne.s32.totalorder %s397, %s411
    %p413 = scmp.eq.s32.totalorder %s30, 0
    %p414 = por %p412, %p413
    %s415 = ssub.s32 %s24, %s31
    %p416 = scmp.eq.s32.totalorder %s415, 0
    %s418 = sadd.s32 %s417, 1
    %s419 = scalar_select %p416, %s417, %s418
    %p422 = pneg %p416
    %p423 = scmp.eq.s32.totalorder %s24, 1
    %p424 = por %p422, %p423
    %p425 = scmp.ne.s32.totalorder %s417, %s420
    %p426 = scmp.eq.s32.totalorder %s24, 0
    %p427 = por %p425, %p426
    %p428 = scmp.ne.s32.totalorder %s417, %s420
    %p429 = scmp.eq.s32.totalorder %s29, 1
    %p430 = por %p428, %p429
    %p431 = scmp.ne.s32.totalorder %s420, %s421
    %p432 = scmp.eq.s32.totalorder %s29, 0
    %p433 = por %p431, %p432
    %p434 = scmp.ne.s32.totalorder %s420, %s421
    %p435 = scmp.eq.s32.totalorder %s30, 1
    %p436 = por %p434, %p435
    %p438 = scmp.ne.s32.totalorder %s421, %s437
    %p439 = scmp.eq.s32.totalorder %s30, 0
    %p440 = por %p438, %p439
    %p441 = scmp.le.s32.totalorder 1, %s24
    %p442 = scmp.lt.s32.totalorder %s24, 3
    %p443 = pnand %p441, %p442
    %p444 = pneg %p443
    // Predicated region
    $region9: #{tpu_custom_call.1} parent=5 // pred_check
      _
    $region10: #{tpu_custom_call.1} parent=5 // pred_check_branch
      %446 = sbr.rel (%p443) target = $region12
    $region11: #{tpu_custom_call.1} parent=5 // pred_region
      %s447 = ssub.s32 %s24, 1
      // Predicated region
      $region13: #{tpu_custom_call.1} parent=11 // pred_check
        %p448 = pneg %p71
      $region14: #{tpu_custom_call.1} parent=11 // pred_check_branch
        %450 = sbr.rel (%p448) target = $region16
      $region15: #{tpu_custom_call.1} parent=11 // pred_region
        _
      $region16: #{tpu_custom_call.1} parent=11 // pred_fallthru
        _
      // Predicated region
      $region17: #{tpu_custom_call.1} parent=11 // pred_check
        %p451 = pneg %p92
      $region18: #{tpu_custom_call.1} parent=11 // pred_check_branch
        %453 = sbr.rel (%p451) target = $region20
      $region19: #{tpu_custom_call.1} parent=11 // pred_region
        _
      $region20: #{tpu_custom_call.1} parent=11 // pred_fallthru
        _
      // Predicated region
      $region21: #{tpu_custom_call.1} parent=11 // pred_check
        %p454 = pneg %p113
      $region22: #{tpu_custom_call.1} parent=11 // pred_check_branch
        %456 = sbr.rel (%p454) target = $region24
      $region23: #{tpu_custom_call.1} parent=11 // pred_region
        _
      $region24: #{tpu_custom_call.1} parent=11 // pred_fallthru
        _
      // Predicated region
      $region25: #{tpu_custom_call.1} parent=11 // pred_check
        %p457 = pneg %p134
      $region26: #{tpu_custom_call.1} parent=11 // pred_check_branch
        %459 = sbr.rel (%p457) target = $region28
      $region27: #{tpu_custom_call.1} parent=11 // pred_region
        _
      $region28: #{tpu_custom_call.1} parent=11 // pred_fallthru
        _
      // Predicated region
      $region29: #{tpu_custom_call.1} parent=11 // pred_check
        %p460 = pneg %p155
      $region30: #{tpu_custom_call.1} parent=11 // pred_check_branch
        %462 = sbr.rel (%p460) target = $region32
      $region31: #{tpu_custom_call.1} parent=11 // pred_region
        _
      $region32: #{tpu_custom_call.1} parent=11 // pred_fallthru
        _
      // Predicated region
      $region33: #{tpu_custom_call.1} parent=11 // pred_check
        %p463 = pneg %p176
      $region34: #{tpu_custom_call.1} parent=11 // pred_check_branch
        %465 = sbr.rel (%p463) target = $region36
      $region35: #{tpu_custom_call.1} parent=11 // pred_region
        _
      $region36: #{tpu_custom_call.1} parent=11 // pred_fallthru
        _
      // Predicated region
      $region37: #{tpu_custom_call.1} parent=11 // pred_check
        %p466 = pneg %p197
      $region38: #{tpu_custom_call.1} parent=11 // pred_check_branch
        %468 = sbr.rel (%p466) target = $region40
      $region39: #{tpu_custom_call.1} parent=11 // pred_region
        _
      $region40: #{tpu_custom_call.1} parent=11 // pred_fallthru
        _
      // Predicated region
      $region41: #{tpu_custom_call.1} parent=11 // pred_check
        %p469 = pneg %p218
      $region42: #{tpu_custom_call.1} parent=11 // pred_check_branch
        %471 = sbr.rel (%p469) target = $region44
      $region43: #{tpu_custom_call.1} parent=11 // pred_region
        _
      $region44: #{tpu_custom_call.1} parent=11 // pred_fallthru
        _
      // Predicated region
      $region45: #{tpu_custom_call.1} parent=11 // pred_check
        %p472 = pneg %p239
      $region46: #{tpu_custom_call.1} parent=11 // pred_check_branch
        %474 = sbr.rel (%p472) target = $region48
      $region47: #{tpu_custom_call.1} parent=11 // pred_region
        _
      $region48: #{tpu_custom_call.1} parent=11 // pred_fallthru
        _
      // Predicated region
      $region49: #{tpu_custom_call.1} parent=11 // pred_check
        %p475 = pneg %p260
      $region50: #{tpu_custom_call.1} parent=11 // pred_check_branch
        %477 = sbr.rel (%p475) target = $region52
      $region51: #{tpu_custom_call.1} parent=11 // pred_region
        _
      $region52: #{tpu_custom_call.1} parent=11 // pred_fallthru
        _
      // Predicated region
      $region53: #{tpu_custom_call.1} parent=11 // pred_check
        %p478 = pneg %p281
      $region54: #{tpu_custom_call.1} parent=11 // pred_check_branch
        %480 = sbr.rel (%p478) target = $region56
      $region55: #{tpu_custom_call.1} parent=11 // pred_region
        _
      $region56: #{tpu_custom_call.1} parent=11 // pred_fallthru
        _
      // Predicated region
      $region57: #{tpu_custom_call.1} parent=11 // pred_check
        %p481 = pneg %p302
      $region58: #{tpu_custom_call.1} parent=11 // pred_check_branch
        %483 = sbr.rel (%p481) target = $region60
      $region59: #{tpu_custom_call.1} parent=11 // pred_region
        _
      $region60: #{tpu_custom_call.1} parent=11 // pred_fallthru
        _
      // Predicated region
      $region61: #{tpu_custom_call.1} parent=11 // pred_check
        %p484 = pneg %p323
      $region62: #{tpu_custom_call.1} parent=11 // pred_check_branch
        %486 = sbr.rel (%p484) target = $region64
      $region63: #{tpu_custom_call.1} parent=11 // pred_region
        _
      $region64: #{tpu_custom_call.1} parent=11 // pred_fallthru
        _
      // Predicated region
      $region65: #{tpu_custom_call.1} parent=11 // pred_check
        %p487 = pneg %p344
      $region66: #{tpu_custom_call.1} parent=11 // pred_check_branch
        %489 = sbr.rel (%p487) target = $region68
      $region67: #{tpu_custom_call.1} parent=11 // pred_region
        _
      $region68: #{tpu_custom_call.1} parent=11 // pred_fallthru
        _
      // Predicated region
      $region69: #{tpu_custom_call.1} parent=11 // pred_check
        %p490 = pneg %p365
      $region70: #{tpu_custom_call.1} parent=11 // pred_check_branch
        %492 = sbr.rel (%p490) target = $region72
      $region71: #{tpu_custom_call.1} parent=11 // pred_region
        _
      $region72: #{tpu_custom_call.1} parent=11 // pred_fallthru
        _
      // Predicated region
      $region73: #{tpu_custom_call.1} parent=11 // pred_check
        %p493 = pneg %p386
      $region74: #{tpu_custom_call.1} parent=11 // pred_check_branch
        %495 = sbr.rel (%p493) target = $region76
      $region75: #{tpu_custom_call.1} parent=11 // pred_region
        _
      $region76: #{tpu_custom_call.1} parent=11 // pred_fallthru
        _
      // Predicated region
      $region77: #{tpu_custom_call.1} parent=11 // pred_check
        %p496 = pneg %p407
      $region78: #{tpu_custom_call.1} parent=11 // pred_check_branch
        %498 = sbr.rel (%p496) target = $region80
      $region79: #{tpu_custom_call.1} parent=11 // pred_region
        _
      $region80: #{tpu_custom_call.1} parent=11 // pred_fallthru
        _
    $region12: #{tpu_custom_call.1} parent=5 // pred_fallthru
      _
    %p499 = scmp.lt.s32.totalorder %s24, 2
    // Predicated region
    $region81: #{tpu_custom_call.1} parent=5 // pred_check
      %p500 = pneg %p499
    $region82: #{tpu_custom_call.1} parent=5 // pred_check_branch
      %502 = sbr.rel (%p500) target = $region84
    $region83: #{tpu_custom_call.1} parent=5 // pred_region
      // Predicated region
      $region85: #{tpu_custom_call.1} parent=83 // pred_check
        %p503 = pneg %p44
      $region86: #{tpu_custom_call.1} parent=83 // pred_check_branch
        %505 = sbr.rel (%p503) target = $region88
      $region87: #{tpu_custom_call.1} parent=83 // pred_region
        %p506 = scmp.lt.s32.totalorder %s24, 1
        %s507 = scalar_select %p506, %s24, 1
        %s508 = smul.addr %s507, 4
        %s509 = scalar_lea.vmem %s0, %s508
      $region88: #{tpu_custom_call.1} parent=83 // pred_fallthru
        _
    $region84: #{tpu_custom_call.1} parent=5 // pred_fallthru
      _
    %p510 = scmp.le.s32.totalorder 1, %s24
    %p511 = scmp.lt.s32.totalorder %s24, 3
    %p512 = pnand %p510, %p511
    %p513 = pneg %p512
    // Predicated region
    $region89: #{tpu_custom_call.1} parent=5 // pred_check
      _
    $region90: #{tpu_custom_call.1} parent=5 // pred_check_branch
      %515 = sbr.rel (%p512) target = $region92
    $region91: #{tpu_custom_call.1} parent=5 // pred_region
      %s516 = ssub.s32 %s24, 1
      %p517 = scmp.lt.s32.totalorder %s29, 1
      %s518 = scalar_select %p517, %s29, 1
      %s519 = smul.addr %s518, 4
      %s520 = scalar_lea.vmem %s0, %s519
      %p521 = pneg %p50
      %p522 = pneg %p47
      %p523 = pneg %p71
      %p524 = pneg %p68
      %p525 = pneg %p92
      %p526 = pneg %p89
      %p527 = pneg %p113
      %p528 = pneg %p110
      %p529 = pneg %p134
      %p530 = pneg %p131
      %p531 = pneg %p155
      %p532 = pneg %p152
      %p533 = pneg %p176
      %p534 = pneg %p173
      %p535 = pneg %p197
      %p536 = pneg %p194
      %p537 = pneg %p218
      %p538 = pneg %p215
      %p539 = pneg %p239
      %p540 = pneg %p236
      %p541 = pneg %p260
      %p542 = pneg %p257
      %p543 = pneg %p281
      %p544 = pneg %p278
      %p545 = pneg %p302
      %p546 = pneg %p299
      %p547 = pneg %p323
      %p548 = pneg %p320
      %p549 = pneg %p344
      %p550 = pneg %p341
      %p551 = pneg %p365
      %p552 = pneg %p362
      %p553 = pneg %p386
      %p554 = pneg %p383
      %p555 = pneg %p407
      %p556 = pneg %p404
      %p557 = pneg %p433
      %p558 = pneg %p430
      %p559 = scmp.lt.s32.totalorder %s29, 1
      %s560 = scalar_select %p559, %s29, 1
      %s561 = smul.addr %s560, 4
      %s562 = scalar_lea.vmem %s18, %s561
      %p563 = scmp.lt.s32.totalorder %s29, 1
      %s564 = scalar_select %p563, %s29, 1
      %s565 = smul.addr %s564, 4
      %s566 = scalar_lea.vmem %s0, %s565
      %p567 = scmp.lt.s32.totalorder %s29, 1
      %s568 = scalar_select %p567, %s29, 1
      %s569 = smul.addr %s568, 4
      %s570 = scalar_lea.vmem %s18, %s569
      %v571 = vld [vmem:[%s566] sm:$0xf]
      %v572 = vld [vmem:[%s1] sm:$0xff]
      %v573 = vld [vmem:[%s1 + $0x8] sm:$0xff]
      %s574 = scalar_lea.vmem %s1, 16
      %v575 = vld [vmem:[%s574] sm:$0xff]
      %v576 = vld [vmem:[%s574 + $0x8] sm:$0xff]
      %578 = vrot.lane.b32.xlu0 %v571, 127
      %v579 = vpop.permute.xlu0 %578
      %vm580 = vcmask 31744
      %v582 = vsel %vm580, %v575, 0
      %v585 = vsel %vm580, %v576, 0
      %vm587 = vcmask 1043456
      %v588 = vsel %vm587, %v579, 0
      %590 = vmatprep.subr.mxu0 0.0
      %591 = vmatpush1.msra.mxu0 %v588
      %592 = vmatprep.subr.mxu0 0.0
      %593 = vmatpush1.msra.mxu0 0.0
      %594 = vmatprep.subr.mxu0 0.0
      %595 = vmatpush1.msra.mxu0 0.0
      %596 = vmatprep.subr.mxu0 0.0
      %597 = vmatpush1.msra.mxu0 0.0
      %598 = vmatprep.subr.mxu0 0.0
      %599 = vmatpush1.msra.mxu0 0.0
      %600 = vmatprep.subr.mxu0 0.0
      %601 = vmatpush1.msra.mxu0 0.0
      %602 = vmatprep.subr.mxu0 0.0
      %603 = vmatpush1.msra.mxu0 0.0
      %604 = vmatprep.subr.mxu0 0.0
      %605 = vmatpush1.msra.mxu0 0.0
      %606 = vmatprep.subr.mxu0 0.0
      %607 = vmatpush1.msra.mxu0 0.0
      %608 = vmatprep.subr.mxu0 0.0
      %609 = vmatpush1.msra.mxu0 0.0
      %610 = vmatprep.subr.mxu0 0.0
      %611 = vmatpush1.msra.mxu0 0.0
      %612 = vmatprep.subr.mxu0 0.0
      %613 = vmatpush1.msra.mxu0 0.0
      %614 = vmatprep.subr.mxu0 0.0
      %615 = vmatpush1.msra.mxu0 0.0
      %616 = vmatprep.subr.mxu0 0.0
      %617 = vmatpush1.msra.mxu0 0.0
      %618 = vmatprep.subr.mxu0 0.0
      %619 = vmatpush1.msra.mxu0 0.0
      %620 = vmatprep.subr.mxu0 0.0
      %621 = vmatpush1.msra.mxu0 0.0
      %622 = vmatprep.subr.mxu0 0.0
      %623 = vmatpush1.msra.mxu0 0.0
      %624 = vmatprep.subr.mxu0 0.0
      %625 = vmatpush1.msra.mxu0 0.0
      %626 = vmatprep.subr.mxu0 0.0
      %627 = vmatpush1.msra.mxu0 0.0
      %628 = vmatprep.subr.mxu0 0.0
      %629 = vmatpush1.msra.mxu0 0.0
      %630 = vmatprep.subr.mxu0 0.0
      %631 = vmatpush1.msra.mxu0 0.0
      %632 = vmatprep.subr.mxu0 0.0
      %633 = vmatpush1.msra.mxu0 0.0
      %634 = vmatprep.subr.mxu0 0.0
      %635 = vmatpush1.msra.mxu0 0.0
      %636 = vmatprep.subr.mxu0 0.0
      %637 = vmatpush1.msra.mxu0 0.0
      %638 = vmatprep.subr.mxu0 0.0
      %639 = vmatpush1.msra.mxu0 0.0
      %640 = vmatprep.subr.mxu0 0.0
      %641 = vmatpush1.msra.mxu0 0.0
      %642 = vmatprep.subr.mxu0 0.0
      %643 = vmatpush1.msra.mxu0 0.0
      %644 = vmatprep.subr.mxu0 0.0
      %645 = vmatpush1.msra.mxu0 0.0
      %646 = vmatprep.subr.mxu0 0.0
      %647 = vmatpush1.msra.mxu0 0.0
      %648 = vmatprep.subr.mxu0 0.0
      %649 = vmatpush1.msra.mxu0 0.0
      %650 = vmatprep.subr.mxu0 0.0
      %651 = vmatpush1.msra.mxu0 0.0
      %652 = vmatprep.subr.mxu0 0.0
      %653 = vmatpush1.msra.mxu0 0.0
      %654 = vmatprep.mubr.f32.mxu0 0.0
      %655 = vmatmul.mubr.f32.gmra.mrb[0].mxu0 %v582
      %v656 = vpop.f32.mrb[0].mxu0
      %v657 = vadd.f32 0.0, %v656
      %v658 = vpop.f32.mrb[0].mxu0
      %659 = vmatprep.mubr.f32.mxu0 0.0
      %660 = vmatmul.mubr.f32.gmra.mrb[0].mxu0 %v585
      %v661 = vpop.f32.mrb[0].mxu0
      %v662 = vadd.f32 0.0, %v661
      %v663 = vpop.f32.mrb[0].mxu0
      %664 = vdwg.mxu0
      %v666 = vsel %vm580, %v572, 0
      %v669 = vsel %vm580, %v573, 0
      %v671 = vsel %vm587, %v571, 0
      %673 = vmatprep.subr.mxu0 0.0
      %674 = vmatpush1.msra.mxu0 %v671
      %675 = vmatprep.subr.mxu0 0.0
      %676 = vmatpush1.msra.mxu0 0.0
      %677 = vmatprep.subr.mxu0 0.0
      %678 = vmatpush1.msra.mxu0 0.0
      %679 = vmatprep.subr.mxu0 0.0
      %680 = vmatpush1.msra.mxu0 0.0
      %681 = vmatprep.subr.mxu0 0.0
      %682 = vmatpush1.msra.mxu0 0.0
      %683 = vmatprep.subr.mxu0 0.0
      %684 = vmatpush1.msra.mxu0 0.0
      %685 = vmatprep.subr.mxu0 0.0
      %686 = vmatpush1.msra.mxu0 0.0
      %687 = vmatprep.subr.mxu0 0.0
      %688 = vmatpush1.msra.mxu0 0.0
      %689 = vmatprep.subr.mxu0 0.0
      %690 = vmatpush1.msra.mxu0 0.0
      %691 = vmatprep.subr.mxu0 0.0
      %692 = vmatpush1.msra.mxu0 0.0
      %693 = vmatprep.subr.mxu0 0.0
      %694 = vmatpush1.msra.mxu0 0.0
      %695 = vmatprep.subr.mxu0 0.0
      %696 = vmatpush1.msra.mxu0 0.0
      %697 = vmatprep.subr.mxu0 0.0
      %698 = vmatpush1.msra.mxu0 0.0
      %699 = vmatprep.subr.mxu0 0.0
      %700 = vmatpush1.msra.mxu0 0.0
      %701 = vmatprep.subr.mxu0 0.0
      %702 = vmatpush1.msra.mxu0 0.0
      %703 = vmatprep.subr.mxu0 0.0
      %704 = vmatpush1.msra.mxu0 0.0
      %705 = vmatprep.subr.mxu0 0.0
      %706 = vmatpush1.msra.mxu0 0.0
      %707 = vmatprep.subr.mxu0 0.0
      %708 = vmatpush1.msra.mxu0 0.0
      %709 = vmatprep.subr.mxu0 0.0
      %710 = vmatpush1.msra.mxu0 0.0
      %711 = vmatprep.subr.mxu0 0.0
      %712 = vmatpush1.msra.mxu0 0.0
      %713 = vmatprep.subr.mxu0 0.0
      %714 = vmatpush1.msra.mxu0 0.0
      %715 = vmatprep.subr.mxu0 0.0
      %716 = vmatpush1.msra.mxu0 0.0
      %717 = vmatprep.subr.mxu0 0.0
      %718 = vmatpush1.msra.mxu0 0.0
      %719 = vmatprep.subr.mxu0 0.0
      %720 = vmatpush1.msra.mxu0 0.0
      %721 = vmatprep.subr.mxu0 0.0
      %722 = vmatpush1.msra.mxu0 0.0
      %723 = vmatprep.subr.mxu0 0.0
      %724 = vmatpush1.msra.mxu0 0.0
      %725 = vmatprep.subr.mxu0 0.0
      %726 = vmatpush1.msra.mxu0 0.0
      %727 = vmatprep.subr.mxu0 0.0
      %728 = vmatpush1.msra.mxu0 0.0
      %729 = vmatprep.subr.mxu0 0.0
      %730 = vmatpush1.msra.mxu0 0.0
      %731 = vmatprep.subr.mxu0 0.0
      %732 = vmatpush1.msra.mxu0 0.0
      %733 = vmatprep.subr.mxu0 0.0
      %734 = vmatpush1.msra.mxu0 0.0
      %735 = vmatprep.subr.mxu0 0.0
      %736 = vmatpush1.msra.mxu0 0.0
      %737 = vmatprep.mubr.f32.mxu0 0.0
      %738 = vmatmul.mubr.f32.gmra.mrb[0].mxu0 %v666
      %v739 = vpop.f32.mrb[0].mxu0
      %v740 = vadd.f32 %v657, %v739
      %v741 = vpop.f32.mrb[0].mxu0
      %742 = vmatprep.mubr.f32.mxu0 0.0
      %743 = vmatmul.mubr.f32.gmra.mrb[0].mxu0 %v669
      %v744 = vpop.f32.mrb[0].mxu0
      %v745 = vadd.f32 %v662, %v744
      %v746 = vpop.f32.mrb[0].mxu0
      %747 = vdwg.mxu0
      %s748 = scalar_lea.vmem %s1, 32
      %v749 = vld [vmem:[%s748] sm:$0xff]
      %v750 = vld [vmem:[%s748 + $0x8] sm:$0xff]
      %751 = vrot.lane.b32.xlu0 %v571, 126
      %v752 = vpop.permute.xlu0 %751
      %v754 = vsel %vm580, %v749, 0
      %v757 = vsel %vm580, %v750, 0
      %v759 = vsel %vm587, %v752, 0
      %761 = vmatprep.subr.mxu0 0.0
      %762 = vmatpush1.msra.mxu0 %v759
      %763 = vmatprep.subr.mxu0 0.0
      %764 = vmatpush1.msra.mxu0 0.0
      %765 = vmatprep.subr.mxu0 0.0
      %766 = vmatpush1.msra.mxu0 0.0
      %767 = vmatprep.subr.mxu0 0.0
      %768 = vmatpush1.msra.mxu0 0.0
      %769 = vmatprep.subr.mxu0 0.0
      %770 = vmatpush1.msra.mxu0 0.0
      %771 = vmatprep.subr.mxu0 0.0
      %772 = vmatpush1.msra.mxu0 0.0
      %773 = vmatprep.subr.mxu0 0.0
      %774 = vmatpush1.msra.mxu0 0.0
      %775 = vmatprep.subr.mxu0 0.0
      %776 = vmatpush1.msra.mxu0 0.0
      %777 = vmatprep.subr.mxu0 0.0
      %778 = vmatpush1.msra.mxu0 0.0
      %779 = vmatprep.subr.mxu0 0.0
      %780 = vmatpush1.msra.mxu0 0.0
      %781 = vmatprep.subr.mxu0 0.0
      %782 = vmatpush1.msra.mxu0 0.0
      %783 = vmatprep.subr.mxu0 0.0
      %784 = vmatpush1.msra.mxu0 0.0
      %785 = vmatprep.subr.mxu0 0.0
      %786 = vmatpush1.msra.mxu0 0.0
      %787 = vmatprep.subr.mxu0 0.0
      %788 = vmatpush1.msra.mxu0 0.0
      %789 = vmatprep.subr.mxu0 0.0
      %790 = vmatpush1.msra.mxu0 0.0
      %791 = vmatprep.subr.mxu0 0.0
      %792 = vmatpush1.msra.mxu0 0.0
      %793 = vmatprep.subr.mxu0 0.0
      %794 = vmatpush1.msra.mxu0 0.0
      %795 = vmatprep.subr.mxu0 0.0
      %796 = vmatpush1.msra.mxu0 0.0
      %797 = vmatprep.subr.mxu0 0.0
      %798 = vmatpush1.msra.mxu0 0.0
      %799 = vmatprep.subr.mxu0 0.0
      %800 = vmatpush1.msra.mxu0 0.0
      %801 = vmatprep.subr.mxu0 0.0
      %802 = vmatpush1.msra.mxu0 0.0
      %803 = vmatprep.subr.mxu0 0.0
      %804 = vmatpush1.msra.mxu0 0.0
      %805 = vmatprep.subr.mxu0 0.0
      %806 = vmatpush1.msra.mxu0 0.0
      %807 = vmatprep.subr.mxu0 0.0
      %808 = vmatpush1.msra.mxu0 0.0
      %809 = vmatprep.subr.mxu0 0.0
      %810 = vmatpush1.msra.mxu0 0.0
      %811 = vmatprep.subr.mxu0 0.0
      %812 = vmatpush1.msra.mxu0 0.0
      %813 = vmatprep.subr.mxu0 0.0
      %814 = vmatpush1.msra.mxu0 0.0
      %815 = vmatprep.subr.mxu0 0.0
      %816 = vmatpush1.msra.mxu0 0.0
      %817 = vmatprep.subr.mxu0 0.0
      %818 = vmatpush1.msra.mxu0 0.0
      %819 = vmatprep.subr.mxu0 0.0
      %820 = vmatpush1.msra.mxu0 0.0
      %821 = vmatprep.subr.mxu0 0.0
      %822 = vmatpush1.msra.mxu0 0.0
      %823 = vmatprep.subr.mxu0 0.0
      %824 = vmatpush1.msra.mxu0 0.0
      %825 = vmatprep.mubr.f32.mxu0 0.0
      %826 = vmatmul.mubr.f32.gmra.mrb[0].mxu0 %v754
      %v827 = vpop.f32.mrb[0].mxu0
      %v828 = vadd.f32 0.0, %v827
      %v829 = vpop.f32.mrb[0].mxu0
      %830 = vmatprep.mubr.f32.mxu0 0.0
      %831 = vmatmul.mubr.f32.gmra.mrb[0].mxu0 %v757
      %v832 = vpop.f32.mrb[0].mxu0
      %v833 = vadd.f32 0.0, %v832
      %v834 = vpop.f32.mrb[0].mxu0
      %835 = vdwg.mxu0
      %v836 = vadd.f32 %v740, %v828
      %v837 = vadd.f32 %v745, %v833
      %s838 = scalar_lea.vmem %s1, 48
      %v839 = vld [vmem:[%s838] sm:$0xff]
      %v840 = vld [vmem:[%s838 + $0x8] sm:$0xff]
      %841 = vrot.lane.b32.xlu0 %v571, 125
      %v842 = vpop.permute.xlu0 %841
      %v844 = vsel %vm580, %v839, 0
      %v847 = vsel %vm580, %v840, 0
      %v849 = vsel %vm587, %v842, 0
      %851 = vmatprep.subr.mxu0 0.0
      %852 = vmatpush1.msra.mxu0 %v849
      %853 = vmatprep.subr.mxu0 0.0
      %854 = vmatpush1.msra.mxu0 0.0
      %855 = vmatprep.subr.mxu0 0.0
      %856 = vmatpush1.msra.mxu0 0.0
      %857 = vmatprep.subr.mxu0 0.0
      %858 = vmatpush1.msra.mxu0 0.0
      %859 = vmatprep.subr.mxu0 0.0
      %860 = vmatpush1.msra.mxu0 0.0
      %861 = vmatprep.subr.mxu0 0.0
      %862 = vmatpush1.msra.mxu0 0.0
      %863 = vmatprep.subr.mxu0 0.0
      %864 = vmatpush1.msra.mxu0 0.0
      %865 = vmatprep.subr.mxu0 0.0
      %866 = vmatpush1.msra.mxu0 0.0
      %867 = vmatprep.subr.mxu0 0.0
      %868 = vmatpush1.msra.mxu0 0.0
      %869 = vmatprep.subr.mxu0 0.0
      %870 = vmatpush1.msra.mxu0 0.0
      %871 = vmatprep.subr.mxu0 0.0
      %872 = vmatpush1.msra.mxu0 0.0
      %873 = vmatprep.subr.mxu0 0.0
      %874 = vmatpush1.msra.mxu0 0.0
      %875 = vmatprep.subr.mxu0 0.0
      %876 = vmatpush1.msra.mxu0 0.0
      %877 = vmatprep.subr.mxu0 0.0
      %878 = vmatpush1.msra.mxu0 0.0
      %879 = vmatprep.subr.mxu0 0.0
      %880 = vmatpush1.msra.mxu0 0.0
      %881 = vmatprep.subr.mxu0 0.0
      %882 = vmatpush1.msra.mxu0 0.0
      %883 = vmatprep.subr.mxu0 0.0
      %884 = vmatpush1.msra.mxu0 0.0
      %885 = vmatprep.subr.mxu0 0.0
      %886 = vmatpush1.msra.mxu0 0.0
      %887 = vmatprep.subr.mxu0 0.0
      %888 = vmatpush1.msra.mxu0 0.0
      %889 = vmatprep.subr.mxu0 0.0
      %890 = vmatpush1.msra.mxu0 0.0
      %891 = vmatprep.subr.mxu0 0.0
      %892 = vmatpush1.msra.mxu0 0.0
      %893 = vmatprep.subr.mxu0 0.0
      %894 = vmatpush1.msra.mxu0 0.0
      %895 = vmatprep.subr.mxu0 0.0
      %896 = vmatpush1.msra.mxu0 0.0
      %897 = vmatprep.subr.mxu0 0.0
      %898 = vmatpush1.msra.mxu0 0.0
      %899 = vmatprep.subr.mxu0 0.0
      %900 = vmatpush1.msra.mxu0 0.0
      %901 = vmatprep.subr.mxu0 0.0
      %902 = vmatpush1.msra.mxu0 0.0
      %903 = vmatprep.subr.mxu0 0.0
      %904 = vmatpush1.msra.mxu0 0.0
      %905 = vmatprep.subr.mxu0 0.0
      %906 = vmatpush1.msra.mxu0 0.0
      %907 = vmatprep.subr.mxu0 0.0
      %908 = vmatpush1.msra.mxu0 0.0
      %909 = vmatprep.subr.mxu0 0.0
      %910 = vmatpush1.msra.mxu0 0.0
      %911 = vmatprep.subr.mxu0 0.0
      %912 = vmatpush1.msra.mxu0 0.0
      %913 = vmatprep.subr.mxu0 0.0
      %914 = vmatpush1.msra.mxu0 0.0
      %915 = vmatprep.mubr.f32.mxu0 0.0
      %916 = vmatmul.mubr.f32.gmra.mrb[0].mxu0 %v844
      %v917 = vpop.f32.mrb[0].mxu0
      %v918 = vadd.f32 0.0, %v917
      %v919 = vpop.f32.mrb[0].mxu0
      %920 = vmatprep.mubr.f32.mxu0 0.0
      %921 = vmatmul.mubr.f32.gmra.mrb[0].mxu0 %v847
      %v922 = vpop.f32.mrb[0].mxu0
      %v923 = vadd.f32 0.0, %v922
      %v924 = vpop.f32.mrb[0].mxu0
      %925 = vdwg.mxu0
      %v926 = vadd.f32 %v836, %v918
      %v927 = vadd.f32 %v837, %v923
      %s928 = scalar_lea.vmem %s1, 64
      %v929 = vld [vmem:[%s928] sm:$0xff]
      %v930 = vld [vmem:[%s928 + $0x8] sm:$0xff]
      %931 = vrot.lane.b32.xlu0 %v571, 124
      %v932 = vpop.permute.xlu0 %931
      %v934 = vsel %vm580, %v929, 0
      %v937 = vsel %vm580, %v930, 0
      %v939 = vsel %vm587, %v932, 0
      %941 = vmatprep.subr.mxu0 0.0
      %942 = vmatpush1.msra.mxu0 %v939
      %943 = vmatprep.subr.mxu0 0.0
      %944 = vmatpush1.msra.mxu0 0.0
      %945 = vmatprep.subr.mxu0 0.0
      %946 = vmatpush1.msra.mxu0 0.0
      %947 = vmatprep.subr.mxu0 0.0
      %948 = vmatpush1.msra.mxu0 0.0
      %949 = vmatprep.subr.mxu0 0.0
      %950 = vmatpush1.msra.mxu0 0.0
      %951 = vmatprep.subr.mxu0 0.0
      %952 = vmatpush1.msra.mxu0 0.0
      %953 = vmatprep.subr.mxu0 0.0
      %954 = vmatpush1.msra.mxu0 0.0
      %955 = vmatprep.subr.mxu0 0.0
      %956 = vmatpush1.msra.mxu0 0.0
      %957 = vmatprep.subr.mxu0 0.0
      %958 = vmatpush1.msra.mxu0 0.0
      %959 = vmatprep.subr.mxu0 0.0
      %960 = vmatpush1.msra.mxu0 0.0
      %961 = vmatprep.subr.mxu0 0.0
      %962 = vmatpush1.msra.mxu0 0.0
      %963 = vmatprep.subr.mxu0 0.0
      %964 = vmatpush1.msra.mxu0 0.0
      %965 = vmatprep.subr.mxu0 0.0
      %966 = vmatpush1.msra.mxu0 0.0
      %967 = vmatprep.subr.mxu0 0.0
      %968 = vmatpush1.msra.mxu0 0.0
      %969 = vmatprep.subr.mxu0 0.0
      %970 = vmatpush1.msra.mxu0 0.0
      %971 = vmatprep.subr.mxu0 0.0
      %972 = vmatpush1.msra.mxu0 0.0
      %973 = vmatprep.subr.mxu0 0.0
      %974 = vmatpush1.msra.mxu0 0.0
      %975 = vmatprep.subr.mxu0 0.0
      %976 = vmatpush1.msra.mxu0 0.0
      %977 = vmatprep.subr.mxu0 0.0
      %978 = vmatpush1.msra.mxu0 0.0
      %979 = vmatprep.subr.mxu0 0.0
      %980 = vmatpush1.msra.mxu0 0.0
      %981 = vmatprep.subr.mxu0 0.0
      %982 = vmatpush1.msra.mxu0 0.0
      %983 = vmatprep.subr.mxu0 0.0
      %984 = vmatpush1.msra.mxu0 0.0
      %985 = vmatprep.subr.mxu0 0.0
      %986 = vmatpush1.msra.mxu0 0.0
      %987 = vmatprep.subr.mxu0 0.0
      %988 = vmatpush1.msra.mxu0 0.0
      %989 = vmatprep.subr.mxu0 0.0
      %990 = vmatpush1.msra.mxu0 0.0
      %991 = vmatprep.subr.mxu0 0.0
      %992 = vmatpush1.msra.mxu0 0.0
      %993 = vmatprep.subr.mxu0 0.0
      %994 = vmatpush1.msra.mxu0 0.0
      %995 = vmatprep.subr.mxu0 0.0
      %996 = vmatpush1.msra.mxu0 0.0
      %997 = vmatprep.subr.mxu0 0.0
      %998 = vmatpush1.msra.mxu0 0.0
      %999 = vmatprep.subr.mxu0 0.0
      %1000 = vmatpush1.msra.mxu0 0.0
      %1001 = vmatprep.subr.mxu0 0.0
      %1002 = vmatpush1.msra.mxu0 0.0
      %1003 = vmatprep.subr.mxu0 0.0
      %1004 = vmatpush1.msra.mxu0 0.0
      %1005 = vmatprep.mubr.f32.mxu0 0.0
      %1006 = vmatmul.mubr.f32.gmra.mrb[0].mxu0 %v934
      %v1007 = vpop.f32.mrb[0].mxu0
      %v1008 = vadd.f32 0.0, %v1007
      %v1009 = vpop.f32.mrb[0].mxu0
      %1010 = vmatprep.mubr.f32.mxu0 0.0
      %1011 = vmatmul.mubr.f32.gmra.mrb[0].mxu0 %v937
      %v1012 = vpop.f32.mrb[0].mxu0
      %v1013 = vadd.f32 0.0, %v1012
      %v1014 = vpop.f32.mrb[0].mxu0
      %1015 = vdwg.mxu0
      %v1016 = vadd.f32 %v926, %v1008
      %v1017 = vadd.f32 %v927, %v1013
      %s1018 = scalar_lea.vmem %s1, 80
      %v1019 = vld [vmem:[%s1018] sm:$0xff]
      %v1020 = vld [vmem:[%s1018 + $0x8] sm:$0xff]
      %1021 = vrot.lane.b32.xlu0 %v571, 123
      %v1022 = vpop.permute.xlu0 %1021
      %v1024 = vsel %vm580, %v1019, 0
      %v1027 = vsel %vm580, %v1020, 0
      %v1029 = vsel %vm587, %v1022, 0
      %1031 = vmatprep.subr.mxu0 0.0
      %1032 = vmatpush1.msra.mxu0 %v1029
      %1033 = vmatprep.subr.mxu0 0.0
      %1034 = vmatpush1.msra.mxu0 0.0
      %1035 = vmatprep.subr.mxu0 0.0
      %1036 = vmatpush1.msra.mxu0 0.0
      %1037 = vmatprep.subr.mxu0 0.0
      %1038 = vmatpush1.msra.mxu0 0.0
      %1039 = vmatprep.subr.mxu0 0.0
      %1040 = vmatpush1.msra.mxu0 0.0
      %1041 = vmatprep.subr.mxu0 0.0
      %1042 = vmatpush1.msra.mxu0 0.0
      %1043 = vmatprep.subr.mxu0 0.0
      %1044 = vmatpush1.msra.mxu0 0.0
      %1045 = vmatprep.subr.mxu0 0.0
      %1046 = vmatpush1.msra.mxu0 0.0
      %1047 = vmatprep.subr.mxu0 0.0
      %1048 = vmatpush1.msra.mxu0 0.0
      %1049 = vmatprep.subr.mxu0 0.0
      %1050 = vmatpush1.msra.mxu0 0.0
      %1051 = vmatprep.subr.mxu0 0.0
      %1052 = vmatpush1.msra.mxu0 0.0
      %1053 = vmatprep.subr.mxu0 0.0
      %1054 = vmatpush1.msra.mxu0 0.0
      %1055 = vmatprep.subr.mxu0 0.0
      %1056 = vmatpush1.msra.mxu0 0.0
      %1057 = vmatprep.subr.mxu0 0.0
      %1058 = vmatpush1.msra.mxu0 0.0
      %1059 = vmatprep.subr.mxu0 0.0
      %1060 = vmatpush1.msra.mxu0 0.0
      %1061 = vmatprep.subr.mxu0 0.0
      %1062 = vmatpush1.msra.mxu0 0.0
      %1063 = vmatprep.subr.mxu0 0.0
      %1064 = vmatpush1.msra.mxu0 0.0
      %1065 = vmatprep.subr.mxu0 0.0
      %1066 = vmatpush1.msra.mxu0 0.0
      %1067 = vmatprep.subr.mxu0 0.0
      %1068 = vmatpush1.msra.mxu0 0.0
      %1069 = vmatprep.subr.mxu0 0.0
      %1070 = vmatpush1.msra.mxu0 0.0
      %1071 = vmatprep.subr.mxu0 0.0
      %1072 = vmatpush1.msra.mxu0 0.0
      %1073 = vmatprep.subr.mxu0 0.0
      %1074 = vmatpush1.msra.mxu0 0.0
      %1075 = vmatprep.subr.mxu0 0.0
      %1076 = vmatpush1.msra.mxu0 0.0
      %1077 = vmatprep.subr.mxu0 0.0
      %1078 = vmatpush1.msra.mxu0 0.0
      %1079 = vmatprep.subr.mxu0 0.0
      %1080 = vmatpush1.msra.mxu0 0.0
      %1081 = vmatprep.subr.mxu0 0.0
      %1082 = vmatpush1.msra.mxu0 0.0
      %1083 = vmatprep.subr.mxu0 0.0
      %1084 = vmatpush1.msra.mxu0 0.0
      %1085 = vmatprep.subr.mxu0 0.0
      %1086 = vmatpush1.msra.mxu0 0.0
      %1087 = vmatprep.subr.mxu0 0.0
      %1088 = vmatpush1.msra.mxu0 0.0
      %1089 = vmatprep.subr.mxu0 0.0
      %1090 = vmatpush1.msra.mxu0 0.0
      %1091 = vmatprep.subr.mxu0 0.0
      %1092 = vmatpush1.msra.mxu0 0.0
      %1093 = vmatprep.subr.mxu0 0.0
      %1094 = vmatpush1.msra.mxu0 0.0
      %1095 = vmatprep.mubr.f32.mxu0 0.0
      %1096 = vmatmul.mubr.f32.gmra.mrb[0].mxu0 %v1024
      %v1097 = vpop.f32.mrb[0].mxu0
      %v1098 = vadd.f32 0.0, %v1097
      %v1099 = vpop.f32.mrb[0].mxu0
      %1100 = vmatprep.mubr.f32.mxu0 0.0
      %1101 = vmatmul.mubr.f32.gmra.mrb[0].mxu0 %v1027
      %v1102 = vpop.f32.mrb[0].mxu0
      %v1103 = vadd.f32 0.0, %v1102
      %v1104 = vpop.f32.mrb[0].mxu0
      %1105 = vdwg.mxu0
      %v1106 = vadd.f32 %v1016, %v1098
      %v1107 = vadd.f32 %v1017, %v1103
      %s1108 = scalar_lea.vmem %s1, 96
      %v1109 = vld [vmem:[%s1108] sm:$0xff]
      %v1110 = vld [vmem:[%s1108 + $0x8] sm:$0xff]
      %1111 = vrot.lane.b32.xlu0 %v571, 122
      %v1112 = vpop.permute.xlu0 %1111
      %v1114 = vsel %vm580, %v1109, 0
      %v1117 = vsel %vm580, %v1110, 0
      %v1119 = vsel %vm587, %v1112, 0
      %1121 = vmatprep.subr.mxu0 0.0
      %1122 = vmatpush1.msra.mxu0 %v1119
      %1123 = vmatprep.subr.mxu0 0.0
      %1124 = vmatpush1.msra.mxu0 0.0
      %1125 = vmatprep.subr.mxu0 0.0
      %1126 = vmatpush1.msra.mxu0 0.0
      %1127 = vmatprep.subr.mxu0 0.0
      %1128 = vmatpush1.msra.mxu0 0.0
      %1129 = vmatprep.subr.mxu0 0.0
      %1130 = vmatpush1.msra.mxu0 0.0
      %1131 = vmatprep.subr.mxu0 0.0
      %1132 = vmatpush1.msra.mxu0 0.0
      %1133 = vmatprep.subr.mxu0 0.0
      %1134 = vmatpush1.msra.mxu0 0.0
      %1135 = vmatprep.subr.mxu0 0.0
      %1136 = vmatpush1.msra.mxu0 0.0
      %1137 = vmatprep.subr.mxu0 0.0
      %1138 = vmatpush1.msra.mxu0 0.0
      %1139 = vmatprep.subr.mxu0 0.0
      %1140 = vmatpush1.msra.mxu0 0.0
      %1141 = vmatprep.subr.mxu0 0.0
      %1142 = vmatpush1.msra.mxu0 0.0
      %1143 = vmatprep.subr.mxu0 0.0
      %1144 = vmatpush1.msra.mxu0 0.0
      %1145 = vmatprep.subr.mxu0 0.0
      %1146 = vmatpush1.msra.mxu0 0.0
      %1147 = vmatprep.subr.mxu0 0.0
      %1148 = vmatpush1.msra.mxu0 0.0
      %1149 = vmatprep.subr.mxu0 0.0
      %1150 = vmatpush1.msra.mxu0 0.0
      %1151 = vmatprep.subr.mxu0 0.0
      %1152 = vmatpush1.msra.mxu0 0.0
      %1153 = vmatprep.subr.mxu0 0.0
      %1154 = vmatpush1.msra.mxu0 0.0
      %1155 = vmatprep.subr.mxu0 0.0
      %1156 = vmatpush1.msra.mxu0 0.0
      %1157 = vmatprep.subr.mxu0 0.0
      %1158 = vmatpush1.msra.mxu0 0.0
      %1159 = vmatprep.subr.mxu0 0.0
      %1160 = vmatpush1.msra.mxu0 0.0
      %1161 = vmatprep.subr.mxu0 0.0
      %1162 = vmatpush1.msra.mxu0 0.0
      %1163 = vmatprep.subr.mxu0 0.0
      %1164 = vmatpush1.msra.mxu0 0.0
      %1165 = vmatprep.subr.mxu0 0.0
      %1166 = vmatpush1.msra.mxu0 0.0
      %1167 = vmatprep.subr.mxu0 0.0
      %1168 = vmatpush1.msra.mxu0 0.0
      %1169 = vmatprep.subr.mxu0 0.0
      %1170 = vmatpush1.msra.mxu0 0.0
      %1171 = vmatprep.subr.mxu0 0.0
      %1172 = vmatpush1.msra.mxu0 0.0
      %1173 = vmatprep.subr.mxu0 0.0
      %1174 = vmatpush1.msra.mxu0 0.0
      %1175 = vmatprep.subr.mxu0 0.0
      %1176 = vmatpush1.msra.mxu0 0.0
      %1177 = vmatprep.subr.mxu0 0.0
      %1178 = vmatpush1.msra.mxu0 0.0
      %1179 = vmatprep.subr.mxu0 0.0
      %1180 = vmatpush1.msra.mxu0 0.0
      %1181 = vmatprep.subr.mxu0 0.0
      %1182 = vmatpush1.msra.mxu0 0.0
      %1183 = vmatprep.subr.mxu0 0.0
      %1184 = vmatpush1.msra.mxu0 0.0
      %1185 = vmatprep.mubr.f32.mxu0 0.0
      %1186 = vmatmul.mubr.f32.gmra.mrb[0].mxu0 %v1114
      %v1187 = vpop.f32.mrb[0].mxu0
      %v1188 = vadd.f32 0.0, %v1187
      %v1189 = vpop.f32.mrb[0].mxu0
      %1190 = vmatprep.mubr.f32.mxu0 0.0
      %1191 = vmatmul.mubr.f32.gmra.mrb[0].mxu0 %v1117
      %v1192 = vpop.f32.mrb[0].mxu0
      %v1193 = vadd.f32 0.0, %v1192
      %v1194 = vpop.f32.mrb[0].mxu0
      %1195 = vdwg.mxu0
      %v1196 = vadd.f32 %v1106, %v1188
      %v1197 = vadd.f32 %v1107, %v1193
      %s1198 = scalar_lea.vmem %s1, 112
      %v1199 = vld [vmem:[%s1198] sm:$0xff]
      %v1200 = vld [vmem:[%s1198 + $0x8] sm:$0xff]
      %1201 = vrot.lane.b32.xlu0 %v571, 121
      %v1202 = vpop.permute.xlu0 %1201
      %v1204 = vsel %vm580, %v1199, 0
      %v1207 = vsel %vm580, %v1200, 0
      %v1209 = vsel %vm587, %v1202, 0
      %1211 = vmatprep.subr.mxu0 0.0
      %1212 = vmatpush1.msra.mxu0 %v1209
      %1213 = vmatprep.subr.mxu0 0.0
      %1214 = vmatpush1.msra.mxu0 0.0
      %1215 = vmatprep.subr.mxu0 0.0
      %1216 = vmatpush1.msra.mxu0 0.0
      %1217 = vmatprep.subr.mxu0 0.0
      %1218 = vmatpush1.msra.mxu0 0.0
      %1219 = vmatprep.subr.mxu0 0.0
      %1220 = vmatpush1.msra.mxu0 0.0
      %1221 = vmatprep.subr.mxu0 0.0
      %1222 = vmatpush1.msra.mxu0 0.0
      %1223 = vmatprep.subr.mxu0 0.0
      %1224 = vmatpush1.msra.mxu0 0.0
      %1225 = vmatprep.subr.mxu0 0.0
      %1226 = vmatpush1.msra.mxu0 0.0
      %1227 = vmatprep.subr.mxu0 0.0
      %1228 = vmatpush1.msra.mxu0 0.0
      %1229 = vmatprep.subr.mxu0 0.0
      %1230 = vmatpush1.msra.mxu0 0.0
      %1231 = vmatprep.subr.mxu0 0.0
      %1232 = vmatpush1.msra.mxu0 0.0
      %1233 = vmatprep.subr.mxu0 0.0
      %1234 = vmatpush1.msra.mxu0 0.0
      %1235 = vmatprep.subr.mxu0 0.0
      %1236 = vmatpush1.msra.mxu0 0.0
      %1237 = vmatprep.subr.mxu0 0.0
      %1238 = vmatpush1.msra.mxu0 0.0
      %1239 = vmatprep.subr.mxu0 0.0
      %1240 = vmatpush1.msra.mxu0 0.0
      %1241 = vmatprep.subr.mxu0 0.0
      %1242 = vmatpush1.msra.mxu0 0.0
      %1243 = vmatprep.subr.mxu0 0.0
      %1244 = vmatpush1.msra.mxu0 0.0
      %1245 = vmatprep.subr.mxu0 0.0
      %1246 = vmatpush1.msra.mxu0 0.0
      %1247 = vmatprep.subr.mxu0 0.0
      %1248 = vmatpush1.msra.mxu0 0.0
      %1249 = vmatprep.subr.mxu0 0.0
      %1250 = vmatpush1.msra.mxu0 0.0
      %1251 = vmatprep.subr.mxu0 0.0
      %1252 = vmatpush1.msra.mxu0 0.0
      %1253 = vmatprep.subr.mxu0 0.0
      %1254 = vmatpush1.msra.mxu0 0.0
      %1255 = vmatprep.subr.mxu0 0.0
      %1256 = vmatpush1.msra.mxu0 0.0
      %1257 = vmatprep.subr.mxu0 0.0
      %1258 = vmatpush1.msra.mxu0 0.0
      %1259 = vmatprep.subr.mxu0 0.0
      %1260 = vmatpush1.msra.mxu0 0.0
      %1261 = vmatprep.subr.mxu0 0.0
      %1262 = vmatpush1.msra.mxu0 0.0
      %1263 = vmatprep.subr.mxu0 0.0
      %1264 = vmatpush1.msra.mxu0 0.0
      %1265 = vmatprep.subr.mxu0 0.0
      %1266 = vmatpush1.msra.mxu0 0.0
      %1267 = vmatprep.subr.mxu0 0.0
      %1268 = vmatpush1.msra.mxu0 0.0
      %1269 = vmatprep.subr.mxu0 0.0
      %1270 = vmatpush1.msra.mxu0 0.0
      %1271 = vmatprep.subr.mxu0 0.0
      %1272 = vmatpush1.msra.mxu0 0.0
      %1273 = vmatprep.subr.mxu0 0.0
      %1274 = vmatpush1.msra.mxu0 0.0
      %1275 = vmatprep.mubr.f32.mxu0 0.0
      %1276 = vmatmul.mubr.f32.gmra.mrb[0].mxu0 %v1204
      %v1277 = vpop.f32.mrb[0].mxu0
      %v1278 = vadd.f32 0.0, %v1277
      %v1279 = vpop.f32.mrb[0].mxu0
      %1280 = vmatprep.mubr.f32.mxu0 0.0
      %1281 = vmatmul.mubr.f32.gmra.mrb[0].mxu0 %v1207
      %v1282 = vpop.f32.mrb[0].mxu0
      %v1283 = vadd.f32 0.0, %v1282
      %v1284 = vpop.f32.mrb[0].mxu0
      %1285 = vdwg.mxu0
      %v1286 = vadd.f32 %v1196, %v1278
      %v1287 = vadd.f32 %v1197, %v1283
      %v1288 = vld [vmem:[%s2] sm:$0xff]
      %v1289 = vld [vmem:[%s2 + $0x8] sm:$0xff]
      %1291 = vset.pattern.permute.xlu0 0
      %1292 = vperm.xlu0 %1291, %v1288
      %v1293 = vpop.permute.xlu0 %1292
      %1296 = vset.pattern.permute.xlu0 0
      %1297 = vperm.xlu0 %1296, %v1289
      %v1298 = vpop.permute.xlu0 %1297
      %v1300 = vmul.f32 %v1286, %v1293
      %v1301 = vmul.f32 %v1287, %v1298
      %v1302 = vld [vmem:[%s3] sm:$0xff]
      %v1303 = vld [vmem:[%s3 + $0x8] sm:$0xff]
      %1305 = vset.pattern.permute.xlu0 0
      %1306 = vperm.xlu0 %1305, %v1302
      %v1307 = vpop.permute.xlu0 %1306
      %1310 = vset.pattern.permute.xlu0 0
      %1311 = vperm.xlu0 %1310, %v1303
      %v1312 = vpop.permute.xlu0 %1311
      %v1314 = vadd.f32 %v1300, %v1307
      %v1315 = vadd.f32 %v1301, %v1312
      %v1316 = vmax.f32 %v1314, 0.0
      %v1317 = vmax.f32 %v1315, 0.0
      %v1318 = vlaneseq
      %v1319 = vand.u32 %v1318, 127
      %vm1320 = vcmp.ge.s32.totalorder %v1319, 4
      %vm1321 = vcmp.lt.s32.totalorder %v1319, 21
      %vm1322 = vmand %vm1320, %vm1321
      %v1323 = vsel %vm1322, %v1316, 0.0
      %v1324 = vsel %vm1322, %v1317, 0.0
      %v1325 = vld [vmem:[%s4] sm:$0xff]
      %v1326 = vld [vmem:[%s4 + $0x8] sm:$0xff]
      %s1327 = scalar_lea.vmem %s4, 16
      %v1328 = vld [vmem:[%s1327] sm:$0xff]
      %v1329 = vld [vmem:[%s1327 + $0x8] sm:$0xff]
      %1332 = vrot.lane.b32.xlu0 %v1323, 127
      %v1333 = vpop.permute.xlu0 %1332
      %1334 = vrot.lane.b32.xlu0 %v1324, 127
      %v1335 = vpop.permute.xlu0 %1334
      %vm1338 = vcmask 130048
      %v1340 = vsel %vm1338, %v1328, 0
      %v1343 = vsel %vm1338, %v1329, 0
      %1345 = vmatprep.subr.mxu0 0.0
      %1346 = vmatpush1.msra.mxu0 %v1333
      %1347 = vmatprep.subr.mxu0 0.0
      %1348 = vmatpush1.msra.mxu0 %v1335
      %1349 = vmatprep.subr.mxu0 0.0
      %1350 = vmatpush1.msra.mxu0 0.0
      %1351 = vmatprep.subr.mxu0 0.0
      %1352 = vmatpush1.msra.mxu0 0.0
      %1353 = vmatprep.subr.mxu0 0.0
      %1354 = vmatpush1.msra.mxu0 0.0
      %1355 = vmatprep.subr.mxu0 0.0
      %1356 = vmatpush1.msra.mxu0 0.0
      %1357 = vmatprep.subr.mxu0 0.0
      %1358 = vmatpush1.msra.mxu0 0.0
      %1359 = vmatprep.subr.mxu0 0.0
      %1360 = vmatpush1.msra.mxu0 0.0
      %1361 = vmatprep.subr.mxu0 0.0
      %1362 = vmatpush1.msra.mxu0 0.0
      %1363 = vmatprep.subr.mxu0 0.0
      %1364 = vmatpush1.msra.mxu0 0.0
      %1365 = vmatprep.subr.mxu0 0.0
      %1366 = vmatpush1.msra.mxu0 0.0
      %1367 = vmatprep.subr.mxu0 0.0
      %1368 = vmatpush1.msra.mxu0 0.0
      %1369 = vmatprep.subr.mxu0 0.0
      %1370 = vmatpush1.msra.mxu0 0.0
      %1371 = vmatprep.subr.mxu0 0.0
      %1372 = vmatpush1.msra.mxu0 0.0
      %1373 = vmatprep.subr.mxu0 0.0
      %1374 = vmatpush1.msra.mxu0 0.0
      %1375 = vmatprep.subr.mxu0 0.0
      %1376 = vmatpush1.msra.mxu0 0.0
      %1377 = vmatprep.subr.mxu0 0.0
      %1378 = vmatpush1.msra.mxu0 0.0
      %1379 = vmatprep.subr.mxu0 0.0
      %1380 = vmatpush1.msra.mxu0 0.0
      %1381 = vmatprep.subr.mxu0 0.0
      %1382 = vmatpush1.msra.mxu0 0.0
      %1383 = vmatprep.subr.mxu0 0.0
      %1384 = vmatpush1.msra.mxu0 0.0
      %1385 = vmatprep.subr.mxu0 0.0
      %1386 = vmatpush1.msra.mxu0 0.0
      %1387 = vmatprep.subr.mxu0 0.0
      %1388 = vmatpush1.msra.mxu0 0.0
      %1389 = vmatprep.subr.mxu0 0.0
      %1390 = vmatpush1.msra.mxu0 0.0
      %1391 = vmatprep.subr.mxu0 0.0
      %1392 = vmatpush1.msra.mxu0 0.0
      %1393 = vmatprep.subr.mxu0 0.0
      %1394 = vmatpush1.msra.mxu0 0.0
      %1395 = vmatprep.subr.mxu0 0.0
      %1396 = vmatpush1.msra.mxu0 0.0
      %1397 = vmatprep.subr.mxu0 0.0
      %1398 = vmatpush1.msra.mxu0 0.0
      %1399 = vmatprep.subr.mxu0 0.0
      %1400 = vmatpush1.msra.mxu0 0.0
      %1401 = vmatprep.subr.mxu0 0.0
      %1402 = vmatpush1.msra.mxu0 0.0
      %1403 = vmatprep.subr.mxu0 0.0
      %1404 = vmatpush1.msra.mxu0 0.0
      %1405 = vmatprep.subr.mxu0 0.0
      %1406 = vmatpush1.msra.mxu0 0.0
      %1407 = vmatprep.subr.mxu0 0.0
      %1408 = vmatpush1.msra.mxu0 0.0
      %1409 = vmatprep.mubr.f32.mxu0 0.0
      %1410 = vmatmul.mubr.f32.gmra.mrb[0].mxu0 %v1340
      %v1411 = vpop.f32.mrb[0].mxu0
      %v1412 = vadd.f32 0.0, %v1411
      %v1413 = vpop.f32.mrb[0].mxu0
      %1414 = vmatprep.mubr.f32.mxu0 0.0
      %1415 = vmatmul.mubr.f32.gmra.mrb[0].mxu0 %v1343
      %v1416 = vpop.f32.mrb[0].mxu0
      %v1417 = vadd.f32 0.0, %v1416
      %v1418 = vpop.f32.mrb[0].mxu0
      %1419 = vdwg.mxu0
      %v1421 = vsel %vm1338, %v1325, 0
      %v1424 = vsel %vm1338, %v1326, 0
      %1426 = vmatprep.subr.mxu0 0.0
      %1427 = vmatpush1.msra.mxu0 %v1323
      %1428 = vmatprep.subr.mxu0 0.0
      %1429 = vmatpush1.msra.mxu0 %v1324
      %1430 = vmatprep.subr.mxu0 0.0
      %1431 = vmatpush1.msra.mxu0 0.0
      %1432 = vmatprep.subr.mxu0 0.0
      %1433 = vmatpush1.msra.mxu0 0.0
      %1434 = vmatprep.subr.mxu0 0.0
      %1435 = vmatpush1.msra.mxu0 0.0
      %1436 = vmatprep.subr.mxu0 0.0
      %1437 = vmatpush1.msra.mxu0 0.0
      %1438 = vmatprep.subr.mxu0 0.0
      %1439 = vmatpush1.msra.mxu0 0.0
      %1440 = vmatprep.subr.mxu0 0.0
      %1441 = vmatpush1.msra.mxu0 0.0
      %1442 = vmatprep.subr.mxu0 0.0
      %1443 = vmatpush1.msra.mxu0 0.0
      %1444 = vmatprep.subr.mxu0 0.0
      %1445 = vmatpush1.msra.mxu0 0.0
      %1446 = vmatprep.subr.mxu0 0.0
      %1447 = vmatpush1.msra.mxu0 0.0
      %1448 = vmatprep.subr.mxu0 0.0
      %1449 = vmatpush1.msra.mxu0 0.0
      %1450 = vmatprep.subr.mxu0 0.0
      %1451 = vmatpush1.msra.mxu0 0.0
      %1452 = vmatprep.subr.mxu0 0.0
      %1453 = vmatpush1.msra.mxu0 0.0
      %1454 = vmatprep.subr.mxu0 0.0
      %1455 = vmatpush1.msra.mxu0 0.0
      %1456 = vmatprep.subr.mxu0 0.0
      %1457 = vmatpush1.msra.mxu0 0.0
      %1458 = vmatprep.subr.mxu0 0.0
      %1459 = vmatpush1.msra.mxu0 0.0
      %1460 = vmatprep.subr.mxu0 0.0
      %1461 = vmatpush1.msra.mxu0 0.0
      %1462 = vmatprep.subr.mxu0 0.0
      %1463 = vmatpush1.msra.mxu0 0.0
      %1464 = vmatprep.subr.mxu0 0.0
      %1465 = vmatpush1.msra.mxu0 0.0
      %1466 = vmatprep.subr.mxu0 0.0
      %1467 = vmatpush1.msra.mxu0 0.0
      %1468 = vmatprep.subr.mxu0 0.0
      %1469 = vmatpush1.msra.mxu0 0.0
      %1470 = vmatprep.subr.mxu0 0.0
      %1471 = vmatpush1.msra.mxu0 0.0
      %1472 = vmatprep.subr.mxu0 0.0
      %1473 = vmatpush1.msra.mxu0 0.0
      %1474 = vmatprep.subr.mxu0 0.0
      %1475 = vmatpush1.msra.mxu0 0.0
      %1476 = vmatprep.subr.mxu0 0.0
      %1477 = vmatpush1.msra.mxu0 0.0
      %1478 = vmatprep.subr.mxu0 0.0
      %1479 = vmatpush1.msra.mxu0 0.0
      %1480 = vmatprep.subr.mxu0 0.0
      %1481 = vmatpush1.msra.mxu0 0.0
      %1482 = vmatprep.subr.mxu0 0.0
      %1483 = vmatpush1.msra.mxu0 0.0
      %1484 = vmatprep.subr.mxu0 0.0
      %1485 = vmatpush1.msra.mxu0 0.0
      %1486 = vmatprep.subr.mxu0 0.0
      %1487 = vmatpush1.msra.mxu0 0.0
      %1488 = vmatprep.subr.mxu0 0.0
      %1489 = vmatpush1.msra.mxu0 0.0
      %1490 = vmatprep.mubr.f32.mxu0 0.0
      %1491 = vmatmul.mubr.f32.gmra.mrb[0].mxu0 %v1421
      %v1492 = vpop.f32.mrb[0].mxu0
      %v1493 = vadd.f32 %v1412, %v1492
      %v1494 = vpop.f32.mrb[0].mxu0
      %1495 = vmatprep.mubr.f32.mxu0 0.0
      %1496 = vmatmul.mubr.f32.gmra.mrb[0].mxu0 %v1424
      %v1497 = vpop.f32.mrb[0].mxu0
      %v1498 = vadd.f32 %v1417, %v1497
      %v1499 = vpop.f32.mrb[0].mxu0
      %1500 = vdwg.mxu0
      %s1501 = scalar_lea.vmem %s4, 32
      %v1502 = vld [vmem:[%s1501] sm:$0xff]
      %v1503 = vld [vmem:[%s1501 + $0x8] sm:$0xff]
      %1504 = vrot.lane.b32.xlu0 %v1323, 126
      %v1505 = vpop.permute.xlu0 %1504
      %1506 = vrot.lane.b32.xlu0 %v1324, 126
      %v1507 = vpop.permute.xlu0 %1506
      %v1511 = vsel %vm1338, %v1502, 0
      %v1514 = vsel %vm1338, %v1503, 0
      %1516 = vmatprep.subr.mxu0 0.0
      %1517 = vmatpush1.msra.mxu0 %v1505
      %1518 = vmatprep.subr.mxu0 0.0
      %1519 = vmatpush1.msra.mxu0 %v1507
      %1520 = vmatprep.subr.mxu0 0.0
      %1521 = vmatpush1.msra.mxu0 0.0
      %1522 = vmatprep.subr.mxu0 0.0
      %1523 = vmatpush1.msra.mxu0 0.0
      %1524 = vmatprep.subr.mxu0 0.0
      %1525 = vmatpush1.msra.mxu0 0.0
      %1526 = vmatprep.subr.mxu0 0.0
      %1527 = vmatpush1.msra.mxu0 0.0
      %1528 = vmatprep.subr.mxu0 0.0
      %1529 = vmatpush1.msra.mxu0 0.0
      %1530 = vmatprep.subr.mxu0 0.0
      %1531 = vmatpush1.msra.mxu0 0.0
      %1532 = vmatprep.subr.mxu0 0.0
      %1533 = vmatpush1.msra.mxu0 0.0
      %1534 = vmatprep.subr.mxu0 0.0
      %1535 = vmatpush1.msra.mxu0 0.0
      %1536 = vmatprep.subr.mxu0 0.0
      %1537 = vmatpush1.msra.mxu0 0.0
      %1538 = vmatprep.subr.mxu0 0.0
      %1539 = vmatpush1.msra.mxu0 0.0
      %1540 = vmatprep.subr.mxu0 0.0
      %1541 = vmatpush1.msra.mxu0 0.0
      %1542 = vmatprep.subr.mxu0 0.0
      %1543 = vmatpush1.msra.mxu0 0.0
      %1544 = vmatprep.subr.mxu0 0.0
      %1545 = vmatpush1.msra.mxu0 0.0
      %1546 = vmatprep.subr.mxu0 0.0
      %1547 = vmatpush1.msra.mxu0 0.0
      %1548 = vmatprep.subr.mxu0 0.0
      %1549 = vmatpush1.msra.mxu0 0.0
      %1550 = vmatprep.subr.mxu0 0.0
      %1551 = vmatpush1.msra.mxu0 0.0
      %1552 = vmatprep.subr.mxu0 0.0
      %1553 = vmatpush1.msra.mxu0 0.0
      %1554 = vmatprep.subr.mxu0 0.0
      %1555 = vmatpush1.msra.mxu0 0.0
      %1556 = vmatprep.subr.mxu0 0.0
      %1557 = vmatpush1.msra.mxu0 0.0
      %1558 = vmatprep.subr.mxu0 0.0
      %1559 = vmatpush1.msra.mxu0 0.0
      %1560 = vmatprep.subr.mxu0 0.0
      %1561 = vmatpush1.msra.mxu0 0.0
      %1562 = vmatprep.subr.mxu0 0.0
      %1563 = vmatpush1.msra.mxu0 0.0
      %1564 = vmatprep.subr.mxu0 0.0
      %1565 = vmatpush1.msra.mxu0 0.0
      %1566 = vmatprep.subr.mxu0 0.0
      %1567 = vmatpush1.msra.mxu0 0.0
      %1568 = vmatprep.subr.mxu0 0.0
      %1569 = vmatpush1.msra.mxu0 0.0
      %1570 = vmatprep.subr.mxu0 0.0
      %1571 = vmatpush1.msra.mxu0 0.0
      %1572 = vmatprep.subr.mxu0 0.0
      %1573 = vmatpush1.msra.mxu0 0.0
      %1574 = vmatprep.subr.mxu0 0.0
      %1575 = vmatpush1.msra.mxu0 0.0
      %1576 = vmatprep.subr.mxu0 0.0
      %1577 = vmatpush1.msra.mxu0 0.0
      %1578 = vmatprep.subr.mxu0 0.0
      %1579 = vmatpush1.msra.mxu0 0.0
      %1580 = vmatprep.mubr.f32.mxu0 0.0
      %1581 = vmatmul.mubr.f32.gmra.mrb[0].mxu0 %v1511
      %v1582 = vpop.f32.mrb[0].mxu0
      %v1583 = vadd.f32 0.0, %v1582
      %v1584 = vpop.f32.mrb[0].mxu0
      %1585 = vmatprep.mubr.f32.mxu0 0.0
      %1586 = vmatmul.mubr.f32.gmra.mrb[0].mxu0 %v1514
      %v1587 = vpop.f32.mrb[0].mxu0
      %v1588 = vadd.f32 0.0, %v1587
      %v1589 = vpop.f32.mrb[0].mxu0
      %1590 = vdwg.mxu0
      %v1591 = vadd.f32 %v1493, %v1583
      %v1592 = vadd.f32 %v1498, %v1588
      %s1593 = scalar_lea.vmem %s4, 48
      %v1594 = vld [vmem:[%s1593] sm:$0xff]
      %v1595 = vld [vmem:[%s1593 + $0x8] sm:$0xff]
      %1596 = vrot.lane.b32.xlu0 %v1323, 125
      %v1597 = vpop.permute.xlu0 %1596
      %1598 = vrot.lane.b32.xlu0 %v1324, 125
      %v1599 = vpop.permute.xlu0 %1598
      %v1603 = vsel %vm1338, %v1594, 0
      %v1606 = vsel %vm1338, %v1595, 0
      %1608 = vmatprep.subr.mxu0 0.0
      %1609 = vmatpush1.msra.mxu0 %v1597
      %1610 = vmatprep.subr.mxu0 0.0
      %1611 = vmatpush1.msra.mxu0 %v1599
      %1612 = vmatprep.subr.mxu0 0.0
      %1613 = vmatpush1.msra.mxu0 0.0
      %1614 = vmatprep.subr.mxu0 0.0
      %1615 = vmatpush1.msra.mxu0 0.0
      %1616 = vmatprep.subr.mxu0 0.0
      %1617 = vmatpush1.msra.mxu0 0.0
      %1618 = vmatprep.subr.mxu0 0.0
      %1619 = vmatpush1.msra.mxu0 0.0
      %1620 = vmatprep.subr.mxu0 0.0
      %1621 = vmatpush1.msra.mxu0 0.0
      %1622 = vmatprep.subr.mxu0 0.0
      %1623 = vmatpush1.msra.mxu0 0.0
      %1624 = vmatprep.subr.mxu0 0.0
      %1625 = vmatpush1.msra.mxu0 0.0
      %1626 = vmatprep.subr.mxu0 0.0
      %1627 = vmatpush1.msra.mxu0 0.0
      %1628 = vmatprep.subr.mxu0 0.0
      %1629 = vmatpush1.msra.mxu0 0.0
      %1630 = vmatprep.subr.mxu0 0.0
      %1631 = vmatpush1.msra.mxu0 0.0
      %1632 = vmatprep.subr.mxu0 0.0
      %1633 = vmatpush1.msra.mxu0 0.0
      %1634 = vmatprep.subr.mxu0 0.0
      %1635 = vmatpush1.msra.mxu0 0.0
      %1636 = vmatprep.subr.mxu0 0.0
      %1637 = vmatpush1.msra.mxu0 0.0
      %1638 = vmatprep.subr.mxu0 0.0
      %1639 = vmatpush1.msra.mxu0 0.0
      %1640 = vmatprep.subr.mxu0 0.0
      %1641 = vmatpush1.msra.mxu0 0.0
      %1642 = vmatprep.subr.mxu0 0.0
      %1643 = vmatpush1.msra.mxu0 0.0
      %1644 = vmatprep.subr.mxu0 0.0
      %1645 = vmatpush1.msra.mxu0 0.0
      %1646 = vmatprep.subr.mxu0 0.0
      %1647 = vmatpush1.msra.mxu0 0.0
      %1648 = vmatprep.subr.mxu0 0.0
      %1649 = vmatpush1.msra.mxu0 0.0
      %1650 = vmatprep.subr.mxu0 0.0
      %1651 = vmatpush1.msra.mxu0 0.0
      %1652 = vmatprep.subr.mxu0 0.0
      %1653 = vmatpush1.msra.mxu0 0.0
      %1654 = vmatprep.subr.mxu0 0.0
      %1655 = vmatpush1.msra.mxu0 0.0
      %1656 = vmatprep.subr.mxu0 0.0
      %1657 = vmatpush1.msra.mxu0 0.0
      %1658 = vmatprep.subr.mxu0 0.0
      %1659 = vmatpush1.msra.mxu0 0.0
      %1660 = vmatprep.subr.mxu0 0.0
      %1661 = vmatpush1.msra.mxu0 0.0
      %1662 = vmatprep.subr.mxu0 0.0
      %1663 = vmatpush1.msra.mxu0 0.0
      %1664 = vmatprep.subr.mxu0 0.0
      %1665 = vmatpush1.msra.mxu0 0.0
      %1666 = vmatprep.subr.mxu0 0.0
      %1667 = vmatpush1.msra.mxu0 0.0
      %1668 = vmatprep.subr.mxu0 0.0
      %1669 = vmatpush1.msra.mxu0 0.0
      %1670 = vmatprep.subr.mxu0 0.0
      %1671 = vmatpush1.msra.mxu0 0.0
      %1672 = vmatprep.mubr.f32.mxu0 0.0
      %1673 = vmatmul.mubr.f32.gmra.mrb[0].mxu0 %v1603
      %v1674 = vpop.f32.mrb[0].mxu0
      %v1675 = vadd.f32 0.0, %v1674
      %v1676 = vpop.f32.mrb[0].mxu0
      %1677 = vmatprep.mubr.f32.mxu0 0.0
      %1678 = vmatmul.mubr.f32.gmra.mrb[0].mxu0 %v1606
      %v1679 = vpop.f32.mrb[0].mxu0
      %v1680 = vadd.f32 0.0, %v1679
      %v1681 = vpop.f32.mrb[0].mxu0
      %1682 = vdwg.mxu0
      %v1683 = vadd.f32 %v1591, %v1675
      %v1684 = vadd.f32 %v1592, %v1680
      %s1685 = scalar_lea.vmem %s4, 64
      %v1686 = vld [vmem:[%s1685] sm:$0xff]
      %v1687 = vld [vmem:[%s1685 + $0x8] sm:$0xff]
      %1688 = vrot.lane.b32.xlu0 %v1323, 124
      %v1689 = vpop.permute.xlu0 %1688
      %1690 = vrot.lane.b32.xlu0 %v1324, 124
      %v1691 = vpop.permute.xlu0 %1690
      %v1695 = vsel %vm1338, %v1686, 0
      %v1698 = vsel %vm1338, %v1687, 0
      %1700 = vmatprep.subr.mxu0 0.0
      %1701 = vmatpush1.msra.mxu0 %v1689
      %1702 = vmatprep.subr.mxu0 0.0
      %1703 = vmatpush1.msra.mxu0 %v1691
      %1704 = vmatprep.subr.mxu0 0.0
      %1705 = vmatpush1.msra.mxu0 0.0
      %1706 = vmatprep.subr.mxu0 0.0
      %1707 = vmatpush1.msra.mxu0 0.0
      %1708 = vmatprep.subr.mxu0 0.0
      %1709 = vmatpush1.msra.mxu0 0.0
      %1710 = vmatprep.subr.mxu0 0.0
      %1711 = vmatpush1.msra.mxu0 0.0
      %1712 = vmatprep.subr.mxu0 0.0
      %1713 = vmatpush1.msra.mxu0 0.0
      %1714 = vmatprep.subr.mxu0 0.0
      %1715 = vmatpush1.msra.mxu0 0.0
      %1716 = vmatprep.subr.mxu0 0.0
      %1717 = vmatpush1.msra.mxu0 0.0
      %1718 = vmatprep.subr.mxu0 0.0
      %1719 = vmatpush1.msra.mxu0 0.0
      %1720 = vmatprep.subr.mxu0 0.0
      %1721 = vmatpush1.msra.mxu0 0.0
      %1722 = vmatprep.subr.mxu0 0.0
      %1723 = vmatpush1.msra.mxu0 0.0
      %1724 = vmatprep.subr.mxu0 0.0
      %1725 = vmatpush1.msra.mxu0 0.0
      %1726 = vmatprep.subr.mxu0 0.0
      %1727 = vmatpush1.msra.mxu0 0.0
      %1728 = vmatprep.subr.mxu0 0.0
      %1729 = vmatpush1.msra.mxu0 0.0
      %1730 = vmatprep.subr.mxu0 0.0
      %1731 = vmatpush1.msra.mxu0 0.0
      %1732 = vmatprep.subr.mxu0 0.0
      %1733 = vmatpush1.msra.mxu0 0.0
      %1734 = vmatprep.subr.mxu0 0.0
      %1735 = vmatpush1.msra.mxu0 0.0
      %1736 = vmatprep.subr.mxu0 0.0
      %1737 = vmatpush1.msra.mxu0 0.0
      %1738 = vmatprep.subr.mxu0 0.0
      %1739 = vmatpush1.msra.mxu0 0.0
      %1740 = vmatprep.subr.mxu0 0.0
      %1741 = vmatpush1.msra.mxu0 0.0
      %1742 = vmatprep.subr.mxu0 0.0
      %1743 = vmatpush1.msra.mxu0 0.0
      %1744 = vmatprep.subr.mxu0 0.0
      %1745 = vmatpush1.msra.mxu0 0.0
      %1746 = vmatprep.subr.mxu0 0.0
      %1747 = vmatpush1.msra.mxu0 0.0
      %1748 = vmatprep.subr.mxu0 0.0
      %1749 = vmatpush1.msra.mxu0 0.0
      %1750 = vmatprep.subr.mxu0 0.0
      %1751 = vmatpush1.msra.mxu0 0.0
      %1752 = vmatprep.subr.mxu0 0.0
      %1753 = vmatpush1.msra.mxu0 0.0
      %1754 = vmatprep.subr.mxu0 0.0
      %1755 = vmatpush1.msra.mxu0 0.0
      %1756 = vmatprep.subr.mxu0 0.0
      %1757 = vmatpush1.msra.mxu0 0.0
      %1758 = vmatprep.subr.mxu0 0.0
      %1759 = vmatpush1.msra.mxu0 0.0
      %1760 = vmatprep.subr.mxu0 0.0
      %1761 = vmatpush1.msra.mxu0 0.0
      %1762 = vmatprep.subr.mxu0 0.0
      %1763 = vmatpush1.msra.mxu0 0.0
      %1764 = vmatprep.mubr.f32.mxu0 0.0
      %1765 = vmatmul.mubr.f32.gmra.mrb[0].mxu0 %v1695
      %v1766 = vpop.f32.mrb[0].mxu0
      %v1767 = vadd.f32 0.0, %v1766
      %v1768 = vpop.f32.mrb[0].mxu0
      %1769 = vmatprep.mubr.f32.mxu0 0.0
      %1770 = vmatmul.mubr.f32.gmra.mrb[0].mxu0 %v1698
      %v1771 = vpop.f32.mrb[0].mxu0
      %v1772 = vadd.f32 0.0, %v1771
      %v1773 = vpop.f32.mrb[0].mxu0
      %1774 = vdwg.mxu0
      %v1775 = vadd.f32 %v1683, %v1767
      %v1776 = vadd.f32 %v1684, %v1772
      %s1777 = scalar_lea.vmem %s4, 80
      %v1778 = vld [vmem:[%s1777] sm:$0xff]
      %v1779 = vld [vmem:[%s1777 + $0x8] sm:$0xff]
      %1780 = vrot.lane.b32.xlu0 %v1323, 123
      %v1781 = vpop.permute.xlu0 %1780
      %1782 = vrot.lane.b32.xlu0 %v1324, 123
      %v1783 = vpop.permute.xlu0 %1782
      %v1787 = vsel %vm1338, %v1778, 0
      %v1790 = vsel %vm1338, %v1779, 0
      %1792 = vmatprep.subr.mxu0 0.0
      %1793 = vmatpush1.msra.mxu0 %v1781
      %1794 = vmatprep.subr.mxu0 0.0
      %1795 = vmatpush1.msra.mxu0 %v1783
      %1796 = vmatprep.subr.mxu0 0.0
      %1797 = vmatpush1.msra.mxu0 0.0
      %1798 = vmatprep.subr.mxu0 0.0
      %1799 = vmatpush1.msra.mxu0 0.0
      %1800 = vmatprep.subr.mxu0 0.0
      %1801 = vmatpush1.msra.mxu0 0.0
      %1802 = vmatprep.subr.mxu0 0.0
      %1803 = vmatpush1.msra.mxu0 0.0
      %1804 = vmatprep.subr.mxu0 0.0
      %1805 = vmatpush1.msra.mxu0 0.0
      %1806 = vmatprep.subr.mxu0 0.0
      %1807 = vmatpush1.msra.mxu0 0.0
      %1808 = vmatprep.subr.mxu0 0.0
      %1809 = vmatpush1.msra.mxu0 0.0
      %1810 = vmatprep.subr.mxu0 0.0
      %1811 = vmatpush1.msra.mxu0 0.0
      %1812 = vmatprep.subr.mxu0 0.0
      %1813 = vmatpush1.msra.mxu0 0.0
      %1814 = vmatprep.subr.mxu0 0.0
      %1815 = vmatpush1.msra.mxu0 0.0
      %1816 = vmatprep.subr.mxu0 0.0
      %1817 = vmatpush1.msra.mxu0 0.0
      %1818 = vmatprep.subr.mxu0 0.0
      %1819 = vmatpush1.msra.mxu0 0.0
      %1820 = vmatprep.subr.mxu0 0.0
      %1821 = vmatpush1.msra.mxu0 0.0
      %1822 = vmatprep.subr.mxu0 0.0
      %1823 = vmatpush1.msra.mxu0 0.0
      %1824 = vmatprep.subr.mxu0 0.0
      %1825 = vmatpush1.msra.mxu0 0.0
      %1826 = vmatprep.subr.mxu0 0.0
      %1827 = vmatpush1.msra.mxu0 0.0
      %1828 = vmatprep.subr.mxu0 0.0
      %1829 = vmatpush1.msra.mxu0 0.0
      %1830 = vmatprep.subr.mxu0 0.0
      %1831 = vmatpush1.msra.mxu0 0.0
      %1832 = vmatprep.subr.mxu0 0.0
      %1833 = vmatpush1.msra.mxu0 0.0
      %1834 = vmatprep.subr.mxu0 0.0
      %1835 = vmatpush1.msra.mxu0 0.0
      %1836 = vmatprep.subr.mxu0 0.0
      %1837 = vmatpush1.msra.mxu0 0.0
      %1838 = vmatprep.subr.mxu0 0.0
      %1839 = vmatpush1.msra.mxu0 0.0
      %1840 = vmatprep.subr.mxu0 0.0
      %1841 = vmatpush1.msra.mxu0 0.0
      %1842 = vmatprep.subr.mxu0 0.0
      %1843 = vmatpush1.msra.mxu0 0.0
      %1844 = vmatprep.subr.mxu0 0.0
      %1845 = vmatpush1.msra.mxu0 0.0
      %1846 = vmatprep.subr.mxu0 0.0
      %1847 = vmatpush1.msra.mxu0 0.0
      %1848 = vmatprep.subr.mxu0 0.0
      %1849 = vmatpush1.msra.mxu0 0.0
      %1850 = vmatprep.subr.mxu0 0.0
      %1851 = vmatpush1.msra.mxu0 0.0
      %1852 = vmatprep.subr.mxu0 0.0
      %1853 = vmatpush1.msra.mxu0 0.0
      %1854 = vmatprep.subr.mxu0 0.0
      %1855 = vmatpush1.msra.mxu0 0.0
      %1856 = vmatprep.mubr.f32.mxu0 0.0
      %1857 = vmatmul.mubr.f32.gmra.mrb[0].mxu0 %v1787
      %v1858 = vpop.f32.mrb[0].mxu0
      %v1859 = vadd.f32 0.0, %v1858
      %v1860 = vpop.f32.mrb[0].mxu0
      %1861 = vmatprep.mubr.f32.mxu0 0.0
      %1862 = vmatmul.mubr.f32.gmra.mrb[0].mxu0 %v1790
      %v1863 = vpop.f32.mrb[0].mxu0
      %v1864 = vadd.f32 0.0, %v1863
      %v1865 = vpop.f32.mrb[0].mxu0
      %1866 = vdwg.mxu0
      %v1867 = vadd.f32 %v1775, %v1859
      %v1868 = vadd.f32 %v1776, %v1864
      %s1869 = scalar_lea.vmem %s4, 96
      %v1870 = vld [vmem:[%s1869] sm:$0xff]
      %v1871 = vld [vmem:[%s1869 + $0x8] sm:$0xff]
      %1872 = vrot.lane.b32.xlu0 %v1323, 122
      %v1873 = vpop.permute.xlu0 %1872
      %1874 = vrot.lane.b32.xlu0 %v1324, 122
      %v1875 = vpop.permute.xlu0 %1874
      %v1879 = vsel %vm1338, %v1870, 0
      %v1882 = vsel %vm1338, %v1871, 0
      %1884 = vmatprep.subr.mxu0 0.0
      %1885 = vmatpush1.msra.mxu0 %v1873
      %1886 = vmatprep.subr.mxu0 0.0
      %1887 = vmatpush1.msra.mxu0 %v1875
      %1888 = vmatprep.subr.mxu0 0.0
      %1889 = vmatpush1.msra.mxu0 0.0
      %1890 = vmatprep.subr.mxu0 0.0
      %1891 = vmatpush1.msra.mxu0 0.0
      %1892 = vmatprep.subr.mxu0 0.0
      %1893 = vmatpush1.msra.mxu0 0.0
      %1894 = vmatprep.subr.mxu0 0.0
      %1895 = vmatpush1.msra.mxu0 0.0
      %1896 = vmatprep.subr.mxu0 0.0
      %1897 = vmatpush1.msra.mxu0 0.0
      %1898 = vmatprep.subr.mxu0 0.0
      %1899 = vmatpush1.msra.mxu0 0.0
      %1900 = vmatprep.subr.mxu0 0.0
      %1901 = vmatpush1.msra.mxu0 0.0
      %1902 = vmatprep.subr.mxu0 0.0
      %1903 = vmatpush1.msra.mxu0 0.0
      %1904 = vmatprep.subr.mxu0 0.0
      %1905 = vmatpush1.msra.mxu0 0.0
      %1906 = vmatprep.subr.mxu0 0.0
      %1907 = vmatpush1.msra.mxu0 0.0
      %1908 = vmatprep.subr.mxu0 0.0
      %1909 = vmatpush1.msra.mxu0 0.0
      %1910 = vmatprep.subr.mxu0 0.0
      %1911 = vmatpush1.msra.mxu0 0.0
      %1912 = vmatprep.subr.mxu0 0.0
      %1913 = vmatpush1.msra.mxu0 0.0
      %1914 = vmatprep.subr.mxu0 0.0
      %1915 = vmatpush1.msra.mxu0 0.0
      %1916 = vmatprep.subr.mxu0 0.0
      %1917 = vmatpush1.msra.mxu0 0.0
      %1918 = vmatprep.subr.mxu0 0.0
      %1919 = vmatpush1.msra.mxu0 0.0
      %1920 = vmatprep.subr.mxu0 0.0
      %1921 = vmatpush1.msra.mxu0 0.0
      %1922 = vmatprep.subr.mxu0 0.0
      %1923 = vmatpush1.msra.mxu0 0.0
      %1924 = vmatprep.subr.mxu0 0.0
      %1925 = vmatpush1.msra.mxu0 0.0
      %1926 = vmatprep.subr.mxu0 0.0
      %1927 = vmatpush1.msra.mxu0 0.0
      %1928 = vmatprep.subr.mxu0 0.0
      %1929 = vmatpush1.msra.mxu0 0.0
      %1930 = vmatprep.subr.mxu0 0.0
      %1931 = vmatpush1.msra.mxu0 0.0
      %1932 = vmatprep.subr.mxu0 0.0
      %1933 = vmatpush1.msra.mxu0 0.0
      %1934 = vmatprep.subr.mxu0 0.0
      %1935 = vmatpush1.msra.mxu0 0.0
      %1936 = vmatprep.subr.mxu0 0.0
      %1937 = vmatpush1.msra.mxu0 0.0
      %1938 = vmatprep.subr.mxu0 0.0
      %1939 = vmatpush1.msra.mxu0 0.0
      %1940 = vmatprep.subr.mxu0 0.0
      %1941 = vmatpush1.msra.mxu0 0.0
      %1942 = vmatprep.subr.mxu0 0.0
      %1943 = vmatpush1.msra.mxu0 0.0
      %1944 = vmatprep.subr.mxu0 0.0
      %1945 = vmatpush1.msra.mxu0 0.0
      %1946 = vmatprep.subr.mxu0 0.0
      %1947 = vmatpush1.msra.mxu0 0.0
      %1948 = vmatprep.mubr.f32.mxu0 0.0
      %1949 = vmatmul.mubr.f32.gmra.mrb[0].mxu0 %v1879
      %v1950 = vpop.f32.mrb[0].mxu0
      %v1951 = vadd.f32 0.0, %v1950
      %v1952 = vpop.f32.mrb[0].mxu0
      %1953 = vmatprep.mubr.f32.mxu0 0.0
      %1954 = vmatmul.mubr.f32.gmra.mrb[0].mxu0 %v1882
      %v1955 = vpop.f32.mrb[0].mxu0
      %v1956 = vadd.f32 0.0, %v1955
      %v1957 = vpop.f32.mrb[0].mxu0
      %1958 = vdwg.mxu0
      %v1959 = vadd.f32 %v1867, %v1951
      %v1960 = vadd.f32 %v1868, %v1956
      %s1961 = scalar_lea.vmem %s4, 112
      %v1962 = vld [vmem:[%s1961] sm:$0xff]
      %v1963 = vld [vmem:[%s1961 + $0x8] sm:$0xff]
      %1964 = vrot.lane.b32.xlu0 %v1323, 121
      %v1965 = vpop.permute.xlu0 %1964
      %1966 = vrot.lane.b32.xlu0 %v1324, 121
      %v1967 = vpop.permute.xlu0 %1966
      %v1971 = vsel %vm1338, %v1962, 0
      %v1974 = vsel %vm1338, %v1963, 0
      %1976 = vmatprep.subr.mxu0 0.0
      %1977 = vmatpush1.msra.mxu0 %v1965
      %1978 = vmatprep.subr.mxu0 0.0
      %1979 = vmatpush1.msra.mxu0 %v1967
      %1980 = vmatprep.subr.mxu0 0.0
      %1981 = vmatpush1.msra.mxu0 0.0
      %1982 = vmatprep.subr.mxu0 0.0
      %1983 = vmatpush1.msra.mxu0 0.0
      %1984 = vmatprep.subr.mxu0 0.0
      %1985 = vmatpush1.msra.mxu0 0.0
      %1986 = vmatprep.subr.mxu0 0.0
      %1987 = vmatpush1.msra.mxu0 0.0
      %1988 = vmatprep.subr.mxu0 0.0
      %1989 = vmatpush1.msra.mxu0 0.0
      %1990 = vmatprep.subr.mxu0 0.0
      %1991 = vmatpush1.msra.mxu0 0.0
      %1992 = vmatprep.subr.mxu0 0.0
      %1993 = vmatpush1.msra.mxu0 0.0
      %1994 = vmatprep.subr.mxu0 0.0
      %1995 = vmatpush1.msra.mxu0 0.0
      %1996 = vmatprep.subr.mxu0 0.0
      %1997 = vmatpush1.msra.mxu0 0.0
      %1998 = vmatprep.subr.mxu0 0.0
      %1999 = vmatpush1.msra.mxu0 0.0
      %2000 = vmatprep.subr.mxu0 0.0
      %2001 = vmatpush1.msra.mxu0 0.0
      %2002 = vmatprep.subr.mxu0 0.0
      %2003 = vmatpush1.msra.mxu0 0.0
      %2004 = vmatprep.subr.mxu0 0.0
      %2005 = vmatpush1.msra.mxu0 0.0
      %2006 = vmatprep.subr.mxu0 0.0
      %2007 = vmatpush1.msra.mxu0 0.0
      %2008 = vmatprep.subr.mxu0 0.0
      %2009 = vmatpush1.msra.mxu0 0.0
      %2010 = vmatprep.subr.mxu0 0.0
      %2011 = vmatpush1.msra.mxu0 0.0
      %2012 = vmatprep.subr.mxu0 0.0
      %2013 = vmatpush1.msra.mxu0 0.0
      %2014 = vmatprep.subr.mxu0 0.0
      %2015 = vmatpush1.msra.mxu0 0.0
      %2016 = vmatprep.subr.mxu0 0.0
      %2017 = vmatpush1.msra.mxu0 0.0
      %2018 = vmatprep.subr.mxu0 0.0
      %2019 = vmatpush1.msra.mxu0 0.0
      %2020 = vmatprep.subr.mxu0 0.0
      %2021 = vmatpush1.msra.mxu0 0.0
      %2022 = vmatprep.subr.mxu0 0.0
      %2023 = vmatpush1.msra.mxu0 0.0
      %2024 = vmatprep.subr.mxu0 0.0
      %2025 = vmatpush1.msra.mxu0 0.0
      %2026 = vmatprep.subr.mxu0 0.0
      %2027 = vmatpush1.msra.mxu0 0.0
      %2028 = vmatprep.subr.mxu0 0.0
      %2029 = vmatpush1.msra.mxu0 0.0
      %2030 = vmatprep.subr.mxu0 0.0
      %2031 = vmatpush1.msra.mxu0 0.0
      %2032 = vmatprep.subr.mxu0 0.0
      %2033 = vmatpush1.msra.mxu0 0.0
      %2034 = vmatprep.subr.mxu0 0.0
      %2035 = vmatpush1.msra.mxu0 0.0
      %2036 = vmatprep.subr.mxu0 0.0
      %2037 = vmatpush1.msra.mxu0 0.0
      %2038 = vmatprep.subr.mxu0 0.0
      %2039 = vmatpush1.msra.mxu0 0.0
      %2040 = vmatprep.mubr.f32.mxu0 0.0
      %2041 = vmatmul.mubr.f32.gmra.mrb[0].mxu0 %v1971
      %v2042 = vpop.f32.mrb[0].mxu0
      %v2043 = vadd.f32 0.0, %v2042
      %v2044 = vpop.f32.mrb[0].mxu0
      %2045 = vmatprep.mubr.f32.mxu0 0.0
      %2046 = vmatmul.mubr.f32.gmra.mrb[0].mxu0 %v1974
      %v2047 = vpop.f32.mrb[0].mxu0
      %v2048 = vadd.f32 0.0, %v2047
      %v2049 = vpop.f32.mrb[0].mxu0
      %2050 = vdwg.mxu0
      %v2051 = vadd.f32 %v1959, %v2043
      %v2052 = vadd.f32 %v1960, %v2048
      %v2053 = vld [vmem:[%s5] sm:$0xff]
      %v2054 = vld [vmem:[%s5 + $0x8] sm:$0xff]
      %2056 = vset.pattern.permute.xlu0 0
      %2057 = vperm.xlu0 %2056, %v2053
      %v2058 = vpop.permute.xlu0 %2057
      %2061 = vset.pattern.permute.xlu0 0
      %2062 = vperm.xlu0 %2061, %v2054
      %v2063 = vpop.permute.xlu0 %2062
      %v2065 = vmul.f32 %v2051, %v2058
      %v2066 = vmul.f32 %v2052, %v2063
      %v2067 = vld [vmem:[%s6] sm:$0xff]
      %v2068 = vld [vmem:[%s6 + $0x8] sm:$0xff]
      %2070 = vset.pattern.permute.xlu0 0
      %2071 = vperm.xlu0 %2070, %v2067
      %v2072 = vpop.permute.xlu0 %2071
      %2075 = vset.pattern.permute.xlu0 0
      %2076 = vperm.xlu0 %2075, %v2068
      %v2077 = vpop.permute.xlu0 %2076
      %v2079 = vadd.f32 %v2065, %v2072
      %v2080 = vadd.f32 %v2066, %v2077
      %v2081 = vlaneseq
      %v2082 = vshrl.u32 %v2081, 7
      %v2083 = vadd.s32 %v2082, 8
      %v2084 = vadd.s32 %v2082, 16
      %v2085 = vsub.s32 %v1319, 8
      %vm2086 = vcmp.ge.s32.totalorder %v2085, 0
      %vm2087 = vcmp.lt.s32.totalorder %v2085, 9
      %vm2088 = vmand %vm2086, %vm2087
      %v2089 = vmul.u32 %v2085, 2
      %vm2090 = vcmp.eq.s32.totalorder %v2082, %v2089
      %vm2091 = vcmp.eq.s32.totalorder %v2083, %v2089
      %vm2092 = vcmp.eq.s32.totalorder %v2084, %v2089
      %vm2093 = vmand %vm2088, %vm2090
      %vm2094 = vmand %vm2088, %vm2091
      %vm2095 = vmand %vm2088, %vm2092
      %v2096 = vsel %vm2093, 1.0, 0.0
      %v2097 = vsel %vm2094, 1.0, 0.0
      %v2098 = vsel %vm2095, 1.0, 0.0
      %v2099 = vadd.s32 %v2089, 1
      %vm2100 = vcmp.eq.s32.totalorder %v2082, %v2099
      %vm2101 = vcmp.eq.s32.totalorder %v2083, %v2099
      %vm2102 = vcmp.eq.s32.totalorder %v2084, %v2099
      %vm2103 = vmand %vm2088, %vm2100
      %vm2104 = vmand %vm2088, %vm2101
      %vm2105 = vmand %vm2088, %vm2102
      %v2106 = vsel %vm2103, 1.0, 0.0
      %v2107 = vsel %vm2104, 1.0, 0.0
      %v2108 = vsel %vm2105, 1.0, 0.0
      %vm2109 = vcmask 146432
      %v2111 = vsel %vm2109, %v2079, 0
      %v2114 = vsel %vm2109, %v2080, 0
      %vm2116 = vcmask 1041408
      %v2118 = vsel %vm2116, %v2098, 0
      %2120 = vmatprep.subr.mxu0 0.0
      %2121 = vmatpush1.msra.mxu0 %v2096
      %2122 = vmatprep.subr.mxu0 0.0
      %2123 = vmatpush1.msra.mxu0 %v2097
      %2124 = vmatprep.subr.mxu0 0.0
      %2125 = vmatpush1.msra.mxu0 %v2118
      %2126 = vmatprep.subr.mxu0 0.0
      %2127 = vmatpush1.msra.mxu0 0.0
      %2128 = vmatprep.subr.mxu0 0.0
      %2129 = vmatpush1.msra.mxu0 0.0
      %2130 = vmatprep.subr.mxu0 0.0
      %2131 = vmatpush1.msra.mxu0 0.0
      %2132 = vmatprep.subr.mxu0 0.0
      %2133 = vmatpush1.msra.mxu0 0.0
      %2134 = vmatprep.subr.mxu0 0.0
      %2135 = vmatpush1.msra.mxu0 0.0
      %2136 = vmatprep.subr.mxu0 0.0
      %2137 = vmatpush1.msra.mxu0 0.0
      %2138 = vmatprep.subr.mxu0 0.0
      %2139 = vmatpush1.msra.mxu0 0.0
      %2140 = vmatprep.subr.mxu0 0.0
      %2141 = vmatpush1.msra.mxu0 0.0
      %2142 = vmatprep.subr.mxu0 0.0
      %2143 = vmatpush1.msra.mxu0 0.0
      %2144 = vmatprep.subr.mxu0 0.0
      %2145 = vmatpush1.msra.mxu0 0.0
      %2146 = vmatprep.subr.mxu0 0.0
      %2147 = vmatpush1.msra.mxu0 0.0
      %2148 = vmatprep.subr.mxu0 0.0
      %2149 = vmatpush1.msra.mxu0 0.0
      %2150 = vmatprep.subr.mxu0 0.0
      %2151 = vmatpush1.msra.mxu0 0.0
      %2152 = vmatprep.subr.mxu0 0.0
      %2153 = vmatpush1.msra.mxu0 0.0
      %2154 = vmatprep.subr.mxu0 0.0
      %2155 = vmatpush1.msra.mxu0 0.0
      %2156 = vmatprep.subr.mxu0 0.0
      %2157 = vmatpush1.msra.mxu0 0.0
      %2158 = vmatprep.subr.mxu0 0.0
      %2159 = vmatpush1.msra.mxu0 0.0
      %2160 = vmatprep.subr.mxu0 0.0
      %2161 = vmatpush1.msra.mxu0 0.0
      %2162 = vmatprep.subr.mxu0 0.0
      %2163 = vmatpush1.msra.mxu0 0.0
      %2164 = vmatprep.subr.mxu0 0.0
      %2165 = vmatpush1.msra.mxu0 0.0
      %2166 = vmatprep.subr.mxu0 0.0
      %2167 = vmatpush1.msra.mxu0 0.0
      %2168 = vmatprep.subr.mxu0 0.0
      %2169 = vmatpush1.msra.mxu0 0.0
      %2170 = vmatprep.subr.mxu0 0.0
      %2171 = vmatpush1.msra.mxu0 0.0
      %2172 = vmatprep.subr.mxu0 0.0
      %2173 = vmatpush1.msra.mxu0 0.0
      %2174 = vmatprep.subr.mxu0 0.0
      %2175 = vmatpush1.msra.mxu0 0.0
      %2176 = vmatprep.subr.mxu0 0.0
      %2177 = vmatpush1.msra.mxu0 0.0
      %2178 = vmatprep.subr.mxu0 0.0
      %2179 = vmatpush1.msra.mxu0 0.0
      %2180 = vmatprep.subr.mxu0 0.0
      %2181 = vmatpush1.msra.mxu0 0.0
      %2182 = vmatprep.subr.mxu0 0.0
      %2183 = vmatpush1.msra.mxu0 0.0
      %2184 = vmatprep.mubr.f32.mxu0 0.0
      %2185 = vmatmul.mubr.f32.gmra.mrb[0].mxu0 %v2111
      %v2186 = vpop.f32.mrb[0].mxu0
      %v2187 = vadd.f32 0.0, %v2186
      %v2188 = vpop.f32.mrb[0].mxu0
      %2189 = vmatprep.mubr.f32.mxu0 0.0
      %2190 = vmatmul.mubr.f32.gmra.mrb[0].mxu0 %v2114
      %v2191 = vpop.f32.mrb[0].mxu0
      %v2192 = vadd.f32 0.0, %v2191
      %v2193 = vpop.f32.mrb[0].mxu0
      %2194 = vdwg.mxu0
      %v2196 = vsel %vm2116, %v2108, 0
      %2198 = vmatprep.subr.mxu0 0.0
      %2199 = vmatpush1.msra.mxu0 %v2106
      %2200 = vmatprep.subr.mxu0 0.0
      %2201 = vmatpush1.msra.mxu0 %v2107
      %2202 = vmatprep.subr.mxu0 0.0
      %2203 = vmatpush1.msra.mxu0 %v2196
      %2204 = vmatprep.subr.mxu0 0.0
      %2205 = vmatpush1.msra.mxu0 0.0
      %2206 = vmatprep.subr.mxu0 0.0
      %2207 = vmatpush1.msra.mxu0 0.0
      %2208 = vmatprep.subr.mxu0 0.0
      %2209 = vmatpush1.msra.mxu0 0.0
      %2210 = vmatprep.subr.mxu0 0.0
      %2211 = vmatpush1.msra.mxu0 0.0
      %2212 = vmatprep.subr.mxu0 0.0
      %2213 = vmatpush1.msra.mxu0 0.0
      %2214 = vmatprep.subr.mxu0 0.0
      %2215 = vmatpush1.msra.mxu0 0.0
      %2216 = vmatprep.subr.mxu0 0.0
      %2217 = vmatpush1.msra.mxu0 0.0
      %2218 = vmatprep.subr.mxu0 0.0
      %2219 = vmatpush1.msra.mxu0 0.0
      %2220 = vmatprep.subr.mxu0 0.0
      %2221 = vmatpush1.msra.mxu0 0.0
      %2222 = vmatprep.subr.mxu0 0.0
      %2223 = vmatpush1.msra.mxu0 0.0
      %2224 = vmatprep.subr.mxu0 0.0
      %2225 = vmatpush1.msra.mxu0 0.0
      %2226 = vmatprep.subr.mxu0 0.0
      %2227 = vmatpush1.msra.mxu0 0.0
      %2228 = vmatprep.subr.mxu0 0.0
      %2229 = vmatpush1.msra.mxu0 0.0
      %2230 = vmatprep.subr.mxu0 0.0
      %2231 = vmatpush1.msra.mxu0 0.0
      %2232 = vmatprep.subr.mxu0 0.0
      %2233 = vmatpush1.msra.mxu0 0.0
      %2234 = vmatprep.subr.mxu0 0.0
      %2235 = vmatpush1.msra.mxu0 0.0
      %2236 = vmatprep.subr.mxu0 0.0
      %2237 = vmatpush1.msra.mxu0 0.0
      %2238 = vmatprep.subr.mxu0 0.0
      %2239 = vmatpush1.msra.mxu0 0.0
      %2240 = vmatprep.subr.mxu0 0.0
      %2241 = vmatpush1.msra.mxu0 0.0
      %2242 = vmatprep.subr.mxu0 0.0
      %2243 = vmatpush1.msra.mxu0 0.0
      %2244 = vmatprep.subr.mxu0 0.0
      %2245 = vmatpush1.msra.mxu0 0.0
      %2246 = vmatprep.subr.mxu0 0.0
      %2247 = vmatpush1.msra.mxu0 0.0
      %2248 = vmatprep.subr.mxu0 0.0
      %2249 = vmatpush1.msra.mxu0 0.0
      %2250 = vmatprep.subr.mxu0 0.0
      %2251 = vmatpush1.msra.mxu0 0.0
      %2252 = vmatprep.subr.mxu0 0.0
      %2253 = vmatpush1.msra.mxu0 0.0
      %2254 = vmatprep.subr.mxu0 0.0
      %2255 = vmatpush1.msra.mxu0 0.0
      %2256 = vmatprep.subr.mxu0 0.0
      %2257 = vmatpush1.msra.mxu0 0.0
      %2258 = vmatprep.subr.mxu0 0.0
      %2259 = vmatpush1.msra.mxu0 0.0
      %2260 = vmatprep.subr.mxu0 0.0
      %2261 = vmatpush1.msra.mxu0 0.0
      %2262 = vmatprep.mubr.f32.mxu0 0.0
      %2263 = vmatmul.mubr.f32.gmra.mrb[0].mxu0 %v2111
      %v2264 = vpop.f32.mrb[0].mxu0
      %v2265 = vadd.f32 0.0, %v2264
      %v2266 = vpop.f32.mrb[0].mxu0
      %2267 = vmatprep.mubr.f32.mxu0 0.0
      %2268 = vmatmul.mubr.f32.gmra.mrb[0].mxu0 %v2114
      %v2269 = vpop.f32.mrb[0].mxu0
      %v2270 = vadd.f32 0.0, %v2269
      %v2271 = vpop.f32.mrb[0].mxu0
      %2272 = vdwg.mxu0
      %v2273 = vmax.f32 %v2187, %v2265
      %v2274 = vmax.f32 %v2192, %v2270
      %v2275 = vmax.f32 %v2273, 0.0
      %v2276 = vmax.f32 %v2274, 0.0
      %v2277 = vld [vmem:[%s7] sm:$0xff]
      %v2278 = vld [vmem:[%s7 + $0x8] sm:$0xff]
      %s2279 = scalar_lea.vmem %s7, 16
      %v2280 = vld [vmem:[%s2279] sm:$0xff]
      %v2281 = vld [vmem:[%s2279 + $0x8] sm:$0xff]
      %2284 = vrot.lane.b32.xlu0 %v2275, 127
      %v2285 = vpop.permute.xlu0 %2284
      %2286 = vrot.lane.b32.xlu0 %v2276, 127
      %v2287 = vpop.permute.xlu0 %2286
      %v2291 = vsel %vm1338, %v2280, 0
      %v2294 = vsel %vm1338, %v2281, 0
      %2296 = vmatprep.subr.mxu0 0.0
      %2297 = vmatpush1.msra.mxu0 %v2285
      %2298 = vmatprep.subr.mxu0 0.0
      %2299 = vmatpush1.msra.mxu0 %v2287
      %2300 = vmatprep.subr.mxu0 0.0
      %2301 = vmatpush1.msra.mxu0 0.0
      %2302 = vmatprep.subr.mxu0 0.0
      %2303 = vmatpush1.msra.mxu0 0.0
      %2304 = vmatprep.subr.mxu0 0.0
      %2305 = vmatpush1.msra.mxu0 0.0
      %2306 = vmatprep.subr.mxu0 0.0
      %2307 = vmatpush1.msra.mxu0 0.0
      %2308 = vmatprep.subr.mxu0 0.0
      %2309 = vmatpush1.msra.mxu0 0.0
      %2310 = vmatprep.subr.mxu0 0.0
      %2311 = vmatpush1.msra.mxu0 0.0
      %2312 = vmatprep.subr.mxu0 0.0
      %2313 = vmatpush1.msra.mxu0 0.0
      %2314 = vmatprep.subr.mxu0 0.0
      %2315 = vmatpush1.msra.mxu0 0.0
      %2316 = vmatprep.subr.mxu0 0.0
      %2317 = vmatpush1.msra.mxu0 0.0
      %2318 = vmatprep.subr.mxu0 0.0
      %2319 = vmatpush1.msra.mxu0 0.0
      %2320 = vmatprep.subr.mxu0 0.0
      %2321 = vmatpush1.msra.mxu0 0.0
      %2322 = vmatprep.subr.mxu0 0.0
      %2323 = vmatpush1.msra.mxu0 0.0
      %2324 = vmatprep.subr.mxu0 0.0
      %2325 = vmatpush1.msra.mxu0 0.0
      %2326 = vmatprep.subr.mxu0 0.0
      %2327 = vmatpush1.msra.mxu0 0.0
      %2328 = vmatprep.subr.mxu0 0.0
      %2329 = vmatpush1.msra.mxu0 0.0
      %2330 = vmatprep.subr.mxu0 0.0
      %2331 = vmatpush1.msra.mxu0 0.0
      %2332 = vmatprep.subr.mxu0 0.0
      %2333 = vmatpush1.msra.mxu0 0.0
      %2334 = vmatprep.subr.mxu0 0.0
      %2335 = vmatpush1.msra.mxu0 0.0
      %2336 = vmatprep.subr.mxu0 0.0
      %2337 = vmatpush1.msra.mxu0 0.0
      %2338 = vmatprep.subr.mxu0 0.0
      %2339 = vmatpush1.msra.mxu0 0.0
      %2340 = vmatprep.subr.mxu0 0.0
      %2341 = vmatpush1.msra.mxu0 0.0
      %2342 = vmatprep.subr.mxu0 0.0
      %2343 = vmatpush1.msra.mxu0 0.0
      %2344 = vmatprep.subr.mxu0 0.0
      %2345 = vmatpush1.msra.mxu0 0.0
      %2346 = vmatprep.subr.mxu0 0.0
      %2347 = vmatpush1.msra.mxu0 0.0
      %2348 = vmatprep.subr.mxu0 0.0
      %2349 = vmatpush1.msra.mxu0 0.0
      %2350 = vmatprep.subr.mxu0 0.0
      %2351 = vmatpush1.msra.mxu0 0.0
      %2352 = vmatprep.subr.mxu0 0.0
      %2353 = vmatpush1.msra.mxu0 0.0
      %2354 = vmatprep.subr.mxu0 0.0
      %2355 = vmatpush1.msra.mxu0 0.0
      %2356 = vmatprep.subr.mxu0 0.0
      %2357 = vmatpush1.msra.mxu0 0.0
      %2358 = vmatprep.subr.mxu0 0.0
      %2359 = vmatpush1.msra.mxu0 0.0
      %2360 = vmatprep.mubr.f32.mxu0 0.0
      %2361 = vmatmul.mubr.f32.gmra.mrb[0].mxu0 %v2291
      %v2362 = vpop.f32.mrb[0].mxu0
      %v2363 = vadd.f32 0.0, %v2362
      %v2364 = vpop.f32.mrb[0].mxu0
      %2365 = vmatprep.mubr.f32.mxu0 0.0
      %2366 = vmatmul.mubr.f32.gmra.mrb[0].mxu0 %v2294
      %v2367 = vpop.f32.mrb[0].mxu0
      %v2368 = vadd.f32 0.0, %v2367
      %v2369 = vpop.f32.mrb[0].mxu0
      %2370 = vdwg.mxu0
      %v2372 = vsel %vm1338, %v2277, 0
      %v2375 = vsel %vm1338, %v2278, 0
      %2377 = vmatprep.subr.mxu0 0.0
      %2378 = vmatpush1.msra.mxu0 %v2275
      %2379 = vmatprep.subr.mxu0 0.0
      %2380 = vmatpush1.msra.mxu0 %v2276
      %2381 = vmatprep.subr.mxu0 0.0
      %2382 = vmatpush1.msra.mxu0 0.0
      %2383 = vmatprep.subr.mxu0 0.0
      %2384 = vmatpush1.msra.mxu0 0.0
      %2385 = vmatprep.subr.mxu0 0.0
      %2386 = vmatpush1.msra.mxu0 0.0
      %2387 = vmatprep.subr.mxu0 0.0
      %2388 = vmatpush1.msra.mxu0 0.0
      %2389 = vmatprep.subr.mxu0 0.0
      %2390 = vmatpush1.msra.mxu0 0.0
      %2391 = vmatprep.subr.mxu0 0.0
      %2392 = vmatpush1.msra.mxu0 0.0
      %2393 = vmatprep.subr.mxu0 0.0
      %2394 = vmatpush1.msra.mxu0 0.0
      %2395 = vmatprep.subr.mxu0 0.0
      %2396 = vmatpush1.msra.mxu0 0.0
      %2397 = vmatprep.subr.mxu0 0.0
      %2398 = vmatpush1.msra.mxu0 0.0
      %2399 = vmatprep.subr.mxu0 0.0
      %2400 = vmatpush1.msra.mxu0 0.0
      %2401 = vmatprep.subr.mxu0 0.0
      %2402 = vmatpush1.msra.mxu0 0.0
      %2403 = vmatprep.subr.mxu0 0.0
      %2404 = vmatpush1.msra.mxu0 0.0
      %2405 = vmatprep.subr.mxu0 0.0
      %2406 = vmatpush1.msra.mxu0 0.0
      %2407 = vmatprep.subr.mxu0 0.0
      %2408 = vmatpush1.msra.mxu0 0.0
      %2409 = vmatprep.subr.mxu0 0.0
      %2410 = vmatpush1.msra.mxu0 0.0
      %2411 = vmatprep.subr.mxu0 0.0
      %2412 = vmatpush1.msra.mxu0 0.0
      %2413 = vmatprep.subr.mxu0 0.0
      %2414 = vmatpush1.msra.mxu0 0.0
      %2415 = vmatprep.subr.mxu0 0.0
      %2416 = vmatpush1.msra.mxu0 0.0
      %2417 = vmatprep.subr.mxu0 0.0
      %2418 = vmatpush1.msra.mxu0 0.0
      %2419 = vmatprep.subr.mxu0 0.0
      %2420 = vmatpush1.msra.mxu0 0.0
      %2421 = vmatprep.subr.mxu0 0.0
      %2422 = vmatpush1.msra.mxu0 0.0
      %2423 = vmatprep.subr.mxu0 0.0
      %2424 = vmatpush1.msra.mxu0 0.0
      %2425 = vmatprep.subr.mxu0 0.0
      %2426 = vmatpush1.msra.mxu0 0.0
      %2427 = vmatprep.subr.mxu0 0.0
      %2428 = vmatpush1.msra.mxu0 0.0
      %2429 = vmatprep.subr.mxu0 0.0
      %2430 = vmatpush1.msra.mxu0 0.0
      %2431 = vmatprep.subr.mxu0 0.0
      %2432 = vmatpush1.msra.mxu0 0.0
      %2433 = vmatprep.subr.mxu0 0.0
      %2434 = vmatpush1.msra.mxu0 0.0
      %2435 = vmatprep.subr.mxu0 0.0
      %2436 = vmatpush1.msra.mxu0 0.0
      %2437 = vmatprep.subr.mxu0 0.0
      %2438 = vmatpush1.msra.mxu0 0.0
      %2439 = vmatprep.subr.mxu0 0.0
      %2440 = vmatpush1.msra.mxu0 0.0
      %2441 = vmatprep.mubr.f32.mxu0 0.0
      %2442 = vmatmul.mubr.f32.gmra.mrb[0].mxu0 %v2372
      %v2443 = vpop.f32.mrb[0].mxu0
      %v2444 = vadd.f32 %v2363, %v2443
      %v2445 = vpop.f32.mrb[0].mxu0
      %2446 = vmatprep.mubr.f32.mxu0 0.0
      %2447 = vmatmul.mubr.f32.gmra.mrb[0].mxu0 %v2375
      %v2448 = vpop.f32.mrb[0].mxu0
      %v2449 = vadd.f32 %v2368, %v2448
      %v2450 = vpop.f32.mrb[0].mxu0
      %2451 = vdwg.mxu0
      %s2452 = scalar_lea.vmem %s7, 32
      %v2453 = vld [vmem:[%s2452] sm:$0xff]
      %v2454 = vld [vmem:[%s2452 + $0x8] sm:$0xff]
      %2455 = vrot.lane.b32.xlu0 %v2275, 126
      %v2456 = vpop.permute.xlu0 %2455
      %2457 = vrot.lane.b32.xlu0 %v2276, 126
      %v2458 = vpop.permute.xlu0 %2457
      %v2462 = vsel %vm1338, %v2453, 0
      %v2465 = vsel %vm1338, %v2454, 0
      %2467 = vmatprep.subr.mxu0 0.0
      %2468 = vmatpush1.msra.mxu0 %v2456
      %2469 = vmatprep.subr.mxu0 0.0
      %2470 = vmatpush1.msra.mxu0 %v2458
      %2471 = vmatprep.subr.mxu0 0.0
      %2472 = vmatpush1.msra.mxu0 0.0
      %2473 = vmatprep.subr.mxu0 0.0
      %2474 = vmatpush1.msra.mxu0 0.0
      %2475 = vmatprep.subr.mxu0 0.0
      %2476 = vmatpush1.msra.mxu0 0.0
      %2477 = vmatprep.subr.mxu0 0.0
      %2478 = vmatpush1.msra.mxu0 0.0
      %2479 = vmatprep.subr.mxu0 0.0
      %2480 = vmatpush1.msra.mxu0 0.0
      %2481 = vmatprep.subr.mxu0 0.0
      %2482 = vmatpush1.msra.mxu0 0.0
      %2483 = vmatprep.subr.mxu0 0.0
      %2484 = vmatpush1.msra.mxu0 0.0
      %2485 = vmatprep.subr.mxu0 0.0
      %2486 = vmatpush1.msra.mxu0 0.0
      %2487 = vmatprep.subr.mxu0 0.0
      %2488 = vmatpush1.msra.mxu0 0.0
      %2489 = vmatprep.subr.mxu0 0.0
      %2490 = vmatpush1.msra.mxu0 0.0
      %2491 = vmatprep.subr.mxu0 0.0
      %2492 = vmatpush1.msra.mxu0 0.0
      %2493 = vmatprep.subr.mxu0 0.0
      %2494 = vmatpush1.msra.mxu0 0.0
      %2495 = vmatprep.subr.mxu0 0.0
      %2496 = vmatpush1.msra.mxu0 0.0
      %2497 = vmatprep.subr.mxu0 0.0
      %2498 = vmatpush1.msra.mxu0 0.0
      %2499 = vmatprep.subr.mxu0 0.0
      %2500 = vmatpush1.msra.mxu0 0.0
      %2501 = vmatprep.subr.mxu0 0.0
      %2502 = vmatpush1.msra.mxu0 0.0
      %2503 = vmatprep.subr.mxu0 0.0
      %2504 = vmatpush1.msra.mxu0 0.0
      %2505 = vmatprep.subr.mxu0 0.0
      %2506 = vmatpush1.msra.mxu0 0.0
      %2507 = vmatprep.subr.mxu0 0.0
      %2508 = vmatpush1.msra.mxu0 0.0
      %2509 = vmatprep.subr.mxu0 0.0
      %2510 = vmatpush1.msra.mxu0 0.0
      %2511 = vmatprep.subr.mxu0 0.0
      %2512 = vmatpush1.msra.mxu0 0.0
      %2513 = vmatprep.subr.mxu0 0.0
      %2514 = vmatpush1.msra.mxu0 0.0
      %2515 = vmatprep.subr.mxu0 0.0
      %2516 = vmatpush1.msra.mxu0 0.0
      %2517 = vmatprep.subr.mxu0 0.0
      %2518 = vmatpush1.msra.mxu0 0.0
      %2519 = vmatprep.subr.mxu0 0.0
      %2520 = vmatpush1.msra.mxu0 0.0
      %2521 = vmatprep.subr.mxu0 0.0
      %2522 = vmatpush1.msra.mxu0 0.0
      %2523 = vmatprep.subr.mxu0 0.0
      %2524 = vmatpush1.msra.mxu0 0.0
      %2525 = vmatprep.subr.mxu0 0.0
      %2526 = vmatpush1.msra.mxu0 0.0
      %2527 = vmatprep.subr.mxu0 0.0
      %2528 = vmatpush1.msra.mxu0 0.0
      %2529 = vmatprep.subr.mxu0 0.0
      %2530 = vmatpush1.msra.mxu0 0.0
      %2531 = vmatprep.mubr.f32.mxu0 0.0
      %2532 = vmatmul.mubr.f32.gmra.mrb[0].mxu0 %v2462
      %v2533 = vpop.f32.mrb[0].mxu0
      %v2534 = vadd.f32 0.0, %v2533
      %v2535 = vpop.f32.mrb[0].mxu0
      %2536 = vmatprep.mubr.f32.mxu0 0.0
      %2537 = vmatmul.mubr.f32.gmra.mrb[0].mxu0 %v2465
      %v2538 = vpop.f32.mrb[0].mxu0
      %v2539 = vadd.f32 0.0, %v2538
      %v2540 = vpop.f32.mrb[0].mxu0
      %2541 = vdwg.mxu0
      %v2542 = vadd.f32 %v2444, %v2534
      %v2543 = vadd.f32 %v2449, %v2539
      %s2544 = scalar_lea.vmem %s7, 48
      %v2545 = vld [vmem:[%s2544] sm:$0xff]
      %v2546 = vld [vmem:[%s2544 + $0x8] sm:$0xff]
      %2547 = vrot.lane.b32.xlu0 %v2275, 125
      %v2548 = vpop.permute.xlu0 %2547
      %2549 = vrot.lane.b32.xlu0 %v2276, 125
      %v2550 = vpop.permute.xlu0 %2549
      %v2554 = vsel %vm1338, %v2545, 0
      %v2557 = vsel %vm1338, %v2546, 0
      %2559 = vmatprep.subr.mxu0 0.0
      %2560 = vmatpush1.msra.mxu0 %v2548
      %2561 = vmatprep.subr.mxu0 0.0
      %2562 = vmatpush1.msra.mxu0 %v2550
      %2563 = vmatprep.subr.mxu0 0.0
      %2564 = vmatpush1.msra.mxu0 0.0
      %2565 = vmatprep.subr.mxu0 0.0
      %2566 = vmatpush1.msra.mxu0 0.0
      %2567 = vmatprep.subr.mxu0 0.0
      %2568 = vmatpush1.msra.mxu0 0.0
      %2569 = vmatprep.subr.mxu0 0.0
      %2570 = vmatpush1.msra.mxu0 0.0
      %2571 = vmatprep.subr.mxu0 0.0
      %2572 = vmatpush1.msra.mxu0 0.0
      %2573 = vmatprep.subr.mxu0 0.0
      %2574 = vmatpush1.msra.mxu0 0.0
      %2575 = vmatprep.subr.mxu0 0.0
      %2576 = vmatpush1.msra.mxu0 0.0
      %2577 = vmatprep.subr.mxu0 0.0
      %2578 = vmatpush1.msra.mxu0 0.0
      %2579 = vmatprep.subr.mxu0 0.0
      %2580 = vmatpush1.msra.mxu0 0.0
      %2581 = vmatprep.subr.mxu0 0.0
      %2582 = vmatpush1.msra.mxu0 0.0
      %2583 = vmatprep.subr.mxu0 0.0
      %2584 = vmatpush1.msra.mxu0 0.0
      %2585 = vmatprep.subr.mxu0 0.0
      %2586 = vmatpush1.msra.mxu0 0.0
      %2587 = vmatprep.subr.mxu0 0.0
      %2588 = vmatpush1.msra.mxu0 0.0
      %2589 = vmatprep.subr.mxu0 0.0
      %2590 = vmatpush1.msra.mxu0 0.0
      %2591 = vmatprep.subr.mxu0 0.0
      %2592 = vmatpush1.msra.mxu0 0.0
      %2593 = vmatprep.subr.mxu0 0.0
      %2594 = vmatpush1.msra.mxu0 0.0
      %2595 = vmatprep.subr.mxu0 0.0
      %2596 = vmatpush1.msra.mxu0 0.0
      %2597 = vmatprep.subr.mxu0 0.0
      %2598 = vmatpush1.msra.mxu0 0.0
      %2599 = vmatprep.subr.mxu0 0.0
      %2600 = vmatpush1.msra.mxu0 0.0
      %2601 = vmatprep.subr.mxu0 0.0
      %2602 = vmatpush1.msra.mxu0 0.0
      %2603 = vmatprep.subr.mxu0 0.0
      %2604 = vmatpush1.msra.mxu0 0.0
      %2605 = vmatprep.subr.mxu0 0.0
      %2606 = vmatpush1.msra.mxu0 0.0
      %2607 = vmatprep.subr.mxu0 0.0
      %2608 = vmatpush1.msra.mxu0 0.0
      %2609 = vmatprep.subr.mxu0 0.0
      %2610 = vmatpush1.msra.mxu0 0.0
      %2611 = vmatprep.subr.mxu0 0.0
      %2612 = vmatpush1.msra.mxu0 0.0
      %2613 = vmatprep.subr.mxu0 0.0
      %2614 = vmatpush1.msra.mxu0 0.0
      %2615 = vmatprep.subr.mxu0 0.0
      %2616 = vmatpush1.msra.mxu0 0.0
      %2617 = vmatprep.subr.mxu0 0.0
      %2618 = vmatpush1.msra.mxu0 0.0
      %2619 = vmatprep.subr.mxu0 0.0
      %2620 = vmatpush1.msra.mxu0 0.0
      %2621 = vmatprep.subr.mxu0 0.0
      %2622 = vmatpush1.msra.mxu0 0.0
      %2623 = vmatprep.mubr.f32.mxu0 0.0
      %2624 = vmatmul.mubr.f32.gmra.mrb[0].mxu0 %v2554
      %v2625 = vpop.f32.mrb[0].mxu0
      %v2626 = vadd.f32 0.0, %v2625
      %v2627 = vpop.f32.mrb[0].mxu0
      %2628 = vmatprep.mubr.f32.mxu0 0.0
      %2629 = vmatmul.mubr.f32.gmra.mrb[0].mxu0 %v2557
      %v2630 = vpop.f32.mrb[0].mxu0
      %v2631 = vadd.f32 0.0, %v2630
      %v2632 = vpop.f32.mrb[0].mxu0
      %2633 = vdwg.mxu0
      %v2634 = vadd.f32 %v2542, %v2626
      %v2635 = vadd.f32 %v2543, %v2631
      %s2636 = scalar_lea.vmem %s7, 64
      %v2637 = vld [vmem:[%s2636] sm:$0xff]
      %v2638 = vld [vmem:[%s2636 + $0x8] sm:$0xff]
      %2639 = vrot.lane.b32.xlu0 %v2275, 124
      %v2640 = vpop.permute.xlu0 %2639
      %2641 = vrot.lane.b32.xlu0 %v2276, 124
      %v2642 = vpop.permute.xlu0 %2641
      %v2646 = vsel %vm1338, %v2637, 0
      %v2649 = vsel %vm1338, %v2638, 0
      %2651 = vmatprep.subr.mxu0 0.0
      %2652 = vmatpush1.msra.mxu0 %v2640
      %2653 = vmatprep.subr.mxu0 0.0
      %2654 = vmatpush1.msra.mxu0 %v2642
      %2655 = vmatprep.subr.mxu0 0.0
      %2656 = vmatpush1.msra.mxu0 0.0
      %2657 = vmatprep.subr.mxu0 0.0
      %2658 = vmatpush1.msra.mxu0 0.0
      %2659 = vmatprep.subr.mxu0 0.0
      %2660 = vmatpush1.msra.mxu0 0.0
      %2661 = vmatprep.subr.mxu0 0.0
      %2662 = vmatpush1.msra.mxu0 0.0
      %2663 = vmatprep.subr.mxu0 0.0
      %2664 = vmatpush1.msra.mxu0 0.0
      %2665 = vmatprep.subr.mxu0 0.0
      %2666 = vmatpush1.msra.mxu0 0.0
      %2667 = vmatprep.subr.mxu0 0.0
      %2668 = vmatpush1.msra.mxu0 0.0
      %2669 = vmatprep.subr.mxu0 0.0
      %2670 = vmatpush1.msra.mxu0 0.0
      %2671 = vmatprep.subr.mxu0 0.0
      %2672 = vmatpush1.msra.mxu0 0.0
      %2673 = vmatprep.subr.mxu0 0.0
      %2674 = vmatpush1.msra.mxu0 0.0
      %2675 = vmatprep.subr.mxu0 0.0
      %2676 = vmatpush1.msra.mxu0 0.0
      %2677 = vmatprep.subr.mxu0 0.0
      %2678 = vmatpush1.msra.mxu0 0.0
      %2679 = vmatprep.subr.mxu0 0.0
      %2680 = vmatpush1.msra.mxu0 0.0
      %2681 = vmatprep.subr.mxu0 0.0
      %2682 = vmatpush1.msra.mxu0 0.0
      %2683 = vmatprep.subr.mxu0 0.0
      %2684 = vmatpush1.msra.mxu0 0.0
      %2685 = vmatprep.subr.mxu0 0.0
      %2686 = vmatpush1.msra.mxu0 0.0
      %2687 = vmatprep.subr.mxu0 0.0
      %2688 = vmatpush1.msra.mxu0 0.0
      %2689 = vmatprep.subr.mxu0 0.0
      %2690 = vmatpush1.msra.mxu0 0.0
      %2691 = vmatprep.subr.mxu0 0.0
      %2692 = vmatpush1.msra.mxu0 0.0
      %2693 = vmatprep.subr.mxu0 0.0
      %2694 = vmatpush1.msra.mxu0 0.0
      %2695 = vmatprep.subr.mxu0 0.0
      %2696 = vmatpush1.msra.mxu0 0.0
      %2697 = vmatprep.subr.mxu0 0.0
      %2698 = vmatpush1.msra.mxu0 0.0
      %2699 = vmatprep.subr.mxu0 0.0
      %2700 = vmatpush1.msra.mxu0 0.0
      %2701 = vmatprep.subr.mxu0 0.0
      %2702 = vmatpush1.msra.mxu0 0.0
      %2703 = vmatprep.subr.mxu0 0.0
      %2704 = vmatpush1.msra.mxu0 0.0
      %2705 = vmatprep.subr.mxu0 0.0
      %2706 = vmatpush1.msra.mxu0 0.0
      %2707 = vmatprep.subr.mxu0 0.0
      %2708 = vmatpush1.msra.mxu0 0.0
      %2709 = vmatprep.subr.mxu0 0.0
      %2710 = vmatpush1.msra.mxu0 0.0
      %2711 = vmatprep.subr.mxu0 0.0
      %2712 = vmatpush1.msra.mxu0 0.0
      %2713 = vmatprep.subr.mxu0 0.0
      %2714 = vmatpush1.msra.mxu0 0.0
      %2715 = vmatprep.mubr.f32.mxu0 0.0
      %2716 = vmatmul.mubr.f32.gmra.mrb[0].mxu0 %v2646
      %v2717 = vpop.f32.mrb[0].mxu0
      %v2718 = vadd.f32 0.0, %v2717
      %v2719 = vpop.f32.mrb[0].mxu0
      %2720 = vmatprep.mubr.f32.mxu0 0.0
      %2721 = vmatmul.mubr.f32.gmra.mrb[0].mxu0 %v2649
      %v2722 = vpop.f32.mrb[0].mxu0
      %v2723 = vadd.f32 0.0, %v2722
      %v2724 = vpop.f32.mrb[0].mxu0
      %2725 = vdwg.mxu0
      %v2726 = vadd.f32 %v2634, %v2718
      %v2727 = vadd.f32 %v2635, %v2723
      %s2728 = scalar_lea.vmem %s7, 80
      %v2729 = vld [vmem:[%s2728] sm:$0xff]
      %v2730 = vld [vmem:[%s2728 + $0x8] sm:$0xff]
      %2731 = vrot.lane.b32.xlu0 %v2275, 123
      %v2732 = vpop.permute.xlu0 %2731
      %2733 = vrot.lane.b32.xlu0 %v2276, 123
      %v2734 = vpop.permute.xlu0 %2733
      %v2738 = vsel %vm1338, %v2729, 0
      %v2741 = vsel %vm1338, %v2730, 0
      %2743 = vmatprep.subr.mxu0 0.0
      %2744 = vmatpush1.msra.mxu0 %v2732
      %2745 = vmatprep.subr.mxu0 0.0
      %2746 = vmatpush1.msra.mxu0 %v2734
      %2747 = vmatprep.subr.mxu0 0.0
      %2748 = vmatpush1.msra.mxu0 0.0
      %2749 = vmatprep.subr.mxu0 0.0
      %2750 = vmatpush1.msra.mxu0 0.0
      %2751 = vmatprep.subr.mxu0 0.0
      %2752 = vmatpush1.msra.mxu0 0.0
      %2753 = vmatprep.subr.mxu0 0.0
      %2754 = vmatpush1.msra.mxu0 0.0
      %2755 = vmatprep.subr.mxu0 0.0
      %2756 = vmatpush1.msra.mxu0 0.0
      %2757 = vmatprep.subr.mxu0 0.0
      %2758 = vmatpush1.msra.mxu0 0.0
      %2759 = vmatprep.subr.mxu0 0.0
      %2760 = vmatpush1.msra.mxu0 0.0
      %2761 = vmatprep.subr.mxu0 0.0
      %2762 = vmatpush1.msra.mxu0 0.0
      %2763 = vmatprep.subr.mxu0 0.0
      %2764 = vmatpush1.msra.mxu0 0.0
      %2765 = vmatprep.subr.mxu0 0.0
      %2766 = vmatpush1.msra.mxu0 0.0
      %2767 = vmatprep.subr.mxu0 0.0
      %2768 = vmatpush1.msra.mxu0 0.0
      %2769 = vmatprep.subr.mxu0 0.0
      %2770 = vmatpush1.msra.mxu0 0.0
      %2771 = vmatprep.subr.mxu0 0.0
      %2772 = vmatpush1.msra.mxu0 0.0
      %2773 = vmatprep.subr.mxu0 0.0
      %2774 = vmatpush1.msra.mxu0 0.0
      %2775 = vmatprep.subr.mxu0 0.0
      %2776 = vmatpush1.msra.mxu0 0.0
      %2777 = vmatprep.subr.mxu0 0.0
      %2778 = vmatpush1.msra.mxu0 0.0
      %2779 = vmatprep.subr.mxu0 0.0
      %2780 = vmatpush1.msra.mxu0 0.0
      %2781 = vmatprep.subr.mxu0 0.0
      %2782 = vmatpush1.msra.mxu0 0.0
      %2783 = vmatprep.subr.mxu0 0.0
      %2784 = vmatpush1.msra.mxu0 0.0
      %2785 = vmatprep.subr.mxu0 0.0
      %2786 = vmatpush1.msra.mxu0 0.0
      %2787 = vmatprep.subr.mxu0 0.0
      %2788 = vmatpush1.msra.mxu0 0.0
      %2789 = vmatprep.subr.mxu0 0.0
      %2790 = vmatpush1.msra.mxu0 0.0
      %2791 = vmatprep.subr.mxu0 0.0
      %2792 = vmatpush1.msra.mxu0 0.0
      %2793 = vmatprep.subr.mxu0 0.0
      %2794 = vmatpush1.msra.mxu0 0.0
      %2795 = vmatprep.subr.mxu0 0.0
      %2796 = vmatpush1.msra.mxu0 0.0
      %2797 = vmatprep.subr.mxu0 0.0
      %2798 = vmatpush1.msra.mxu0 0.0
      %2799 = vmatprep.subr.mxu0 0.0
      %2800 = vmatpush1.msra.mxu0 0.0
      %2801 = vmatprep.subr.mxu0 0.0
      %2802 = vmatpush1.msra.mxu0 0.0
      %2803 = vmatprep.subr.mxu0 0.0
      %2804 = vmatpush1.msra.mxu0 0.0
      %2805 = vmatprep.subr.mxu0 0.0
      %2806 = vmatpush1.msra.mxu0 0.0
      %2807 = vmatprep.mubr.f32.mxu0 0.0
      %2808 = vmatmul.mubr.f32.gmra.mrb[0].mxu0 %v2738
      %v2809 = vpop.f32.mrb[0].mxu0
      %v2810 = vadd.f32 0.0, %v2809
      %v2811 = vpop.f32.mrb[0].mxu0
      %2812 = vmatprep.mubr.f32.mxu0 0.0
      %2813 = vmatmul.mubr.f32.gmra.mrb[0].mxu0 %v2741
      %v2814 = vpop.f32.mrb[0].mxu0
      %v2815 = vadd.f32 0.0, %v2814
      %v2816 = vpop.f32.mrb[0].mxu0
      %2817 = vdwg.mxu0
      %v2818 = vadd.f32 %v2726, %v2810
      %v2819 = vadd.f32 %v2727, %v2815
      %s2820 = scalar_lea.vmem %s7, 96
      %v2821 = vld [vmem:[%s2820] sm:$0xff]
      %v2822 = vld [vmem:[%s2820 + $0x8] sm:$0xff]
      %2823 = vrot.lane.b32.xlu0 %v2275, 122
      %v2824 = vpop.permute.xlu0 %2823
      %2825 = vrot.lane.b32.xlu0 %v2276, 122
      %v2826 = vpop.permute.xlu0 %2825
      %v2830 = vsel %vm1338, %v2821, 0
      %v2833 = vsel %vm1338, %v2822, 0
      %2835 = vmatprep.subr.mxu0 0.0
      %2836 = vmatpush1.msra.mxu0 %v2824
      %2837 = vmatprep.subr.mxu0 0.0
      %2838 = vmatpush1.msra.mxu0 %v2826
      %2839 = vmatprep.subr.mxu0 0.0
      %2840 = vmatpush1.msra.mxu0 0.0
      %2841 = vmatprep.subr.mxu0 0.0
      %2842 = vmatpush1.msra.mxu0 0.0
      %2843 = vmatprep.subr.mxu0 0.0
      %2844 = vmatpush1.msra.mxu0 0.0
      %2845 = vmatprep.subr.mxu0 0.0
      %2846 = vmatpush1.msra.mxu0 0.0
      %2847 = vmatprep.subr.mxu0 0.0
      %2848 = vmatpush1.msra.mxu0 0.0
      %2849 = vmatprep.subr.mxu0 0.0
      %2850 = vmatpush1.msra.mxu0 0.0
      %2851 = vmatprep.subr.mxu0 0.0
      %2852 = vmatpush1.msra.mxu0 0.0
      %2853 = vmatprep.subr.mxu0 0.0
      %2854 = vmatpush1.msra.mxu0 0.0
      %2855 = vmatprep.subr.mxu0 0.0
      %2856 = vmatpush1.msra.mxu0 0.0
      %2857 = vmatprep.subr.mxu0 0.0
      %2858 = vmatpush1.msra.mxu0 0.0
      %2859 = vmatprep.subr.mxu0 0.0
      %2860 = vmatpush1.msra.mxu0 0.0
      %2861 = vmatprep.subr.mxu0 0.0
      %2862 = vmatpush1.msra.mxu0 0.0
      %2863 = vmatprep.subr.mxu0 0.0
      %2864 = vmatpush1.msra.mxu0 0.0
      %2865 = vmatprep.subr.mxu0 0.0
      %2866 = vmatpush1.msra.mxu0 0.0
      %2867 = vmatprep.subr.mxu0 0.0
      %2868 = vmatpush1.msra.mxu0 0.0
      %2869 = vmatprep.subr.mxu0 0.0
      %2870 = vmatpush1.msra.mxu0 0.0
      %2871 = vmatprep.subr.mxu0 0.0
      %2872 = vmatpush1.msra.mxu0 0.0
      %2873 = vmatprep.subr.mxu0 0.0
      %2874 = vmatpush1.msra.mxu0 0.0
      %2875 = vmatprep.subr.mxu0 0.0
      %2876 = vmatpush1.msra.mxu0 0.0
      %2877 = vmatprep.subr.mxu0 0.0
      %2878 = vmatpush1.msra.mxu0 0.0
      %2879 = vmatprep.subr.mxu0 0.0
      %2880 = vmatpush1.msra.mxu0 0.0
      %2881 = vmatprep.subr.mxu0 0.0
      %2882 = vmatpush1.msra.mxu0 0.0
      %2883 = vmatprep.subr.mxu0 0.0
      %2884 = vmatpush1.msra.mxu0 0.0
      %2885 = vmatprep.subr.mxu0 0.0
      %2886 = vmatpush1.msra.mxu0 0.0
      %2887 = vmatprep.subr.mxu0 0.0
      %2888 = vmatpush1.msra.mxu0 0.0
      %2889 = vmatprep.subr.mxu0 0.0
      %2890 = vmatpush1.msra.mxu0 0.0
      %2891 = vmatprep.subr.mxu0 0.0
      %2892 = vmatpush1.msra.mxu0 0.0
      %2893 = vmatprep.subr.mxu0 0.0
      %2894 = vmatpush1.msra.mxu0 0.0
      %2895 = vmatprep.subr.mxu0 0.0
      %2896 = vmatpush1.msra.mxu0 0.0
      %2897 = vmatprep.subr.mxu0 0.0
      %2898 = vmatpush1.msra.mxu0 0.0
      %2899 = vmatprep.mubr.f32.mxu0 0.0
      %2900 = vmatmul.mubr.f32.gmra.mrb[0].mxu0 %v2830
      %v2901 = vpop.f32.mrb[0].mxu0
      %v2902 = vadd.f32 0.0, %v2901
      %v2903 = vpop.f32.mrb[0].mxu0
      %2904 = vmatprep.mubr.f32.mxu0 0.0
      %2905 = vmatmul.mubr.f32.gmra.mrb[0].mxu0 %v2833
      %v2906 = vpop.f32.mrb[0].mxu0
      %v2907 = vadd.f32 0.0, %v2906
      %v2908 = vpop.f32.mrb[0].mxu0
      %2909 = vdwg.mxu0
      %v2910 = vadd.f32 %v2818, %v2902
      %v2911 = vadd.f32 %v2819, %v2907
      %s2912 = scalar_lea.vmem %s7, 112
      %v2913 = vld [vmem:[%s2912] sm:$0xff]
      %v2914 = vld [vmem:[%s2912 + $0x8] sm:$0xff]
      %2915 = vrot.lane.b32.xlu0 %v2275, 121
      %v2916 = vpop.permute.xlu0 %2915
      %2917 = vrot.lane.b32.xlu0 %v2276, 121
      %v2918 = vpop.permute.xlu0 %2917
      %v2922 = vsel %vm1338, %v2913, 0
      %v2925 = vsel %vm1338, %v2914, 0
      %2927 = vmatprep.subr.mxu0 0.0
      %2928 = vmatpush1.msra.mxu0 %v2916
      %2929 = vmatprep.subr.mxu0 0.0
      %2930 = vmatpush1.msra.mxu0 %v2918
      %2931 = vmatprep.subr.mxu0 0.0
      %2932 = vmatpush1.msra.mxu0 0.0
      %2933 = vmatprep.subr.mxu0 0.0
      %2934 = vmatpush1.msra.mxu0 0.0
      %2935 = vmatprep.subr.mxu0 0.0
      %2936 = vmatpush1.msra.mxu0 0.0
      %2937 = vmatprep.subr.mxu0 0.0
      %2938 = vmatpush1.msra.mxu0 0.0
      %2939 = vmatprep.subr.mxu0 0.0
      %2940 = vmatpush1.msra.mxu0 0.0
      %2941 = vmatprep.subr.mxu0 0.0
      %2942 = vmatpush1.msra.mxu0 0.0
      %2943 = vmatprep.subr.mxu0 0.0
      %2944 = vmatpush1.msra.mxu0 0.0
      %2945 = vmatprep.subr.mxu0 0.0
      %2946 = vmatpush1.msra.mxu0 0.0
      %2947 = vmatprep.subr.mxu0 0.0
      %2948 = vmatpush1.msra.mxu0 0.0
      %2949 = vmatprep.subr.mxu0 0.0
      %2950 = vmatpush1.msra.mxu0 0.0
      %2951 = vmatprep.subr.mxu0 0.0
      %2952 = vmatpush1.msra.mxu0 0.0
      %2953 = vmatprep.subr.mxu0 0.0
      %2954 = vmatpush1.msra.mxu0 0.0
      %2955 = vmatprep.subr.mxu0 0.0
      %2956 = vmatpush1.msra.mxu0 0.0
      %2957 = vmatprep.subr.mxu0 0.0
      %2958 = vmatpush1.msra.mxu0 0.0
      %2959 = vmatprep.subr.mxu0 0.0
      %2960 = vmatpush1.msra.mxu0 0.0
      %2961 = vmatprep.subr.mxu0 0.0
      %2962 = vmatpush1.msra.mxu0 0.0
      %2963 = vmatprep.subr.mxu0 0.0
      %2964 = vmatpush1.msra.mxu0 0.0
      %2965 = vmatprep.subr.mxu0 0.0
      %2966 = vmatpush1.msra.mxu0 0.0
      %2967 = vmatprep.subr.mxu0 0.0
      %2968 = vmatpush1.msra.mxu0 0.0
      %2969 = vmatprep.subr.mxu0 0.0
      %2970 = vmatpush1.msra.mxu0 0.0
      %2971 = vmatprep.subr.mxu0 0.0
      %2972 = vmatpush1.msra.mxu0 0.0
      %2973 = vmatprep.subr.mxu0 0.0
      %2974 = vmatpush1.msra.mxu0 0.0
      %2975 = vmatprep.subr.mxu0 0.0
      %2976 = vmatpush1.msra.mxu0 0.0
      %2977 = vmatprep.subr.mxu0 0.0
      %2978 = vmatpush1.msra.mxu0 0.0
      %2979 = vmatprep.subr.mxu0 0.0
      %2980 = vmatpush1.msra.mxu0 0.0
      %2981 = vmatprep.subr.mxu0 0.0
      %2982 = vmatpush1.msra.mxu0 0.0
      %2983 = vmatprep.subr.mxu0 0.0
      %2984 = vmatpush1.msra.mxu0 0.0
      %2985 = vmatprep.subr.mxu0 0.0
      %2986 = vmatpush1.msra.mxu0 0.0
      %2987 = vmatprep.subr.mxu0 0.0
      %2988 = vmatpush1.msra.mxu0 0.0
      %2989 = vmatprep.subr.mxu0 0.0
      %2990 = vmatpush1.msra.mxu0 0.0
      %2991 = vmatprep.mubr.f32.mxu0 0.0
      %2992 = vmatmul.mubr.f32.gmra.mrb[0].mxu0 %v2922
      %v2993 = vpop.f32.mrb[0].mxu0
      %v2994 = vadd.f32 0.0, %v2993
      %v2995 = vpop.f32.mrb[0].mxu0
      %2996 = vmatprep.mubr.f32.mxu0 0.0
      %2997 = vmatmul.mubr.f32.gmra.mrb[0].mxu0 %v2925
      %v2998 = vpop.f32.mrb[0].mxu0
      %v2999 = vadd.f32 0.0, %v2998
      %v3000 = vpop.f32.mrb[0].mxu0
      %3001 = vdwg.mxu0
      %v3002 = vadd.f32 %v2910, %v2994
      %v3003 = vadd.f32 %v2911, %v2999
      %v3004 = vld [vmem:[%s8] sm:$0xff]
      %v3005 = vld [vmem:[%s8 + $0x8] sm:$0xff]
      %3007 = vset.pattern.permute.xlu0 0
      %3008 = vperm.xlu0 %3007, %v3004
      %v3009 = vpop.permute.xlu0 %3008
      %3012 = vset.pattern.permute.xlu0 0
      %3013 = vperm.xlu0 %3012, %v3005
      %v3014 = vpop.permute.xlu0 %3013
      %v3016 = vmul.f32 %v3002, %v3009
      %v3017 = vmul.f32 %v3003, %v3014
      %v3018 = vld [vmem:[%s9] sm:$0xff]
      %v3019 = vld [vmem:[%s9 + $0x8] sm:$0xff]
      %3021 = vset.pattern.permute.xlu0 0
      %3022 = vperm.xlu0 %3021, %v3018
      %v3023 = vpop.permute.xlu0 %3022
      %3026 = vset.pattern.permute.xlu0 0
      %3027 = vperm.xlu0 %3026, %v3019
      %v3028 = vpop.permute.xlu0 %3027
      %v3030 = vadd.f32 %v3016, %v3023
      %v3031 = vadd.f32 %v3017, %v3028
      %v3032 = vmax.f32 %v3030, 0.0
      %v3033 = vmax.f32 %v3031, 0.0
      %vm3034 = vcmp.lt.s32.totalorder %v1319, 14
      %vm3035 = vmand %vm1320, %vm3034
      %v3036 = vsel %vm3035, %v3032, 0.0
      %v3037 = vsel %vm3035, %v3033, 0.0
      %v3038 = vld [vmem:[%s10] sm:$0xff]
      %v3039 = vld [vmem:[%s10 + $0x8] sm:$0xff]
      %v3040 = vld [vmem:[%s10 + $0x10] sm:$0x3f]
      %s3041 = scalar_lea.vmem %s10, 24
      %v3042 = vld [vmem:[%s3041] sm:$0xff]
      %v3043 = vld [vmem:[%s3041 + $0x8] sm:$0xff]
      %v3044 = vld [vmem:[%s3041 + $0x10] sm:$0x3f]
      %3047 = vrot.lane.b32.xlu0 %v3036, 127
      %v3048 = vpop.permute.xlu0 %3047
      %3049 = vrot.lane.b32.xlu0 %v3037, 127
      %v3050 = vpop.permute.xlu0 %3049
      %v3054 = vsel %vm1338, %v3042, 0
      %v3057 = vsel %vm1338, %v3043, 0
      %v3060 = vsel %vm1338, %v3044, 0
      %3062 = vmatprep.subr.mxu0 0.0
      %3063 = vmatpush1.msra.mxu0 %v3048
      %3064 = vmatprep.subr.mxu0 0.0
      %3065 = vmatpush1.msra.mxu0 %v3050
      %3066 = vmatprep.subr.mxu0 0.0
      %3067 = vmatpush1.msra.mxu0 0.0
      %3068 = vmatprep.subr.mxu0 0.0
      %3069 = vmatpush1.msra.mxu0 0.0
      %3070 = vmatprep.subr.mxu0 0.0
      %3071 = vmatpush1.msra.mxu0 0.0
      %3072 = vmatprep.subr.mxu0 0.0
      %3073 = vmatpush1.msra.mxu0 0.0
      %3074 = vmatprep.subr.mxu0 0.0
      %3075 = vmatpush1.msra.mxu0 0.0
      %3076 = vmatprep.subr.mxu0 0.0
      %3077 = vmatpush1.msra.mxu0 0.0
      %3078 = vmatprep.subr.mxu0 0.0
      %3079 = vmatpush1.msra.mxu0 0.0
      %3080 = vmatprep.subr.mxu0 0.0
      %3081 = vmatpush1.msra.mxu0 0.0
      %3082 = vmatprep.subr.mxu0 0.0
      %3083 = vmatpush1.msra.mxu0 0.0
      %3084 = vmatprep.subr.mxu0 0.0
      %3085 = vmatpush1.msra.mxu0 0.0
      %3086 = vmatprep.subr.mxu0 0.0
      %3087 = vmatpush1.msra.mxu0 0.0
      %3088 = vmatprep.subr.mxu0 0.0
      %3089 = vmatpush1.msra.mxu0 0.0
      %3090 = vmatprep.subr.mxu0 0.0
      %3091 = vmatpush1.msra.mxu0 0.0
      %3092 = vmatprep.subr.mxu0 0.0
      %3093 = vmatpush1.msra.mxu0 0.0
      %3094 = vmatprep.subr.mxu0 0.0
      %3095 = vmatpush1.msra.mxu0 0.0
      %3096 = vmatprep.subr.mxu0 0.0
      %3097 = vmatpush1.msra.mxu0 0.0
      %3098 = vmatprep.subr.mxu0 0.0
      %3099 = vmatpush1.msra.mxu0 0.0
      %3100 = vmatprep.subr.mxu0 0.0
      %3101 = vmatpush1.msra.mxu0 0.0
      %3102 = vmatprep.subr.mxu0 0.0
      %3103 = vmatpush1.msra.mxu0 0.0
      %3104 = vmatprep.subr.mxu0 0.0
      %3105 = vmatpush1.msra.mxu0 0.0
      %3106 = vmatprep.subr.mxu0 0.0
      %3107 = vmatpush1.msra.mxu0 0.0
      %3108 = vmatprep.subr.mxu0 0.0
      %3109 = vmatpush1.msra.mxu0 0.0
      %3110 = vmatprep.subr.mxu0 0.0
      %3111 = vmatpush1.msra.mxu0 0.0
      %3112 = vmatprep.subr.mxu0 0.0
      %3113 = vmatpush1.msra.mxu0 0.0
      %3114 = vmatprep.subr.mxu0 0.0
      %3115 = vmatpush1.msra.mxu0 0.0
      %3116 = vmatprep.subr.mxu0 0.0
      %3117 = vmatpush1.msra.mxu0 0.0
      %3118 = vmatprep.subr.mxu0 0.0
      %3119 = vmatpush1.msra.mxu0 0.0
      %3120 = vmatprep.subr.mxu0 0.0
      %3121 = vmatpush1.msra.mxu0 0.0
      %3122 = vmatprep.subr.mxu0 0.0
      %3123 = vmatpush1.msra.mxu0 0.0
      %3124 = vmatprep.subr.mxu0 0.0
      %3125 = vmatpush1.msra.mxu0 0.0
      %3126 = vmatprep.mubr.f32.mxu0 0.0
      %3127 = vmatmul.mubr.f32.gmra.mrb[0].mxu0 %v3054
      %v3128 = vpop.f32.mrb[0].mxu0
      %v3129 = vadd.f32 0.0, %v3128
      %v3130 = vpop.f32.mrb[0].mxu0
      %3131 = vmatprep.mubr.f32.mxu0 0.0
      %3132 = vmatmul.mubr.f32.gmra.mrb[0].mxu0 %v3057
      %v3133 = vpop.f32.mrb[0].mxu0
      %v3134 = vadd.f32 0.0, %v3133
      %v3135 = vpop.f32.mrb[0].mxu0
      %3136 = vmatprep.mubr.f32.mxu0 0.0
      %3137 = vmatmul.mubr.f32.gmra.mrb[0].mxu0 %v3060
      %v3138 = vpop.f32.mrb[0].mxu0
      %v3139 = vadd.f32 0.0, %v3138
      %v3140 = vpop.f32.mrb[0].mxu0
      %3141 = vdwg.mxu0
      %v3143 = vsel %vm1338, %v3038, 0
      %v3146 = vsel %vm1338, %v3039, 0
      %v3149 = vsel %vm1338, %v3040, 0
      %3151 = vmatprep.subr.mxu0 0.0
      %3152 = vmatpush1.msra.mxu0 %v3036
      %3153 = vmatprep.subr.mxu0 0.0
      %3154 = vmatpush1.msra.mxu0 %v3037
      %3155 = vmatprep.subr.mxu0 0.0
      %3156 = vmatpush1.msra.mxu0 0.0
      %3157 = vmatprep.subr.mxu0 0.0
      %3158 = vmatpush1.msra.mxu0 0.0
      %3159 = vmatprep.subr.mxu0 0.0
      %3160 = vmatpush1.msra.mxu0 0.0
      %3161 = vmatprep.subr.mxu0 0.0
      %3162 = vmatpush1.msra.mxu0 0.0
      %3163 = vmatprep.subr.mxu0 0.0
      %3164 = vmatpush1.msra.mxu0 0.0
      %3165 = vmatprep.subr.mxu0 0.0
      %3166 = vmatpush1.msra.mxu0 0.0
      %3167 = vmatprep.subr.mxu0 0.0
      %3168 = vmatpush1.msra.mxu0 0.0
      %3169 = vmatprep.subr.mxu0 0.0
      %3170 = vmatpush1.msra.mxu0 0.0
      %3171 = vmatprep.subr.mxu0 0.0
      %3172 = vmatpush1.msra.mxu0 0.0
      %3173 = vmatprep.subr.mxu0 0.0
      %3174 = vmatpush1.msra.mxu0 0.0
      %3175 = vmatprep.subr.mxu0 0.0
      %3176 = vmatpush1.msra.mxu0 0.0
      %3177 = vmatprep.subr.mxu0 0.0
      %3178 = vmatpush1.msra.mxu0 0.0
      %3179 = vmatprep.subr.mxu0 0.0
      %3180 = vmatpush1.msra.mxu0 0.0
      %3181 = vmatprep.subr.mxu0 0.0
      %3182 = vmatpush1.msra.mxu0 0.0
      %3183 = vmatprep.subr.mxu0 0.0
      %3184 = vmatpush1.msra.mxu0 0.0
      %3185 = vmatprep.subr.mxu0 0.0
      %3186 = vmatpush1.msra.mxu0 0.0
      %3187 = vmatprep.subr.mxu0 0.0
      %3188 = vmatpush1.msra.mxu0 0.0
      %3189 = vmatprep.subr.mxu0 0.0
      %3190 = vmatpush1.msra.mxu0 0.0
      %3191 = vmatprep.subr.mxu0 0.0
      %3192 = vmatpush1.msra.mxu0 0.0
      %3193 = vmatprep.subr.mxu0 0.0
      %3194 = vmatpush1.msra.mxu0 0.0
      %3195 = vmatprep.subr.mxu0 0.0
      %3196 = vmatpush1.msra.mxu0 0.0
      %3197 = vmatprep.subr.mxu0 0.0
      %3198 = vmatpush1.msra.mxu0 0.0
      %3199 = vmatprep.subr.mxu0 0.0
      %3200 = vmatpush1.msra.mxu0 0.0
      %3201 = vmatprep.subr.mxu0 0.0
      %3202 = vmatpush1.msra.mxu0 0.0
      %3203 = vmatprep.subr.mxu0 0.0
      %3204 = vmatpush1.msra.mxu0 0.0
      %3205 = vmatprep.subr.mxu0 0.0
      %3206 = vmatpush1.msra.mxu0 0.0
      %3207 = vmatprep.subr.mxu0 0.0
      %3208 = vmatpush1.msra.mxu0 0.0
      %3209 = vmatprep.subr.mxu0 0.0
      %3210 = vmatpush1.msra.mxu0 0.0
      %3211 = vmatprep.subr.mxu0 0.0
      %3212 = vmatpush1.msra.mxu0 0.0
      %3213 = vmatprep.subr.mxu0 0.0
      %3214 = vmatpush1.msra.mxu0 0.0
      %3215 = vmatprep.mubr.f32.mxu0 0.0
      %3216 = vmatmul.mubr.f32.gmra.mrb[0].mxu0 %v3143
      %v3217 = vpop.f32.mrb[0].mxu0
      %v3218 = vadd.f32 %v3129, %v3217
      %v3219 = vpop.f32.mrb[0].mxu0
      %3220 = vmatprep.mubr.f32.mxu0 0.0
      %3221 = vmatmul.mubr.f32.gmra.mrb[0].mxu0 %v3146
      %v3222 = vpop.f32.mrb[0].mxu0
      %v3223 = vadd.f32 %v3134, %v3222
      %v3224 = vpop.f32.mrb[0].mxu0
      %3225 = vmatprep.mubr.f32.mxu0 0.0
      %3226 = vmatmul.mubr.f32.gmra.mrb[0].mxu0 %v3149
      %v3227 = vpop.f32.mrb[0].mxu0
      %v3228 = vadd.f32 %v3139, %v3227
      %v3229 = vpop.f32.mrb[0].mxu0
      %3230 = vdwg.mxu0
      %s3231 = scalar_lea.vmem %s10, 48
      %v3232 = vld [vmem:[%s3231] sm:$0xff]
      %v3233 = vld [vmem:[%s3231 + $0x8] sm:$0xff]
      %v3234 = vld [vmem:[%s3231 + $0x10] sm:$0x3f]
      %3235 = vrot.lane.b32.xlu0 %v3036, 126
      %v3236 = vpop.permute.xlu0 %3235
      %3237 = vrot.lane.b32.xlu0 %v3037, 126
      %v3238 = vpop.permute.xlu0 %3237
      %v3242 = vsel %vm1338, %v3232, 0
      %v3245 = vsel %vm1338, %v3233, 0
      %v3248 = vsel %vm1338, %v3234, 0
      %3250 = vmatprep.subr.mxu0 0.0
      %3251 = vmatpush1.msra.mxu0 %v3236
      %3252 = vmatprep.subr.mxu0 0.0
      %3253 = vmatpush1.msra.mxu0 %v3238
      %3254 = vmatprep.subr.mxu0 0.0
      %3255 = vmatpush1.msra.mxu0 0.0
      %3256 = vmatprep.subr.mxu0 0.0
      %3257 = vmatpush1.msra.mxu0 0.0
      %3258 = vmatprep.subr.mxu0 0.0
      %3259 = vmatpush1.msra.mxu0 0.0
      %3260 = vmatprep.subr.mxu0 0.0
      %3261 = vmatpush1.msra.mxu0 0.0
      %3262 = vmatprep.subr.mxu0 0.0
      %3263 = vmatpush1.msra.mxu0 0.0
      %3264 = vmatprep.subr.mxu0 0.0
      %3265 = vmatpush1.msra.mxu0 0.0
      %3266 = vmatprep.subr.mxu0 0.0
      %3267 = vmatpush1.msra.mxu0 0.0
      %3268 = vmatprep.subr.mxu0 0.0
      %3269 = vmatpush1.msra.mxu0 0.0
      %3270 = vmatprep.subr.mxu0 0.0
      %3271 = vmatpush1.msra.mxu0 0.0
      %3272 = vmatprep.subr.mxu0 0.0
      %3273 = vmatpush1.msra.mxu0 0.0
      %3274 = vmatprep.subr.mxu0 0.0
      %3275 = vmatpush1.msra.mxu0 0.0
      %3276 = vmatprep.subr.mxu0 0.0
      %3277 = vmatpush1.msra.mxu0 0.0
      %3278 = vmatprep.subr.mxu0 0.0
      %3279 = vmatpush1.msra.mxu0 0.0
      %3280 = vmatprep.subr.mxu0 0.0
      %3281 = vmatpush1.msra.mxu0 0.0
      %3282 = vmatprep.subr.mxu0 0.0
      %3283 = vmatpush1.msra.mxu0 0.0
      %3284 = vmatprep.subr.mxu0 0.0
      %3285 = vmatpush1.msra.mxu0 0.0
      %3286 = vmatprep.subr.mxu0 0.0
      %3287 = vmatpush1.msra.mxu0 0.0
      %3288 = vmatprep.subr.mxu0 0.0
      %3289 = vmatpush1.msra.mxu0 0.0
      %3290 = vmatprep.subr.mxu0 0.0
      %3291 = vmatpush1.msra.mxu0 0.0
      %3292 = vmatprep.subr.mxu0 0.0
      %3293 = vmatpush1.msra.mxu0 0.0
      %3294 = vmatprep.subr.mxu0 0.0
      %3295 = vmatpush1.msra.mxu0 0.0
      %3296 = vmatprep.subr.mxu0 0.0
      %3297 = vmatpush1.msra.mxu0 0.0
      %3298 = vmatprep.subr.mxu0 0.0
      %3299 = vmatpush1.msra.mxu0 0.0
      %3300 = vmatprep.subr.mxu0 0.0
      %3301 = vmatpush1.msra.mxu0 0.0
      %3302 = vmatprep.subr.mxu0 0.0
      %3303 = vmatpush1.msra.mxu0 0.0
      %3304 = vmatprep.subr.mxu0 0.0
      %3305 = vmatpush1.msra.mxu0 0.0
      %3306 = vmatprep.subr.mxu0 0.0
      %3307 = vmatpush1.msra.mxu0 0.0
      %3308 = vmatprep.subr.mxu0 0.0
      %3309 = vmatpush1.msra.mxu0 0.0
      %3310 = vmatprep.subr.mxu0 0.0
      %3311 = vmatpush1.msra.mxu0 0.0
      %3312 = vmatprep.subr.mxu0 0.0
      %3313 = vmatpush1.msra.mxu0 0.0
      %3314 = vmatprep.mubr.f32.mxu0 0.0
      %3315 = vmatmul.mubr.f32.gmra.mrb[0].mxu0 %v3242
      %v3316 = vpop.f32.mrb[0].mxu0
      %v3317 = vadd.f32 0.0, %v3316
      %v3318 = vpop.f32.mrb[0].mxu0
      %3319 = vmatprep.mubr.f32.mxu0 0.0
      %3320 = vmatmul.mubr.f32.gmra.mrb[0].mxu0 %v3245
      %v3321 = vpop.f32.mrb[0].mxu0
      %v3322 = vadd.f32 0.0, %v3321
      %v3323 = vpop.f32.mrb[0].mxu0
      %3324 = vmatprep.mubr.f32.mxu0 0.0
      %3325 = vmatmul.mubr.f32.gmra.mrb[0].mxu0 %v3248
      %v3326 = vpop.f32.mrb[0].mxu0
      %v3327 = vadd.f32 0.0, %v3326
      %v3328 = vpop.f32.mrb[0].mxu0
      %3329 = vdwg.mxu0
      %v3330 = vadd.f32 %v3218, %v3317
      %v3331 = vadd.f32 %v3223, %v3322
      %v3332 = vadd.f32 %v3228, %v3327
      %s3333 = scalar_lea.vmem %s10, 72
      %v3334 = vld [vmem:[%s3333] sm:$0xff]
      %v3335 = vld [vmem:[%s3333 + $0x8] sm:$0xff]
      %v3336 = vld [vmem:[%s3333 + $0x10] sm:$0x3f]
      %3337 = vrot.lane.b32.xlu0 %v3036, 125
      %v3338 = vpop.permute.xlu0 %3337
      %3339 = vrot.lane.b32.xlu0 %v3037, 125
      %v3340 = vpop.permute.xlu0 %3339
      %v3344 = vsel %vm1338, %v3334, 0
      %v3347 = vsel %vm1338, %v3335, 0
      %v3350 = vsel %vm1338, %v3336, 0
      %3352 = vmatprep.subr.mxu0 0.0
      %3353 = vmatpush1.msra.mxu0 %v3338
      %3354 = vmatprep.subr.mxu0 0.0
      %3355 = vmatpush1.msra.mxu0 %v3340
      %3356 = vmatprep.subr.mxu0 0.0
      %3357 = vmatpush1.msra.mxu0 0.0
      %3358 = vmatprep.subr.mxu0 0.0
      %3359 = vmatpush1.msra.mxu0 0.0
      %3360 = vmatprep.subr.mxu0 0.0
      %3361 = vmatpush1.msra.mxu0 0.0
      %3362 = vmatprep.subr.mxu0 0.0
      %3363 = vmatpush1.msra.mxu0 0.0
      %3364 = vmatprep.subr.mxu0 0.0
      %3365 = vmatpush1.msra.mxu0 0.0
      %3366 = vmatprep.subr.mxu0 0.0
      %3367 = vmatpush1.msra.mxu0 0.0
      %3368 = vmatprep.subr.mxu0 0.0
      %3369 = vmatpush1.msra.mxu0 0.0
      %3370 = vmatprep.subr.mxu0 0.0
      %3371 = vmatpush1.msra.mxu0 0.0
      %3372 = vmatprep.subr.mxu0 0.0
      %3373 = vmatpush1.msra.mxu0 0.0
      %3374 = vmatprep.subr.mxu0 0.0
      %3375 = vmatpush1.msra.mxu0 0.0
      %3376 = vmatprep.subr.mxu0 0.0
      %3377 = vmatpush1.msra.mxu0 0.0
      %3378 = vmatprep.subr.mxu0 0.0
      %3379 = vmatpush1.msra.mxu0 0.0
      %3380 = vmatprep.subr.mxu0 0.0
      %3381 = vmatpush1.msra.mxu0 0.0
      %3382 = vmatprep.subr.mxu0 0.0
      %3383 = vmatpush1.msra.mxu0 0.0
      %3384 = vmatprep.subr.mxu0 0.0
      %3385 = vmatpush1.msra.mxu0 0.0
      %3386 = vmatprep.subr.mxu0 0.0
      %3387 = vmatpush1.msra.mxu0 0.0
      %3388 = vmatprep.subr.mxu0 0.0
      %3389 = vmatpush1.msra.mxu0 0.0
      %3390 = vmatprep.subr.mxu0 0.0
      %3391 = vmatpush1.msra.mxu0 0.0
      %3392 = vmatprep.subr.mxu0 0.0
      %3393 = vmatpush1.msra.mxu0 0.0
      %3394 = vmatprep.subr.mxu0 0.0
      %3395 = vmatpush1.msra.mxu0 0.0
      %3396 = vmatprep.subr.mxu0 0.0
      %3397 = vmatpush1.msra.mxu0 0.0
      %3398 = vmatprep.subr.mxu0 0.0
      %3399 = vmatpush1.msra.mxu0 0.0
      %3400 = vmatprep.subr.mxu0 0.0
      %3401 = vmatpush1.msra.mxu0 0.0
      %3402 = vmatprep.subr.mxu0 0.0
      %3403 = vmatpush1.msra.mxu0 0.0
      %3404 = vmatprep.subr.mxu0 0.0
      %3405 = vmatpush1.msra.mxu0 0.0
      %3406 = vmatprep.subr.mxu0 0.0
      %3407 = vmatpush1.msra.mxu0 0.0
      %3408 = vmatprep.subr.mxu0 0.0
      %3409 = vmatpush1.msra.mxu0 0.0
      %3410 = vmatprep.subr.mxu0 0.0
      %3411 = vmatpush1.msra.mxu0 0.0
      %3412 = vmatprep.subr.mxu0 0.0
      %3413 = vmatpush1.msra.mxu0 0.0
      %3414 = vmatprep.subr.mxu0 0.0
      %3415 = vmatpush1.msra.mxu0 0.0
      %3416 = vmatprep.mubr.f32.mxu0 0.0
      %3417 = vmatmul.mubr.f32.gmra.mrb[0].mxu0 %v3344
      %v3418 = vpop.f32.mrb[0].mxu0
      %v3419 = vadd.f32 0.0, %v3418
      %v3420 = vpop.f32.mrb[0].mxu0
      %3421 = vmatprep.mubr.f32.mxu0 0.0
      %3422 = vmatmul.mubr.f32.gmra.mrb[0].mxu0 %v3347
      %v3423 = vpop.f32.mrb[0].mxu0
      %v3424 = vadd.f32 0.0, %v3423
      %v3425 = vpop.f32.mrb[0].mxu0
      %3426 = vmatprep.mubr.f32.mxu0 0.0
      %3427 = vmatmul.mubr.f32.gmra.mrb[0].mxu0 %v3350
      %v3428 = vpop.f32.mrb[0].mxu0
      %v3429 = vadd.f32 0.0, %v3428
      %v3430 = vpop.f32.mrb[0].mxu0
      %3431 = vdwg.mxu0
      %v3432 = vadd.f32 %v3330, %v3419
      %v3433 = vadd.f32 %v3331, %v3424
      %v3434 = vadd.f32 %v3332, %v3429
      %s3435 = scalar_lea.vmem %s10, 96
      %v3436 = vld [vmem:[%s3435] sm:$0xff]
      %v3437 = vld [vmem:[%s3435 + $0x8] sm:$0xff]
      %v3438 = vld [vmem:[%s3435 + $0x10] sm:$0x3f]
      %3439 = vrot.lane.b32.xlu0 %v3036, 124
      %v3440 = vpop.permute.xlu0 %3439
      %3441 = vrot.lane.b32.xlu0 %v3037, 124
      %v3442 = vpop.permute.xlu0 %3441
      %v3446 = vsel %vm1338, %v3436, 0
      %v3449 = vsel %vm1338, %v3437, 0
      %v3452 = vsel %vm1338, %v3438, 0
      %3454 = vmatprep.subr.mxu0 0.0
      %3455 = vmatpush1.msra.mxu0 %v3440
      %3456 = vmatprep.subr.mxu0 0.0
      %3457 = vmatpush1.msra.mxu0 %v3442
      %3458 = vmatprep.subr.mxu0 0.0
      %3459 = vmatpush1.msra.mxu0 0.0
      %3460 = vmatprep.subr.mxu0 0.0
      %3461 = vmatpush1.msra.mxu0 0.0
      %3462 = vmatprep.subr.mxu0 0.0
      %3463 = vmatpush1.msra.mxu0 0.0
      %3464 = vmatprep.subr.mxu0 0.0
      %3465 = vmatpush1.msra.mxu0 0.0
      %3466 = vmatprep.subr.mxu0 0.0
      %3467 = vmatpush1.msra.mxu0 0.0
      %3468 = vmatprep.subr.mxu0 0.0
      %3469 = vmatpush1.msra.mxu0 0.0
      %3470 = vmatprep.subr.mxu0 0.0
      %3471 = vmatpush1.msra.mxu0 0.0
      %3472 = vmatprep.subr.mxu0 0.0
      %3473 = vmatpush1.msra.mxu0 0.0
      %3474 = vmatprep.subr.mxu0 0.0
      %3475 = vmatpush1.msra.mxu0 0.0
      %3476 = vmatprep.subr.mxu0 0.0
      %3477 = vmatpush1.msra.mxu0 0.0
      %3478 = vmatprep.subr.mxu0 0.0
      %3479 = vmatpush1.msra.mxu0 0.0
      %3480 = vmatprep.subr.mxu0 0.0
      %3481 = vmatpush1.msra.mxu0 0.0
      %3482 = vmatprep.subr.mxu0 0.0
      %3483 = vmatpush1.msra.mxu0 0.0
      %3484 = vmatprep.subr.mxu0 0.0
      %3485 = vmatpush1.msra.mxu0 0.0
      %3486 = vmatprep.subr.mxu0 0.0
      %3487 = vmatpush1.msra.mxu0 0.0
      %3488 = vmatprep.subr.mxu0 0.0
      %3489 = vmatpush1.msra.mxu0 0.0
      %3490 = vmatprep.subr.mxu0 0.0
      %3491 = vmatpush1.msra.mxu0 0.0
      %3492 = vmatprep.subr.mxu0 0.0
      %3493 = vmatpush1.msra.mxu0 0.0
      %3494 = vmatprep.subr.mxu0 0.0
      %3495 = vmatpush1.msra.mxu0 0.0
      %3496 = vmatprep.subr.mxu0 0.0
      %3497 = vmatpush1.msra.mxu0 0.0
      %3498 = vmatprep.subr.mxu0 0.0
      %3499 = vmatpush1.msra.mxu0 0.0
      %3500 = vmatprep.subr.mxu0 0.0
      %3501 = vmatpush1.msra.mxu0 0.0
      %3502 = vmatprep.subr.mxu0 0.0
      %3503 = vmatpush1.msra.mxu0 0.0
      %3504 = vmatprep.subr.mxu0 0.0
      %3505 = vmatpush1.msra.mxu0 0.0
      %3506 = vmatprep.subr.mxu0 0.0
      %3507 = vmatpush1.msra.mxu0 0.0
      %3508 = vmatprep.subr.mxu0 0.0
      %3509 = vmatpush1.msra.mxu0 0.0
      %3510 = vmatprep.subr.mxu0 0.0
      %3511 = vmatpush1.msra.mxu0 0.0
      %3512 = vmatprep.subr.mxu0 0.0
      %3513 = vmatpush1.msra.mxu0 0.0
      %3514 = vmatprep.subr.mxu0 0.0
      %3515 = vmatpush1.msra.mxu0 0.0
      %3516 = vmatprep.subr.mxu0 0.0
      %3517 = vmatpush1.msra.mxu0 0.0
      %3518 = vmatprep.mubr.f32.mxu0 0.0
      %3519 = vmatmul.mubr.f32.gmra.mrb[0].mxu0 %v3446
      %v3520 = vpop.f32.mrb[0].mxu0
      %v3521 = vadd.f32 0.0, %v3520
      %v3522 = vpop.f32.mrb[0].mxu0
      %3523 = vmatprep.mubr.f32.mxu0 0.0
      %3524 = vmatmul.mubr.f32.gmra.mrb[0].mxu0 %v3449
      %v3525 = vpop.f32.mrb[0].mxu0
      %v3526 = vadd.f32 0.0, %v3525
      %v3527 = vpop.f32.mrb[0].mxu0
      %3528 = vmatprep.mubr.f32.mxu0 0.0
      %3529 = vmatmul.mubr.f32.gmra.mrb[0].mxu0 %v3452
      %v3530 = vpop.f32.mrb[0].mxu0
      %v3531 = vadd.f32 0.0, %v3530
      %v3532 = vpop.f32.mrb[0].mxu0
      %3533 = vdwg.mxu0
      %v3534 = vadd.f32 %v3432, %v3521
      %v3535 = vadd.f32 %v3433, %v3526
      %v3536 = vadd.f32 %v3434, %v3531
      %s3537 = scalar_lea.vmem %s10, 120
      %v3538 = vld [vmem:[%s3537] sm:$0xff]
      %v3539 = vld [vmem:[%s3537 + $0x8] sm:$0xff]
      %v3540 = vld [vmem:[%s3537 + $0x10] sm:$0x3f]
      %3541 = vrot.lane.b32.xlu0 %v3036, 123
      %v3542 = vpop.permute.xlu0 %3541
      %3543 = vrot.lane.b32.xlu0 %v3037, 123
      %v3544 = vpop.permute.xlu0 %3543
      %v3548 = vsel %vm1338, %v3538, 0
      %v3551 = vsel %vm1338, %v3539, 0
      %v3554 = vsel %vm1338, %v3540, 0
      %3556 = vmatprep.subr.mxu0 0.0
      %3557 = vmatpush1.msra.mxu0 %v3542
      %3558 = vmatprep.subr.mxu0 0.0
      %3559 = vmatpush1.msra.mxu0 %v3544
      %3560 = vmatprep.subr.mxu0 0.0
      %3561 = vmatpush1.msra.mxu0 0.0
      %3562 = vmatprep.subr.mxu0 0.0
      %3563 = vmatpush1.msra.mxu0 0.0
      %3564 = vmatprep.subr.mxu0 0.0
      %3565 = vmatpush1.msra.mxu0 0.0
      %3566 = vmatprep.subr.mxu0 0.0
      %3567 = vmatpush1.msra.mxu0 0.0
      %3568 = vmatprep.subr.mxu0 0.0
      %3569 = vmatpush1.msra.mxu0 0.0
      %3570 = vmatprep.subr.mxu0 0.0
      %3571 = vmatpush1.msra.mxu0 0.0
      %3572 = vmatprep.subr.mxu0 0.0
      %3573 = vmatpush1.msra.mxu0 0.0
      %3574 = vmatprep.subr.mxu0 0.0
      %3575 = vmatpush1.msra.mxu0 0.0
      %3576 = vmatprep.subr.mxu0 0.0
      %3577 = vmatpush1.msra.mxu0 0.0
      %3578 = vmatprep.subr.mxu0 0.0
      %3579 = vmatpush1.msra.mxu0 0.0
      %3580 = vmatprep.subr.mxu0 0.0
      %3581 = vmatpush1.msra.mxu0 0.0
      %3582 = vmatprep.subr.mxu0 0.0
      %3583 = vmatpush1.msra.mxu0 0.0
      %3584 = vmatprep.subr.mxu0 0.0
      %3585 = vmatpush1.msra.mxu0 0.0
      %3586 = vmatprep.subr.mxu0 0.0
      %3587 = vmatpush1.msra.mxu0 0.0
      %3588 = vmatprep.subr.mxu0 0.0
      %3589 = vmatpush1.msra.mxu0 0.0
      %3590 = vmatprep.subr.mxu0 0.0
      %3591 = vmatpush1.msra.mxu0 0.0
      %3592 = vmatprep.subr.mxu0 0.0
      %3593 = vmatpush1.msra.mxu0 0.0
      %3594 = vmatprep.subr.mxu0 0.0
      %3595 = vmatpush1.msra.mxu0 0.0
      %3596 = vmatprep.subr.mxu0 0.0
      %3597 = vmatpush1.msra.mxu0 0.0
      %3598 = vmatprep.subr.mxu0 0.0
      %3599 = vmatpush1.msra.mxu0 0.0
      %3600 = vmatprep.subr.mxu0 0.0
      %3601 = vmatpush1.msra.mxu0 0.0
      %3602 = vmatprep.subr.mxu0 0.0
      %3603 = vmatpush1.msra.mxu0 0.0
      %3604 = vmatprep.subr.mxu0 0.0
      %3605 = vmatpush1.msra.mxu0 0.0
      %3606 = vmatprep.subr.mxu0 0.0
      %3607 = vmatpush1.msra.mxu0 0.0
      %3608 = vmatprep.subr.mxu0 0.0
      %3609 = vmatpush1.msra.mxu0 0.0
      %3610 = vmatprep.subr.mxu0 0.0
      %3611 = vmatpush1.msra.mxu0 0.0
      %3612 = vmatprep.subr.mxu0 0.0
      %3613 = vmatpush1.msra.mxu0 0.0
      %3614 = vmatprep.subr.mxu0 0.0
      %3615 = vmatpush1.msra.mxu0 0.0
      %3616 = vmatprep.subr.mxu0 0.0
      %3617 = vmatpush1.msra.mxu0 0.0
      %3618 = vmatprep.subr.mxu0 0.0
      %3619 = vmatpush1.msra.mxu0 0.0
      %3620 = vmatprep.mubr.f32.mxu0 0.0
      %3621 = vmatmul.mubr.f32.gmra.mrb[0].mxu0 %v3548
      %v3622 = vpop.f32.mrb[0].mxu0
      %v3623 = vadd.f32 0.0, %v3622
      %v3624 = vpop.f32.mrb[0].mxu0
      %3625 = vmatprep.mubr.f32.mxu0 0.0
      %3626 = vmatmul.mubr.f32.gmra.mrb[0].mxu0 %v3551
      %v3627 = vpop.f32.mrb[0].mxu0
      %v3628 = vadd.f32 0.0, %v3627
      %v3629 = vpop.f32.mrb[0].mxu0
      %3630 = vmatprep.mubr.f32.mxu0 0.0
      %3631 = vmatmul.mubr.f32.gmra.mrb[0].mxu0 %v3554
      %v3632 = vpop.f32.mrb[0].mxu0
      %v3633 = vadd.f32 0.0, %v3632
      %v3634 = vpop.f32.mrb[0].mxu0
      %3635 = vdwg.mxu0
      %v3636 = vadd.f32 %v3534, %v3623
      %v3637 = vadd.f32 %v3535, %v3628
      %v3638 = vadd.f32 %v3536, %v3633
      %s3639 = scalar_lea.vmem %s10, 144
      %v3640 = vld [vmem:[%s3639] sm:$0xff]
      %v3641 = vld [vmem:[%s3639 + $0x8] sm:$0xff]
      %v3642 = vld [vmem:[%s3639 + $0x10] sm:$0x3f]
      %3643 = vrot.lane.b32.xlu0 %v3036, 122
      %v3644 = vpop.permute.xlu0 %3643
      %3645 = vrot.lane.b32.xlu0 %v3037, 122
      %v3646 = vpop.permute.xlu0 %3645
      %v3650 = vsel %vm1338, %v3640, 0
      %v3653 = vsel %vm1338, %v3641, 0
      %v3656 = vsel %vm1338, %v3642, 0
      %3658 = vmatprep.subr.mxu0 0.0
      %3659 = vmatpush1.msra.mxu0 %v3644
      %3660 = vmatprep.subr.mxu0 0.0
      %3661 = vmatpush1.msra.mxu0 %v3646
      %3662 = vmatprep.subr.mxu0 0.0
      %3663 = vmatpush1.msra.mxu0 0.0
      %3664 = vmatprep.subr.mxu0 0.0
      %3665 = vmatpush1.msra.mxu0 0.0
      %3666 = vmatprep.subr.mxu0 0.0
      %3667 = vmatpush1.msra.mxu0 0.0
      %3668 = vmatprep.subr.mxu0 0.0
      %3669 = vmatpush1.msra.mxu0 0.0
      %3670 = vmatprep.subr.mxu0 0.0
      %3671 = vmatpush1.msra.mxu0 0.0
      %3672 = vmatprep.subr.mxu0 0.0
      %3673 = vmatpush1.msra.mxu0 0.0
      %3674 = vmatprep.subr.mxu0 0.0
      %3675 = vmatpush1.msra.mxu0 0.0
      %3676 = vmatprep.subr.mxu0 0.0
      %3677 = vmatpush1.msra.mxu0 0.0
      %3678 = vmatprep.subr.mxu0 0.0
      %3679 = vmatpush1.msra.mxu0 0.0
      %3680 = vmatprep.subr.mxu0 0.0
      %3681 = vmatpush1.msra.mxu0 0.0
      %3682 = vmatprep.subr.mxu0 0.0
      %3683 = vmatpush1.msra.mxu0 0.0
      %3684 = vmatprep.subr.mxu0 0.0
      %3685 = vmatpush1.msra.mxu0 0.0
      %3686 = vmatprep.subr.mxu0 0.0
      %3687 = vmatpush1.msra.mxu0 0.0
      %3688 = vmatprep.subr.mxu0 0.0
      %3689 = vmatpush1.msra.mxu0 0.0
      %3690 = vmatprep.subr.mxu0 0.0
      %3691 = vmatpush1.msra.mxu0 0.0
      %3692 = vmatprep.subr.mxu0 0.0
      %3693 = vmatpush1.msra.mxu0 0.0
      %3694 = vmatprep.subr.mxu0 0.0
      %3695 = vmatpush1.msra.mxu0 0.0
      %3696 = vmatprep.subr.mxu0 0.0
      %3697 = vmatpush1.msra.mxu0 0.0
      %3698 = vmatprep.subr.mxu0 0.0
      %3699 = vmatpush1.msra.mxu0 0.0
      %3700 = vmatprep.subr.mxu0 0.0
      %3701 = vmatpush1.msra.mxu0 0.0
      %3702 = vmatprep.subr.mxu0 0.0
      %3703 = vmatpush1.msra.mxu0 0.0
      %3704 = vmatprep.subr.mxu0 0.0
      %3705 = vmatpush1.msra.mxu0 0.0
      %3706 = vmatprep.subr.mxu0 0.0
      %3707 = vmatpush1.msra.mxu0 0.0
      %3708 = vmatprep.subr.mxu0 0.0
      %3709 = vmatpush1.msra.mxu0 0.0
      %3710 = vmatprep.subr.mxu0 0.0
      %3711 = vmatpush1.msra.mxu0 0.0
      %3712 = vmatprep.subr.mxu0 0.0
      %3713 = vmatpush1.msra.mxu0 0.0
      %3714 = vmatprep.subr.mxu0 0.0
      %3715 = vmatpush1.msra.mxu0 0.0
      %3716 = vmatprep.subr.mxu0 0.0
      %3717 = vmatpush1.msra.mxu0 0.0
      %3718 = vmatprep.subr.mxu0 0.0
      %3719 = vmatpush1.msra.mxu0 0.0
      %3720 = vmatprep.subr.mxu0 0.0
      %3721 = vmatpush1.msra.mxu0 0.0
      %3722 = vmatprep.mubr.f32.mxu0 0.0
      %3723 = vmatmul.mubr.f32.gmra.mrb[0].mxu0 %v3650
      %v3724 = vpop.f32.mrb[0].mxu0
      %v3725 = vadd.f32 0.0, %v3724
      %v3726 = vpop.f32.mrb[0].mxu0
      %3727 = vmatprep.mubr.f32.mxu0 0.0
      %3728 = vmatmul.mubr.f32.gmra.mrb[0].mxu0 %v3653
      %v3729 = vpop.f32.mrb[0].mxu0
      %v3730 = vadd.f32 0.0, %v3729
      %v3731 = vpop.f32.mrb[0].mxu0
      %3732 = vmatprep.mubr.f32.mxu0 0.0
      %3733 = vmatmul.mubr.f32.gmra.mrb[0].mxu0 %v3656
      %v3734 = vpop.f32.mrb[0].mxu0
      %v3735 = vadd.f32 0.0, %v3734
      %v3736 = vpop.f32.mrb[0].mxu0
      %3737 = vdwg.mxu0
      %v3738 = vadd.f32 %v3636, %v3725
      %v3739 = vadd.f32 %v3637, %v3730
      %v3740 = vadd.f32 %v3638, %v3735
      %s3741 = scalar_lea.vmem %s10, 168
      %v3742 = vld [vmem:[%s3741] sm:$0xff]
      %v3743 = vld [vmem:[%s3741 + $0x8] sm:$0xff]
      %v3744 = vld [vmem:[%s3741 + $0x10] sm:$0x3f]
      %3745 = vrot.lane.b32.xlu0 %v3036, 121
      %v3746 = vpop.permute.xlu0 %3745
      %3747 = vrot.lane.b32.xlu0 %v3037, 121
      %v3748 = vpop.permute.xlu0 %3747
      %v3752 = vsel %vm1338, %v3742, 0
      %v3755 = vsel %vm1338, %v3743, 0
      %v3758 = vsel %vm1338, %v3744, 0
      %3760 = vmatprep.subr.mxu0 0.0
      %3761 = vmatpush1.msra.mxu0 %v3746
      %3762 = vmatprep.subr.mxu0 0.0
      %3763 = vmatpush1.msra.mxu0 %v3748
      %3764 = vmatprep.subr.mxu0 0.0
      %3765 = vmatpush1.msra.mxu0 0.0
      %3766 = vmatprep.subr.mxu0 0.0
      %3767 = vmatpush1.msra.mxu0 0.0
      %3768 = vmatprep.subr.mxu0 0.0
      %3769 = vmatpush1.msra.mxu0 0.0
      %3770 = vmatprep.subr.mxu0 0.0
      %3771 = vmatpush1.msra.mxu0 0.0
      %3772 = vmatprep.subr.mxu0 0.0
      %3773 = vmatpush1.msra.mxu0 0.0
      %3774 = vmatprep.subr.mxu0 0.0
      %3775 = vmatpush1.msra.mxu0 0.0
      %3776 = vmatprep.subr.mxu0 0.0
      %3777 = vmatpush1.msra.mxu0 0.0
      %3778 = vmatprep.subr.mxu0 0.0
      %3779 = vmatpush1.msra.mxu0 0.0
      %3780 = vmatprep.subr.mxu0 0.0
      %3781 = vmatpush1.msra.mxu0 0.0
      %3782 = vmatprep.subr.mxu0 0.0
      %3783 = vmatpush1.msra.mxu0 0.0
      %3784 = vmatprep.subr.mxu0 0.0
      %3785 = vmatpush1.msra.mxu0 0.0
      %3786 = vmatprep.subr.mxu0 0.0
      %3787 = vmatpush1.msra.mxu0 0.0
      %3788 = vmatprep.subr.mxu0 0.0
      %3789 = vmatpush1.msra.mxu0 0.0
      %3790 = vmatprep.subr.mxu0 0.0
      %3791 = vmatpush1.msra.mxu0 0.0
      %3792 = vmatprep.subr.mxu0 0.0
      %3793 = vmatpush1.msra.mxu0 0.0
      %3794 = vmatprep.subr.mxu0 0.0
      %3795 = vmatpush1.msra.mxu0 0.0
      %3796 = vmatprep.subr.mxu0 0.0
      %3797 = vmatpush1.msra.mxu0 0.0
      %3798 = vmatprep.subr.mxu0 0.0
      %3799 = vmatpush1.msra.mxu0 0.0
      %3800 = vmatprep.subr.mxu0 0.0
      %3801 = vmatpush1.msra.mxu0 0.0
      %3802 = vmatprep.subr.mxu0 0.0
      %3803 = vmatpush1.msra.mxu0 0.0
      %3804 = vmatprep.subr.mxu0 0.0
      %3805 = vmatpush1.msra.mxu0 0.0
      %3806 = vmatprep.subr.mxu0 0.0
      %3807 = vmatpush1.msra.mxu0 0.0
      %3808 = vmatprep.subr.mxu0 0.0
      %3809 = vmatpush1.msra.mxu0 0.0
      %3810 = vmatprep.subr.mxu0 0.0
      %3811 = vmatpush1.msra.mxu0 0.0
      %3812 = vmatprep.subr.mxu0 0.0
      %3813 = vmatpush1.msra.mxu0 0.0
      %3814 = vmatprep.subr.mxu0 0.0
      %3815 = vmatpush1.msra.mxu0 0.0
      %3816 = vmatprep.subr.mxu0 0.0
      %3817 = vmatpush1.msra.mxu0 0.0
      %3818 = vmatprep.subr.mxu0 0.0
      %3819 = vmatpush1.msra.mxu0 0.0
      %3820 = vmatprep.subr.mxu0 0.0
      %3821 = vmatpush1.msra.mxu0 0.0
      %3822 = vmatprep.subr.mxu0 0.0
      %3823 = vmatpush1.msra.mxu0 0.0
      %3824 = vmatprep.mubr.f32.mxu0 0.0
      %3825 = vmatmul.mubr.f32.gmra.mrb[0].mxu0 %v3752
      %v3826 = vpop.f32.mrb[0].mxu0
      %v3827 = vadd.f32 0.0, %v3826
      %v3828 = vpop.f32.mrb[0].mxu0
      %3829 = vmatprep.mubr.f32.mxu0 0.0
      %3830 = vmatmul.mubr.f32.gmra.mrb[0].mxu0 %v3755
      %v3831 = vpop.f32.mrb[0].mxu0
      %v3832 = vadd.f32 0.0, %v3831
      %v3833 = vpop.f32.mrb[0].mxu0
      %3834 = vmatprep.mubr.f32.mxu0 0.0
      %3835 = vmatmul.mubr.f32.gmra.mrb[0].mxu0 %v3758
      %v3836 = vpop.f32.mrb[0].mxu0
      %v3837 = vadd.f32 0.0, %v3836
      %v3838 = vpop.f32.mrb[0].mxu0
      %3839 = vdwg.mxu0
      %v3840 = vadd.f32 %v3738, %v3827
      %v3841 = vadd.f32 %v3739, %v3832
      %v3842 = vadd.f32 %v3740, %v3837
      %v3843 = vld [vmem:[%s11] sm:$0xff]
      %v3844 = vld [vmem:[%s11 + $0x8] sm:$0xff]
      %v3845 = vld [vmem:[%s11 + $0x10] sm:$0x3f]
      %3847 = vset.pattern.permute.xlu0 0
      %3848 = vperm.xlu0 %3847, %v3843
      %v3849 = vpop.permute.xlu0 %3848
      %3852 = vset.pattern.permute.xlu0 0
      %3853 = vperm.xlu0 %3852, %v3844
      %v3854 = vpop.permute.xlu0 %3853
      %3857 = vset.pattern.permute.xlu0 0
      %3858 = vperm.xlu0 %3857, %v3845
      %v3859 = vpop.permute.xlu0 %3858
      %v3861 = vmul.f32 %v3840, %v3849
      %v3862 = vmul.f32 %v3841, %v3854
      %v3863 = vmul.f32 %v3842, %v3859
      %v3864 = vld [vmem:[%s12] sm:$0xff]
      %v3865 = vld [vmem:[%s12 + $0x8] sm:$0xff]
      %v3866 = vld [vmem:[%s12 + $0x10] sm:$0x3f]
      %3868 = vset.pattern.permute.xlu0 0
      %3869 = vperm.xlu0 %3868, %v3864
      %v3870 = vpop.permute.xlu0 %3869
      %3873 = vset.pattern.permute.xlu0 0
      %3874 = vperm.xlu0 %3873, %v3865
      %v3875 = vpop.permute.xlu0 %3874
      %3878 = vset.pattern.permute.xlu0 0
      %3879 = vperm.xlu0 %3878, %v3866
      %v3880 = vpop.permute.xlu0 %3879
      %v3882 = vadd.f32 %v3861, %v3870
      %v3883 = vadd.f32 %v3862, %v3875
      %v3884 = vadd.f32 %v3863, %v3880
      %vm3885 = vcmp.lt.s32.totalorder %v2085, 5
      %vm3886 = vmand %vm2086, %vm3885
      %vm3887 = vmand %vm3886, %vm2090
      %vm3888 = vmand %vm3886, %vm2091
      %v3889 = vsel %vm3887, 1.0, 0.0
      %v3890 = vsel %vm3888, 1.0, 0.0
      %vm3891 = vmand %vm3886, %vm2100
      %vm3892 = vmand %vm3886, %vm2101
      %v3893 = vsel %vm3891, 1.0, 0.0
      %v3894 = vsel %vm3892, 1.0, 0.0
      %vm3895 = vcmask 89088
      %v3897 = vsel %vm3895, %v3882, 0
      %v3900 = vsel %vm3895, %v3883, 0
      %v3903 = vsel %vm3895, %v3884, 0
      %vm3905 = vcmask 1042432
      %v3907 = vsel %vm3905, %v3890, 0
      %3909 = vmatprep.subr.mxu0 0.0
      %3910 = vmatpush1.msra.mxu0 %v3889
      %3911 = vmatprep.subr.mxu0 0.0
      %3912 = vmatpush1.msra.mxu0 %v3907
      %3913 = vmatprep.subr.mxu0 0.0
      %3914 = vmatpush1.msra.mxu0 0.0
      %3915 = vmatprep.subr.mxu0 0.0
      %3916 = vmatpush1.msra.mxu0 0.0
      %3917 = vmatprep.subr.mxu0 0.0
      %3918 = vmatpush1.msra.mxu0 0.0
      %3919 = vmatprep.subr.mxu0 0.0
      %3920 = vmatpush1.msra.mxu0 0.0
      %3921 = vmatprep.subr.mxu0 0.0
      %3922 = vmatpush1.msra.mxu0 0.0
      %3923 = vmatprep.subr.mxu0 0.0
      %3924 = vmatpush1.msra.mxu0 0.0
      %3925 = vmatprep.subr.mxu0 0.0
      %3926 = vmatpush1.msra.mxu0 0.0
      %3927 = vmatprep.subr.mxu0 0.0
      %3928 = vmatpush1.msra.mxu0 0.0
      %3929 = vmatprep.subr.mxu0 0.0
      %3930 = vmatpush1.msra.mxu0 0.0
      %3931 = vmatprep.subr.mxu0 0.0
      %3932 = vmatpush1.msra.mxu0 0.0
      %3933 = vmatprep.subr.mxu0 0.0
      %3934 = vmatpush1.msra.mxu0 0.0
      %3935 = vmatprep.subr.mxu0 0.0
      %3936 = vmatpush1.msra.mxu0 0.0
      %3937 = vmatprep.subr.mxu0 0.0
      %3938 = vmatpush1.msra.mxu0 0.0
      %3939 = vmatprep.subr.mxu0 0.0
      %3940 = vmatpush1.msra.mxu0 0.0
      %3941 = vmatprep.subr.mxu0 0.0
      %3942 = vmatpush1.msra.mxu0 0.0
      %3943 = vmatprep.subr.mxu0 0.0
      %3944 = vmatpush1.msra.mxu0 0.0
      %3945 = vmatprep.subr.mxu0 0.0
      %3946 = vmatpush1.msra.mxu0 0.0
      %3947 = vmatprep.subr.mxu0 0.0
      %3948 = vmatpush1.msra.mxu0 0.0
      %3949 = vmatprep.subr.mxu0 0.0
      %3950 = vmatpush1.msra.mxu0 0.0
      %3951 = vmatprep.subr.mxu0 0.0
      %3952 = vmatpush1.msra.mxu0 0.0
      %3953 = vmatprep.subr.mxu0 0.0
      %3954 = vmatpush1.msra.mxu0 0.0
      %3955 = vmatprep.subr.mxu0 0.0
      %3956 = vmatpush1.msra.mxu0 0.0
      %3957 = vmatprep.subr.mxu0 0.0
      %3958 = vmatpush1.msra.mxu0 0.0
      %3959 = vmatprep.subr.mxu0 0.0
      %3960 = vmatpush1.msra.mxu0 0.0
      %3961 = vmatprep.subr.mxu0 0.0
      %3962 = vmatpush1.msra.mxu0 0.0
      %3963 = vmatprep.subr.mxu0 0.0
      %3964 = vmatpush1.msra.mxu0 0.0
      %3965 = vmatprep.subr.mxu0 0.0
      %3966 = vmatpush1.msra.mxu0 0.0
      %3967 = vmatprep.subr.mxu0 0.0
      %3968 = vmatpush1.msra.mxu0 0.0
      %3969 = vmatprep.subr.mxu0 0.0
      %3970 = vmatpush1.msra.mxu0 0.0
      %3971 = vmatprep.subr.mxu0 0.0
      %3972 = vmatpush1.msra.mxu0 0.0
      %3973 = vmatprep.mubr.f32.mxu0 0.0
      %3974 = vmatmul.mubr.f32.gmra.mrb[0].mxu0 %v3897
      %v3975 = vpop.f32.mrb[0].mxu0
      %v3976 = vadd.f32 0.0, %v3975
      %v3977 = vpop.f32.mrb[0].mxu0
      %3978 = vmatprep.mubr.f32.mxu0 0.0
      %3979 = vmatmul.mubr.f32.gmra.mrb[0].mxu0 %v3900
      %v3980 = vpop.f32.mrb[0].mxu0
      %v3981 = vadd.f32 0.0, %v3980
      %v3982 = vpop.f32.mrb[0].mxu0
      %3983 = vmatprep.mubr.f32.mxu0 0.0
      %3984 = vmatmul.mubr.f32.gmra.mrb[0].mxu0 %v3903
      %v3985 = vpop.f32.mrb[0].mxu0
      %v3986 = vadd.f32 0.0, %v3985
      %v3987 = vpop.f32.mrb[0].mxu0
      %3988 = vdwg.mxu0
      %v3990 = vsel %vm3905, %v3894, 0
      %3992 = vmatprep.subr.mxu0 0.0
      %3993 = vmatpush1.msra.mxu0 %v3893
      %3994 = vmatprep.subr.mxu0 0.0
      %3995 = vmatpush1.msra.mxu0 %v3990
      %3996 = vmatprep.subr.mxu0 0.0
      %3997 = vmatpush1.msra.mxu0 0.0
      %3998 = vmatprep.subr.mxu0 0.0
      %3999 = vmatpush1.msra.mxu0 0.0
      %4000 = vmatprep.subr.mxu0 0.0
      %4001 = vmatpush1.msra.mxu0 0.0
      %4002 = vmatprep.subr.mxu0 0.0
      %4003 = vmatpush1.msra.mxu0 0.0
      %4004 = vmatprep.subr.mxu0 0.0
      %4005 = vmatpush1.msra.mxu0 0.0
      %4006 = vmatprep.subr.mxu0 0.0
      %4007 = vmatpush1.msra.mxu0 0.0
      %4008 = vmatprep.subr.mxu0 0.0
      %4009 = vmatpush1.msra.mxu0 0.0
      %4010 = vmatprep.subr.mxu0 0.0
      %4011 = vmatpush1.msra.mxu0 0.0
      %4012 = vmatprep.subr.mxu0 0.0
      %4013 = vmatpush1.msra.mxu0 0.0
      %4014 = vmatprep.subr.mxu0 0.0
      %4015 = vmatpush1.msra.mxu0 0.0
      %4016 = vmatprep.subr.mxu0 0.0
      %4017 = vmatpush1.msra.mxu0 0.0
      %4018 = vmatprep.subr.mxu0 0.0
      %4019 = vmatpush1.msra.mxu0 0.0
      %4020 = vmatprep.subr.mxu0 0.0
      %4021 = vmatpush1.msra.mxu0 0.0
      %4022 = vmatprep.subr.mxu0 0.0
      %4023 = vmatpush1.msra.mxu0 0.0
      %4024 = vmatprep.subr.mxu0 0.0
      %4025 = vmatpush1.msra.mxu0 0.0
      %4026 = vmatprep.subr.mxu0 0.0
      %4027 = vmatpush1.msra.mxu0 0.0
      %4028 = vmatprep.subr.mxu0 0.0
      %4029 = vmatpush1.msra.mxu0 0.0
      %4030 = vmatprep.subr.mxu0 0.0
      %4031 = vmatpush1.msra.mxu0 0.0
      %4032 = vmatprep.subr.mxu0 0.0
      %4033 = vmatpush1.msra.mxu0 0.0
      %4034 = vmatprep.subr.mxu0 0.0
      %4035 = vmatpush1.msra.mxu0 0.0
      %4036 = vmatprep.subr.mxu0 0.0
      %4037 = vmatpush1.msra.mxu0 0.0
      %4038 = vmatprep.subr.mxu0 0.0
      %4039 = vmatpush1.msra.mxu0 0.0
      %4040 = vmatprep.subr.mxu0 0.0
      %4041 = vmatpush1.msra.mxu0 0.0
      %4042 = vmatprep.subr.mxu0 0.0
      %4043 = vmatpush1.msra.mxu0 0.0
      %4044 = vmatprep.subr.mxu0 0.0
      %4045 = vmatpush1.msra.mxu0 0.0
      %4046 = vmatprep.subr.mxu0 0.0
      %4047 = vmatpush1.msra.mxu0 0.0
      %4048 = vmatprep.subr.mxu0 0.0
      %4049 = vmatpush1.msra.mxu0 0.0
      %4050 = vmatprep.subr.mxu0 0.0
      %4051 = vmatpush1.msra.mxu0 0.0
      %4052 = vmatprep.subr.mxu0 0.0
      %4053 = vmatpush1.msra.mxu0 0.0
      %4054 = vmatprep.subr.mxu0 0.0
      %4055 = vmatpush1.msra.mxu0 0.0
      %4056 = vmatprep.mubr.f32.mxu0 0.0
      %4057 = vmatmul.mubr.f32.gmra.mrb[0].mxu0 %v3897
      %v4058 = vpop.f32.mrb[0].mxu0
      %v4059 = vadd.f32 0.0, %v4058
      %v4060 = vpop.f32.mrb[0].mxu0
      %4061 = vmatprep.mubr.f32.mxu0 0.0
      %4062 = vmatmul.mubr.f32.gmra.mrb[0].mxu0 %v3900
      %v4063 = vpop.f32.mrb[0].mxu0
      %v4064 = vadd.f32 0.0, %v4063
      %v4065 = vpop.f32.mrb[0].mxu0
      %4066 = vmatprep.mubr.f32.mxu0 0.0
      %4067 = vmatmul.mubr.f32.gmra.mrb[0].mxu0 %v3903
      %v4068 = vpop.f32.mrb[0].mxu0
      %v4069 = vadd.f32 0.0, %v4068
      %v4070 = vpop.f32.mrb[0].mxu0
      %4071 = vdwg.mxu0
      %v4072 = vmax.f32 %v3976, %v4059
      %v4073 = vmax.f32 %v3981, %v4064
      %v4074 = vmax.f32 %v3986, %v4069
      %v4075 = vmax.f32 %v4072, 0.0
      %v4076 = vmax.f32 %v4073, 0.0
      %v4077 = vmax.f32 %v4074, 0.0
      %v4078 = vld [vmem:[%s13] sm:$0xff]
      %v4079 = vld [vmem:[%s13 + $0x8] sm:$0xff]
      %v4080 = vld [vmem:[%s13 + $0x10] sm:$0x3f]
      %s4081 = scalar_lea.vmem %s13, 24
      %v4082 = vld [vmem:[%s4081] sm:$0xff]
      %v4083 = vld [vmem:[%s4081 + $0x8] sm:$0xff]
      %v4084 = vld [vmem:[%s4081 + $0x10] sm:$0x3f]
      %4088 = vrot.lane.b32.xlu0 %v4075, 127
      %v4089 = vpop.permute.xlu0 %4088
      %4090 = vrot.lane.b32.xlu0 %v4076, 127
      %v4091 = vpop.permute.xlu0 %4090
      %4092 = vrot.lane.b32.xlu0 %v4077, 127
      %v4093 = vpop.permute.xlu0 %4092
      %vm4096 = vcmask 179200
      %v4098 = vsel %vm4096, %v4082, 0
      %v4101 = vsel %vm4096, %v4083, 0
      %v4104 = vsel %vm4096, %v4084, 0
      %vm4106 = vcmask 1045504
      %v4107 = vsel %vm4106, %v4093, 0
      %4109 = vmatprep.subr.mxu0 0.0
      %4110 = vmatpush1.msra.mxu0 %v4089
      %4111 = vmatprep.subr.mxu0 0.0
      %4112 = vmatpush1.msra.mxu0 %v4091
      %4113 = vmatprep.subr.mxu0 0.0
      %4114 = vmatpush1.msra.mxu0 %v4107
      %4115 = vmatprep.subr.mxu0 0.0
      %4116 = vmatpush1.msra.mxu0 0.0
      %4117 = vmatprep.subr.mxu0 0.0
      %4118 = vmatpush1.msra.mxu0 0.0
      %4119 = vmatprep.subr.mxu0 0.0
      %4120 = vmatpush1.msra.mxu0 0.0
      %4121 = vmatprep.subr.mxu0 0.0
      %4122 = vmatpush1.msra.mxu0 0.0
      %4123 = vmatprep.subr.mxu0 0.0
      %4124 = vmatpush1.msra.mxu0 0.0
      %4125 = vmatprep.subr.mxu0 0.0
      %4126 = vmatpush1.msra.mxu0 0.0
      %4127 = vmatprep.subr.mxu0 0.0
      %4128 = vmatpush1.msra.mxu0 0.0
      %4129 = vmatprep.subr.mxu0 0.0
      %4130 = vmatpush1.msra.mxu0 0.0
      %4131 = vmatprep.subr.mxu0 0.0
      %4132 = vmatpush1.msra.mxu0 0.0
      %4133 = vmatprep.subr.mxu0 0.0
      %4134 = vmatpush1.msra.mxu0 0.0
      %4135 = vmatprep.subr.mxu0 0.0
      %4136 = vmatpush1.msra.mxu0 0.0
      %4137 = vmatprep.subr.mxu0 0.0
      %4138 = vmatpush1.msra.mxu0 0.0
      %4139 = vmatprep.subr.mxu0 0.0
      %4140 = vmatpush1.msra.mxu0 0.0
      %4141 = vmatprep.subr.mxu0 0.0
      %4142 = vmatpush1.msra.mxu0 0.0
      %4143 = vmatprep.subr.mxu0 0.0
      %4144 = vmatpush1.msra.mxu0 0.0
      %4145 = vmatprep.subr.mxu0 0.0
      %4146 = vmatpush1.msra.mxu0 0.0
      %4147 = vmatprep.subr.mxu0 0.0
      %4148 = vmatpush1.msra.mxu0 0.0
      %4149 = vmatprep.subr.mxu0 0.0
      %4150 = vmatpush1.msra.mxu0 0.0
      %4151 = vmatprep.subr.mxu0 0.0
      %4152 = vmatpush1.msra.mxu0 0.0
      %4153 = vmatprep.subr.mxu0 0.0
      %4154 = vmatpush1.msra.mxu0 0.0
      %4155 = vmatprep.subr.mxu0 0.0
      %4156 = vmatpush1.msra.mxu0 0.0
      %4157 = vmatprep.subr.mxu0 0.0
      %4158 = vmatpush1.msra.mxu0 0.0
      %4159 = vmatprep.subr.mxu0 0.0
      %4160 = vmatpush1.msra.mxu0 0.0
      %4161 = vmatprep.subr.mxu0 0.0
      %4162 = vmatpush1.msra.mxu0 0.0
      %4163 = vmatprep.subr.mxu0 0.0
      %4164 = vmatpush1.msra.mxu0 0.0
      %4165 = vmatprep.subr.mxu0 0.0
      %4166 = vmatpush1.msra.mxu0 0.0
      %4167 = vmatprep.subr.mxu0 0.0
      %4168 = vmatpush1.msra.mxu0 0.0
      %4169 = vmatprep.subr.mxu0 0.0
      %4170 = vmatpush1.msra.mxu0 0.0
      %4171 = vmatprep.subr.mxu0 0.0
      %4172 = vmatpush1.msra.mxu0 0.0
      %4173 = vmatprep.mubr.f32.mxu0 0.0
      %4174 = vmatmul.mubr.f32.gmra.mrb[0].mxu0 %v4098
      %v4175 = vpop.f32.mrb[0].mxu0
      %v4176 = vadd.f32 0.0, %v4175
      %v4177 = vpop.f32.mrb[0].mxu0
      %4178 = vmatprep.mubr.f32.mxu0 0.0
      %4179 = vmatmul.mubr.f32.gmra.mrb[0].mxu0 %v4101
      %v4180 = vpop.f32.mrb[0].mxu0
      %v4181 = vadd.f32 0.0, %v4180
      %v4182 = vpop.f32.mrb[0].mxu0
      %4183 = vmatprep.mubr.f32.mxu0 0.0
      %4184 = vmatmul.mubr.f32.gmra.mrb[0].mxu0 %v4104
      %v4185 = vpop.f32.mrb[0].mxu0
      %v4186 = vadd.f32 0.0, %v4185
      %v4187 = vpop.f32.mrb[0].mxu0
      %4188 = vdwg.mxu0
      %v4190 = vsel %vm4096, %v4078, 0
      %v4193 = vsel %vm4096, %v4079, 0
      %v4196 = vsel %vm4096, %v4080, 0
      %v4198 = vsel %vm4106, %v4077, 0
      %4200 = vmatprep.subr.mxu0 0.0
      %4201 = vmatpush1.msra.mxu0 %v4075
      %4202 = vmatprep.subr.mxu0 0.0
      %4203 = vmatpush1.msra.mxu0 %v4076
      %4204 = vmatprep.subr.mxu0 0.0
      %4205 = vmatpush1.msra.mxu0 %v4198
      %4206 = vmatprep.subr.mxu0 0.0
      %4207 = vmatpush1.msra.mxu0 0.0
      %4208 = vmatprep.subr.mxu0 0.0
      %4209 = vmatpush1.msra.mxu0 0.0
      %4210 = vmatprep.subr.mxu0 0.0
      %4211 = vmatpush1.msra.mxu0 0.0
      %4212 = vmatprep.subr.mxu0 0.0
      %4213 = vmatpush1.msra.mxu0 0.0
      %4214 = vmatprep.subr.mxu0 0.0
      %4215 = vmatpush1.msra.mxu0 0.0
      %4216 = vmatprep.subr.mxu0 0.0
      %4217 = vmatpush1.msra.mxu0 0.0
      %4218 = vmatprep.subr.mxu0 0.0
      %4219 = vmatpush1.msra.mxu0 0.0
      %4220 = vmatprep.subr.mxu0 0.0
      %4221 = vmatpush1.msra.mxu0 0.0
      %4222 = vmatprep.subr.mxu0 0.0
      %4223 = vmatpush1.msra.mxu0 0.0
      %4224 = vmatprep.subr.mxu0 0.0
      %4225 = vmatpush1.msra.mxu0 0.0
      %4226 = vmatprep.subr.mxu0 0.0
      %4227 = vmatpush1.msra.mxu0 0.0
      %4228 = vmatprep.subr.mxu0 0.0
      %4229 = vmatpush1.msra.mxu0 0.0
      %4230 = vmatprep.subr.mxu0 0.0
      %4231 = vmatpush1.msra.mxu0 0.0
      %4232 = vmatprep.subr.mxu0 0.0
      %4233 = vmatpush1.msra.mxu0 0.0
      %4234 = vmatprep.subr.mxu0 0.0
      %4235 = vmatpush1.msra.mxu0 0.0
      %4236 = vmatprep.subr.mxu0 0.0
      %4237 = vmatpush1.msra.mxu0 0.0
      %4238 = vmatprep.subr.mxu0 0.0
      %4239 = vmatpush1.msra.mxu0 0.0
      %4240 = vmatprep.subr.mxu0 0.0
      %4241 = vmatpush1.msra.mxu0 0.0
      %4242 = vmatprep.subr.mxu0 0.0
      %4243 = vmatpush1.msra.mxu0 0.0
      %4244 = vmatprep.subr.mxu0 0.0
      %4245 = vmatpush1.msra.mxu0 0.0
      %4246 = vmatprep.subr.mxu0 0.0
      %4247 = vmatpush1.msra.mxu0 0.0
      %4248 = vmatprep.subr.mxu0 0.0
      %4249 = vmatpush1.msra.mxu0 0.0
      %4250 = vmatprep.subr.mxu0 0.0
      %4251 = vmatpush1.msra.mxu0 0.0
      %4252 = vmatprep.subr.mxu0 0.0
      %4253 = vmatpush1.msra.mxu0 0.0
      %4254 = vmatprep.subr.mxu0 0.0
      %4255 = vmatpush1.msra.mxu0 0.0
      %4256 = vmatprep.subr.mxu0 0.0
      %4257 = vmatpush1.msra.mxu0 0.0
      %4258 = vmatprep.subr.mxu0 0.0
      %4259 = vmatpush1.msra.mxu0 0.0
      %4260 = vmatprep.subr.mxu0 0.0
      %4261 = vmatpush1.msra.mxu0 0.0
      %4262 = vmatprep.subr.mxu0 0.0
      %4263 = vmatpush1.msra.mxu0 0.0
      %4264 = vmatprep.mubr.f32.mxu0 0.0
      %4265 = vmatmul.mubr.f32.gmra.mrb[0].mxu0 %v4190
      %v4266 = vpop.f32.mrb[0].mxu0
      %v4267 = vadd.f32 %v4176, %v4266
      %v4268 = vpop.f32.mrb[0].mxu0
      %4269 = vmatprep.mubr.f32.mxu0 0.0
      %4270 = vmatmul.mubr.f32.gmra.mrb[0].mxu0 %v4193
      %v4271 = vpop.f32.mrb[0].mxu0
      %v4272 = vadd.f32 %v4181, %v4271
      %v4273 = vpop.f32.mrb[0].mxu0
      %4274 = vmatprep.mubr.f32.mxu0 0.0
      %4275 = vmatmul.mubr.f32.gmra.mrb[0].mxu0 %v4196
      %v4276 = vpop.f32.mrb[0].mxu0
      %v4277 = vadd.f32 %v4186, %v4276
      %v4278 = vpop.f32.mrb[0].mxu0
      %4279 = vdwg.mxu0
      %s4280 = scalar_lea.vmem %s13, 48
      %v4281 = vld [vmem:[%s4280] sm:$0xff]
      %v4282 = vld [vmem:[%s4280 + $0x8] sm:$0xff]
      %v4283 = vld [vmem:[%s4280 + $0x10] sm:$0x3f]
      %4284 = vrot.lane.b32.xlu0 %v4075, 126
      %v4285 = vpop.permute.xlu0 %4284
      %4286 = vrot.lane.b32.xlu0 %v4076, 126
      %v4287 = vpop.permute.xlu0 %4286
      %4288 = vrot.lane.b32.xlu0 %v4077, 126
      %v4289 = vpop.permute.xlu0 %4288
      %v4293 = vsel %vm4096, %v4281, 0
      %v4296 = vsel %vm4096, %v4282, 0
      %v4299 = vsel %vm4096, %v4283, 0
      %v4301 = vsel %vm4106, %v4289, 0
      %4303 = vmatprep.subr.mxu0 0.0
      %4304 = vmatpush1.msra.mxu0 %v4285
      %4305 = vmatprep.subr.mxu0 0.0
      %4306 = vmatpush1.msra.mxu0 %v4287
      %4307 = vmatprep.subr.mxu0 0.0
      %4308 = vmatpush1.msra.mxu0 %v4301
      %4309 = vmatprep.subr.mxu0 0.0
      %4310 = vmatpush1.msra.mxu0 0.0
      %4311 = vmatprep.subr.mxu0 0.0
      %4312 = vmatpush1.msra.mxu0 0.0
      %4313 = vmatprep.subr.mxu0 0.0
      %4314 = vmatpush1.msra.mxu0 0.0
      %4315 = vmatprep.subr.mxu0 0.0
      %4316 = vmatpush1.msra.mxu0 0.0
      %4317 = vmatprep.subr.mxu0 0.0
      %4318 = vmatpush1.msra.mxu0 0.0
      %4319 = vmatprep.subr.mxu0 0.0
      %4320 = vmatpush1.msra.mxu0 0.0
      %4321 = vmatprep.subr.mxu0 0.0
      %4322 = vmatpush1.msra.mxu0 0.0
      %4323 = vmatprep.subr.mxu0 0.0
      %4324 = vmatpush1.msra.mxu0 0.0
      %4325 = vmatprep.subr.mxu0 0.0
      %4326 = vmatpush1.msra.mxu0 0.0
      %4327 = vmatprep.subr.mxu0 0.0
      %4328 = vmatpush1.msra.mxu0 0.0
      %4329 = vmatprep.subr.mxu0 0.0
      %4330 = vmatpush1.msra.mxu0 0.0
      %4331 = vmatprep.subr.mxu0 0.0
      %4332 = vmatpush1.msra.mxu0 0.0
      %4333 = vmatprep.subr.mxu0 0.0
      %4334 = vmatpush1.msra.mxu0 0.0
      %4335 = vmatprep.subr.mxu0 0.0
      %4336 = vmatpush1.msra.mxu0 0.0
      %4337 = vmatprep.subr.mxu0 0.0
      %4338 = vmatpush1.msra.mxu0 0.0
      %4339 = vmatprep.subr.mxu0 0.0
      %4340 = vmatpush1.msra.mxu0 0.0
      %4341 = vmatprep.subr.mxu0 0.0
      %4342 = vmatpush1.msra.mxu0 0.0
      %4343 = vmatprep.subr.mxu0 0.0
      %4344 = vmatpush1.msra.mxu0 0.0
      %4345 = vmatprep.subr.mxu0 0.0
      %4346 = vmatpush1.msra.mxu0 0.0
      %4347 = vmatprep.subr.mxu0 0.0
      %4348 = vmatpush1.msra.mxu0 0.0
      %4349 = vmatprep.subr.mxu0 0.0
      %4350 = vmatpush1.msra.mxu0 0.0
      %4351 = vmatprep.subr.mxu0 0.0
      %4352 = vmatpush1.msra.mxu0 0.0
      %4353 = vmatprep.subr.mxu0 0.0
      %4354 = vmatpush1.msra.mxu0 0.0
      %4355 = vmatprep.subr.mxu0 0.0
      %4356 = vmatpush1.msra.mxu0 0.0
      %4357 = vmatprep.subr.mxu0 0.0
      %4358 = vmatpush1.msra.mxu0 0.0
      %4359 = vmatprep.subr.mxu0 0.0
      %4360 = vmatpush1.msra.mxu0 0.0
      %4361 = vmatprep.subr.mxu0 0.0
      %4362 = vmatpush1.msra.mxu0 0.0
      %4363 = vmatprep.subr.mxu0 0.0
      %4364 = vmatpush1.msra.mxu0 0.0
      %4365 = vmatprep.subr.mxu0 0.0
      %4366 = vmatpush1.msra.mxu0 0.0
      %4367 = vmatprep.mubr.f32.mxu0 0.0
      %4368 = vmatmul.mubr.f32.gmra.mrb[0].mxu0 %v4293
      %v4369 = vpop.f32.mrb[0].mxu0
      %v4370 = vadd.f32 0.0, %v4369
      %v4371 = vpop.f32.mrb[0].mxu0
      %4372 = vmatprep.mubr.f32.mxu0 0.0
      %4373 = vmatmul.mubr.f32.gmra.mrb[0].mxu0 %v4296
      %v4374 = vpop.f32.mrb[0].mxu0
      %v4375 = vadd.f32 0.0, %v4374
      %v4376 = vpop.f32.mrb[0].mxu0
      %4377 = vmatprep.mubr.f32.mxu0 0.0
      %4378 = vmatmul.mubr.f32.gmra.mrb[0].mxu0 %v4299
      %v4379 = vpop.f32.mrb[0].mxu0
      %v4380 = vadd.f32 0.0, %v4379
      %v4381 = vpop.f32.mrb[0].mxu0
      %4382 = vdwg.mxu0
      %v4383 = vadd.f32 %v4267, %v4370
      %v4384 = vadd.f32 %v4272, %v4375
      %v4385 = vadd.f32 %v4277, %v4380
      %s4386 = scalar_lea.vmem %s13, 72
      %v4387 = vld [vmem:[%s4386] sm:$0xff]
      %v4388 = vld [vmem:[%s4386 + $0x8] sm:$0xff]
      %v4389 = vld [vmem:[%s4386 + $0x10] sm:$0x3f]
      %4390 = vrot.lane.b32.xlu0 %v4075, 125
      %v4391 = vpop.permute.xlu0 %4390
      %4392 = vrot.lane.b32.xlu0 %v4076, 125
      %v4393 = vpop.permute.xlu0 %4392
      %4394 = vrot.lane.b32.xlu0 %v4077, 125
      %v4395 = vpop.permute.xlu0 %4394
      %v4399 = vsel %vm4096, %v4387, 0
      %v4402 = vsel %vm4096, %v4388, 0
      %v4405 = vsel %vm4096, %v4389, 0
      %v4407 = vsel %vm4106, %v4395, 0
      %4409 = vmatprep.subr.mxu0 0.0
      %4410 = vmatpush1.msra.mxu0 %v4391
      %4411 = vmatprep.subr.mxu0 0.0
      %4412 = vmatpush1.msra.mxu0 %v4393
      %4413 = vmatprep.subr.mxu0 0.0
      %4414 = vmatpush1.msra.mxu0 %v4407
      %4415 = vmatprep.subr.mxu0 0.0
      %4416 = vmatpush1.msra.mxu0 0.0
      %4417 = vmatprep.subr.mxu0 0.0
      %4418 = vmatpush1.msra.mxu0 0.0
      %4419 = vmatprep.subr.mxu0 0.0
      %4420 = vmatpush1.msra.mxu0 0.0
      %4421 = vmatprep.subr.mxu0 0.0
      %4422 = vmatpush1.msra.mxu0 0.0
      %4423 = vmatprep.subr.mxu0 0.0
      %4424 = vmatpush1.msra.mxu0 0.0
      %4425 = vmatprep.subr.mxu0 0.0
      %4426 = vmatpush1.msra.mxu0 0.0
      %4427 = vmatprep.subr.mxu0 0.0
      %4428 = vmatpush1.msra.mxu0 0.0
      %4429 = vmatprep.subr.mxu0 0.0
      %4430 = vmatpush1.msra.mxu0 0.0
      %4431 = vmatprep.subr.mxu0 0.0
      %4432 = vmatpush1.msra.mxu0 0.0
      %4433 = vmatprep.subr.mxu0 0.0
      %4434 = vmatpush1.msra.mxu0 0.0
      %4435 = vmatprep.subr.mxu0 0.0
      %4436 = vmatpush1.msra.mxu0 0.0
      %4437 = vmatprep.subr.mxu0 0.0
      %4438 = vmatpush1.msra.mxu0 0.0
      %4439 = vmatprep.subr.mxu0 0.0
      %4440 = vmatpush1.msra.mxu0 0.0
      %4441 = vmatprep.subr.mxu0 0.0
      %4442 = vmatpush1.msra.mxu0 0.0
      %4443 = vmatprep.subr.mxu0 0.0
      %4444 = vmatpush1.msra.mxu0 0.0
      %4445 = vmatprep.subr.mxu0 0.0
      %4446 = vmatpush1.msra.mxu0 0.0
      %4447 = vmatprep.subr.mxu0 0.0
      %4448 = vmatpush1.msra.mxu0 0.0
      %4449 = vmatprep.subr.mxu0 0.0
      %4450 = vmatpush1.msra.mxu0 0.0
      %4451 = vmatprep.subr.mxu0 0.0
      %4452 = vmatpush1.msra.mxu0 0.0
      %4453 = vmatprep.subr.mxu0 0.0
      %4454 = vmatpush1.msra.mxu0 0.0
      %4455 = vmatprep.subr.mxu0 0.0
      %4456 = vmatpush1.msra.mxu0 0.0
      %4457 = vmatprep.subr.mxu0 0.0
      %4458 = vmatpush1.msra.mxu0 0.0
      %4459 = vmatprep.subr.mxu0 0.0
      %4460 = vmatpush1.msra.mxu0 0.0
      %4461 = vmatprep.subr.mxu0 0.0
      %4462 = vmatpush1.msra.mxu0 0.0
      %4463 = vmatprep.subr.mxu0 0.0
      %4464 = vmatpush1.msra.mxu0 0.0
      %4465 = vmatprep.subr.mxu0 0.0
      %4466 = vmatpush1.msra.mxu0 0.0
      %4467 = vmatprep.subr.mxu0 0.0
      %4468 = vmatpush1.msra.mxu0 0.0
      %4469 = vmatprep.subr.mxu0 0.0
      %4470 = vmatpush1.msra.mxu0 0.0
      %4471 = vmatprep.subr.mxu0 0.0
      %4472 = vmatpush1.msra.mxu0 0.0
      %4473 = vmatprep.mubr.f32.mxu0 0.0
      %4474 = vmatmul.mubr.f32.gmra.mrb[0].mxu0 %v4399
      %v4475 = vpop.f32.mrb[0].mxu0
      %v4476 = vadd.f32 0.0, %v4475
      %v4477 = vpop.f32.mrb[0].mxu0
      %4478 = vmatprep.mubr.f32.mxu0 0.0
      %4479 = vmatmul.mubr.f32.gmra.mrb[0].mxu0 %v4402
      %v4480 = vpop.f32.mrb[0].mxu0
      %v4481 = vadd.f32 0.0, %v4480
      %v4482 = vpop.f32.mrb[0].mxu0
      %4483 = vmatprep.mubr.f32.mxu0 0.0
      %4484 = vmatmul.mubr.f32.gmra.mrb[0].mxu0 %v4405
      %v4485 = vpop.f32.mrb[0].mxu0
      %v4486 = vadd.f32 0.0, %v4485
      %v4487 = vpop.f32.mrb[0].mxu0
      %4488 = vdwg.mxu0
      %v4489 = vadd.f32 %v4383, %v4476
      %v4490 = vadd.f32 %v4384, %v4481
      %v4491 = vadd.f32 %v4385, %v4486
      %s4492 = scalar_lea.vmem %s13, 96
      %v4493 = vld [vmem:[%s4492] sm:$0xff]
      %v4494 = vld [vmem:[%s4492 + $0x8] sm:$0xff]
      %v4495 = vld [vmem:[%s4492 + $0x10] sm:$0x3f]
      %4496 = vrot.lane.b32.xlu0 %v4075, 124
      %v4497 = vpop.permute.xlu0 %4496
      %4498 = vrot.lane.b32.xlu0 %v4076, 124
      %v4499 = vpop.permute.xlu0 %4498
      %4500 = vrot.lane.b32.xlu0 %v4077, 124
      %v4501 = vpop.permute.xlu0 %4500
      %v4505 = vsel %vm4096, %v4493, 0
      %v4508 = vsel %vm4096, %v4494, 0
      %v4511 = vsel %vm4096, %v4495, 0
      %v4513 = vsel %vm4106, %v4501, 0
      %4515 = vmatprep.subr.mxu0 0.0
      %4516 = vmatpush1.msra.mxu0 %v4497
      %4517 = vmatprep.subr.mxu0 0.0
      %4518 = vmatpush1.msra.mxu0 %v4499
      %4519 = vmatprep.subr.mxu0 0.0
      %4520 = vmatpush1.msra.mxu0 %v4513
      %4521 = vmatprep.subr.mxu0 0.0
      %4522 = vmatpush1.msra.mxu0 0.0
      %4523 = vmatprep.subr.mxu0 0.0
      %4524 = vmatpush1.msra.mxu0 0.0
      %4525 = vmatprep.subr.mxu0 0.0
      %4526 = vmatpush1.msra.mxu0 0.0
      %4527 = vmatprep.subr.mxu0 0.0
      %4528 = vmatpush1.msra.mxu0 0.0
      %4529 = vmatprep.subr.mxu0 0.0
      %4530 = vmatpush1.msra.mxu0 0.0
      %4531 = vmatprep.subr.mxu0 0.0
      %4532 = vmatpush1.msra.mxu0 0.0
      %4533 = vmatprep.subr.mxu0 0.0
      %4534 = vmatpush1.msra.mxu0 0.0
      %4535 = vmatprep.subr.mxu0 0.0
      %4536 = vmatpush1.msra.mxu0 0.0
      %4537 = vmatprep.subr.mxu0 0.0
      %4538 = vmatpush1.msra.mxu0 0.0
      %4539 = vmatprep.subr.mxu0 0.0
      %4540 = vmatpush1.msra.mxu0 0.0
      %4541 = vmatprep.subr.mxu0 0.0
      %4542 = vmatpush1.msra.mxu0 0.0
      %4543 = vmatprep.subr.mxu0 0.0
      %4544 = vmatpush1.msra.mxu0 0.0
      %4545 = vmatprep.subr.mxu0 0.0
      %4546 = vmatpush1.msra.mxu0 0.0
      %4547 = vmatprep.subr.mxu0 0.0
      %4548 = vmatpush1.msra.mxu0 0.0
      %4549 = vmatprep.subr.mxu0 0.0
      %4550 = vmatpush1.msra.mxu0 0.0
      %4551 = vmatprep.subr.mxu0 0.0
      %4552 = vmatpush1.msra.mxu0 0.0
      %4553 = vmatprep.subr.mxu0 0.0
      %4554 = vmatpush1.msra.mxu0 0.0
      %4555 = vmatprep.subr.mxu0 0.0
      %4556 = vmatpush1.msra.mxu0 0.0
      %4557 = vmatprep.subr.mxu0 0.0
      %4558 = vmatpush1.msra.mxu0 0.0
      %4559 = vmatprep.subr.mxu0 0.0
      %4560 = vmatpush1.msra.mxu0 0.0
      %4561 = vmatprep.subr.mxu0 0.0
      %4562 = vmatpush1.msra.mxu0 0.0
      %4563 = vmatprep.subr.mxu0 0.0
      %4564 = vmatpush1.msra.mxu0 0.0
      %4565 = vmatprep.subr.mxu0 0.0
      %4566 = vmatpush1.msra.mxu0 0.0
      %4567 = vmatprep.subr.mxu0 0.0
      %4568 = vmatpush1.msra.mxu0 0.0
      %4569 = vmatprep.subr.mxu0 0.0
      %4570 = vmatpush1.msra.mxu0 0.0
      %4571 = vmatprep.subr.mxu0 0.0
      %4572 = vmatpush1.msra.mxu0 0.0
      %4573 = vmatprep.subr.mxu0 0.0
      %4574 = vmatpush1.msra.mxu0 0.0
      %4575 = vmatprep.subr.mxu0 0.0
      %4576 = vmatpush1.msra.mxu0 0.0
      %4577 = vmatprep.subr.mxu0 0.0
      %4578 = vmatpush1.msra.mxu0 0.0
      %4579 = vmatprep.mubr.f32.mxu0 0.0
      %4580 = vmatmul.mubr.f32.gmra.mrb[0].mxu0 %v4505
      %v4581 = vpop.f32.mrb[0].mxu0
      %v4582 = vadd.f32 0.0, %v4581
      %v4583 = vpop.f32.mrb[0].mxu0
      %4584 = vmatprep.mubr.f32.mxu0 0.0
      %4585 = vmatmul.mubr.f32.gmra.mrb[0].mxu0 %v4508
      %v4586 = vpop.f32.mrb[0].mxu0
      %v4587 = vadd.f32 0.0, %v4586
      %v4588 = vpop.f32.mrb[0].mxu0
      %4589 = vmatprep.mubr.f32.mxu0 0.0
      %4590 = vmatmul.mubr.f32.gmra.mrb[0].mxu0 %v4511
      %v4591 = vpop.f32.mrb[0].mxu0
      %v4592 = vadd.f32 0.0, %v4591
      %v4593 = vpop.f32.mrb[0].mxu0
      %4594 = vdwg.mxu0
      %v4595 = vadd.f32 %v4489, %v4582
      %v4596 = vadd.f32 %v4490, %v4587
      %v4597 = vadd.f32 %v4491, %v4592
      %s4598 = scalar_lea.vmem %s13, 120
      %v4599 = vld [vmem:[%s4598] sm:$0xff]
      %v4600 = vld [vmem:[%s4598 + $0x8] sm:$0xff]
      %v4601 = vld [vmem:[%s4598 + $0x10] sm:$0x3f]
      %4602 = vrot.lane.b32.xlu0 %v4075, 123
      %v4603 = vpop.permute.xlu0 %4602
      %4604 = vrot.lane.b32.xlu0 %v4076, 123
      %v4605 = vpop.permute.xlu0 %4604
      %4606 = vrot.lane.b32.xlu0 %v4077, 123
      %v4607 = vpop.permute.xlu0 %4606
      %v4611 = vsel %vm4096, %v4599, 0
      %v4614 = vsel %vm4096, %v4600, 0
      %v4617 = vsel %vm4096, %v4601, 0
      %v4619 = vsel %vm4106, %v4607, 0
      %4621 = vmatprep.subr.mxu0 0.0
      %4622 = vmatpush1.msra.mxu0 %v4603
      %4623 = vmatprep.subr.mxu0 0.0
      %4624 = vmatpush1.msra.mxu0 %v4605
      %4625 = vmatprep.subr.mxu0 0.0
      %4626 = vmatpush1.msra.mxu0 %v4619
      %4627 = vmatprep.subr.mxu0 0.0
      %4628 = vmatpush1.msra.mxu0 0.0
      %4629 = vmatprep.subr.mxu0 0.0
      %4630 = vmatpush1.msra.mxu0 0.0
      %4631 = vmatprep.subr.mxu0 0.0
      %4632 = vmatpush1.msra.mxu0 0.0
      %4633 = vmatprep.subr.mxu0 0.0
      %4634 = vmatpush1.msra.mxu0 0.0
      %4635 = vmatprep.subr.mxu0 0.0
      %4636 = vmatpush1.msra.mxu0 0.0
      %4637 = vmatprep.subr.mxu0 0.0
      %4638 = vmatpush1.msra.mxu0 0.0
      %4639 = vmatprep.subr.mxu0 0.0
      %4640 = vmatpush1.msra.mxu0 0.0
      %4641 = vmatprep.subr.mxu0 0.0
      %4642 = vmatpush1.msra.mxu0 0.0
      %4643 = vmatprep.subr.mxu0 0.0
      %4644 = vmatpush1.msra.mxu0 0.0
      %4645 = vmatprep.subr.mxu0 0.0
      %4646 = vmatpush1.msra.mxu0 0.0
      %4647 = vmatprep.subr.mxu0 0.0
      %4648 = vmatpush1.msra.mxu0 0.0
      %4649 = vmatprep.subr.mxu0 0.0
      %4650 = vmatpush1.msra.mxu0 0.0
      %4651 = vmatprep.subr.mxu0 0.0
      %4652 = vmatpush1.msra.mxu0 0.0
      %4653 = vmatprep.subr.mxu0 0.0
      %4654 = vmatpush1.msra.mxu0 0.0
      %4655 = vmatprep.subr.mxu0 0.0
      %4656 = vmatpush1.msra.mxu0 0.0
      %4657 = vmatprep.subr.mxu0 0.0
      %4658 = vmatpush1.msra.mxu0 0.0
      %4659 = vmatprep.subr.mxu0 0.0
      %4660 = vmatpush1.msra.mxu0 0.0
      %4661 = vmatprep.subr.mxu0 0.0
      %4662 = vmatpush1.msra.mxu0 0.0
      %4663 = vmatprep.subr.mxu0 0.0
      %4664 = vmatpush1.msra.mxu0 0.0
      %4665 = vmatprep.subr.mxu0 0.0
      %4666 = vmatpush1.msra.mxu0 0.0
      %4667 = vmatprep.subr.mxu0 0.0
      %4668 = vmatpush1.msra.mxu0 0.0
      %4669 = vmatprep.subr.mxu0 0.0
      %4670 = vmatpush1.msra.mxu0 0.0
      %4671 = vmatprep.subr.mxu0 0.0
      %4672 = vmatpush1.msra.mxu0 0.0
      %4673 = vmatprep.subr.mxu0 0.0
      %4674 = vmatpush1.msra.mxu0 0.0
      %4675 = vmatprep.subr.mxu0 0.0
      %4676 = vmatpush1.msra.mxu0 0.0
      %4677 = vmatprep.subr.mxu0 0.0
      %4678 = vmatpush1.msra.mxu0 0.0
      %4679 = vmatprep.subr.mxu0 0.0
      %4680 = vmatpush1.msra.mxu0 0.0
      %4681 = vmatprep.subr.mxu0 0.0
      %4682 = vmatpush1.msra.mxu0 0.0
      %4683 = vmatprep.subr.mxu0 0.0
      %4684 = vmatpush1.msra.mxu0 0.0
      %4685 = vmatprep.mubr.f32.mxu0 0.0
      %4686 = vmatmul.mubr.f32.gmra.mrb[0].mxu0 %v4611
      %v4687 = vpop.f32.mrb[0].mxu0
      %v4688 = vadd.f32 0.0, %v4687
      %v4689 = vpop.f32.mrb[0].mxu0
      %4690 = vmatprep.mubr.f32.mxu0 0.0
      %4691 = vmatmul.mubr.f32.gmra.mrb[0].mxu0 %v4614
      %v4692 = vpop.f32.mrb[0].mxu0
      %v4693 = vadd.f32 0.0, %v4692
      %v4694 = vpop.f32.mrb[0].mxu0
      %4695 = vmatprep.mubr.f32.mxu0 0.0
      %4696 = vmatmul.mubr.f32.gmra.mrb[0].mxu0 %v4617
      %v4697 = vpop.f32.mrb[0].mxu0
      %v4698 = vadd.f32 0.0, %v4697
      %v4699 = vpop.f32.mrb[0].mxu0
      %4700 = vdwg.mxu0
      %v4701 = vadd.f32 %v4595, %v4688
      %v4702 = vadd.f32 %v4596, %v4693
      %v4703 = vadd.f32 %v4597, %v4698
      %s4704 = scalar_lea.vmem %s13, 144
      %v4705 = vld [vmem:[%s4704] sm:$0xff]
      %v4706 = vld [vmem:[%s4704 + $0x8] sm:$0xff]
      %v4707 = vld [vmem:[%s4704 + $0x10] sm:$0x3f]
      %4708 = vrot.lane.b32.xlu0 %v4075, 122
      %v4709 = vpop.permute.xlu0 %4708
      %4710 = vrot.lane.b32.xlu0 %v4076, 122
      %v4711 = vpop.permute.xlu0 %4710
      %4712 = vrot.lane.b32.xlu0 %v4077, 122
      %v4713 = vpop.permute.xlu0 %4712
      %v4717 = vsel %vm4096, %v4705, 0
      %v4720 = vsel %vm4096, %v4706, 0
      %v4723 = vsel %vm4096, %v4707, 0
      %v4725 = vsel %vm4106, %v4713, 0
      %4727 = vmatprep.subr.mxu0 0.0
      %4728 = vmatpush1.msra.mxu0 %v4709
      %4729 = vmatprep.subr.mxu0 0.0
      %4730 = vmatpush1.msra.mxu0 %v4711
      %4731 = vmatprep.subr.mxu0 0.0
      %4732 = vmatpush1.msra.mxu0 %v4725
      %4733 = vmatprep.subr.mxu0 0.0
      %4734 = vmatpush1.msra.mxu0 0.0
      %4735 = vmatprep.subr.mxu0 0.0
      %4736 = vmatpush1.msra.mxu0 0.0
      %4737 = vmatprep.subr.mxu0 0.0
      %4738 = vmatpush1.msra.mxu0 0.0
      %4739 = vmatprep.subr.mxu0 0.0
      %4740 = vmatpush1.msra.mxu0 0.0
      %4741 = vmatprep.subr.mxu0 0.0
      %4742 = vmatpush1.msra.mxu0 0.0
      %4743 = vmatprep.subr.mxu0 0.0
      %4744 = vmatpush1.msra.mxu0 0.0
      %4745 = vmatprep.subr.mxu0 0.0
      %4746 = vmatpush1.msra.mxu0 0.0
      %4747 = vmatprep.subr.mxu0 0.0
      %4748 = vmatpush1.msra.mxu0 0.0
      %4749 = vmatprep.subr.mxu0 0.0
      %4750 = vmatpush1.msra.mxu0 0.0
      %4751 = vmatprep.subr.mxu0 0.0
      %4752 = vmatpush1.msra.mxu0 0.0
      %4753 = vmatprep.subr.mxu0 0.0
      %4754 = vmatpush1.msra.mxu0 0.0
      %4755 = vmatprep.subr.mxu0 0.0
      %4756 = vmatpush1.msra.mxu0 0.0
      %4757 = vmatprep.subr.mxu0 0.0
      %4758 = vmatpush1.msra.mxu0 0.0
      %4759 = vmatprep.subr.mxu0 0.0
      %4760 = vmatpush1.msra.mxu0 0.0
      %4761 = vmatprep.subr.mxu0 0.0
      %4762 = vmatpush1.msra.mxu0 0.0
      %4763 = vmatprep.subr.mxu0 0.0
      %4764 = vmatpush1.msra.mxu0 0.0
      %4765 = vmatprep.subr.mxu0 0.0
      %4766 = vmatpush1.msra.mxu0 0.0
      %4767 = vmatprep.subr.mxu0 0.0
      %4768 = vmatpush1.msra.mxu0 0.0
      %4769 = vmatprep.subr.mxu0 0.0
      %4770 = vmatpush1.msra.mxu0 0.0
      %4771 = vmatprep.subr.mxu0 0.0
      %4772 = vmatpush1.msra.mxu0 0.0
      %4773 = vmatprep.subr.mxu0 0.0
      %4774 = vmatpush1.msra.mxu0 0.0
      %4775 = vmatprep.subr.mxu0 0.0
      %4776 = vmatpush1.msra.mxu0 0.0
      %4777 = vmatprep.subr.mxu0 0.0
      %4778 = vmatpush1.msra.mxu0 0.0
      %4779 = vmatprep.subr.mxu0 0.0
      %4780 = vmatpush1.msra.mxu0 0.0
      %4781 = vmatprep.subr.mxu0 0.0
      %4782 = vmatpush1.msra.mxu0 0.0
      %4783 = vmatprep.subr.mxu0 0.0
      %4784 = vmatpush1.msra.mxu0 0.0
      %4785 = vmatprep.subr.mxu0 0.0
      %4786 = vmatpush1.msra.mxu0 0.0
      %4787 = vmatprep.subr.mxu0 0.0
      %4788 = vmatpush1.msra.mxu0 0.0
      %4789 = vmatprep.subr.mxu0 0.0
      %4790 = vmatpush1.msra.mxu0 0.0
      %4791 = vmatprep.mubr.f32.mxu0 0.0
      %4792 = vmatmul.mubr.f32.gmra.mrb[0].mxu0 %v4717
      %v4793 = vpop.f32.mrb[0].mxu0
      %v4794 = vadd.f32 0.0, %v4793
      %v4795 = vpop.f32.mrb[0].mxu0
      %4796 = vmatprep.mubr.f32.mxu0 0.0
      %4797 = vmatmul.mubr.f32.gmra.mrb[0].mxu0 %v4720
      %v4798 = vpop.f32.mrb[0].mxu0
      %v4799 = vadd.f32 0.0, %v4798
      %v4800 = vpop.f32.mrb[0].mxu0
      %4801 = vmatprep.mubr.f32.mxu0 0.0
      %4802 = vmatmul.mubr.f32.gmra.mrb[0].mxu0 %v4723
      %v4803 = vpop.f32.mrb[0].mxu0
      %v4804 = vadd.f32 0.0, %v4803
      %v4805 = vpop.f32.mrb[0].mxu0
      %4806 = vdwg.mxu0
      %v4807 = vadd.f32 %v4701, %v4794
      %v4808 = vadd.f32 %v4702, %v4799
      %v4809 = vadd.f32 %v4703, %v4804
      %s4810 = scalar_lea.vmem %s13, 168
      %v4811 = vld [vmem:[%s4810] sm:$0xff]
      %v4812 = vld [vmem:[%s4810 + $0x8] sm:$0xff]
      %v4813 = vld [vmem:[%s4810 + $0x10] sm:$0x3f]
      %4814 = vrot.lane.b32.xlu0 %v4075, 121
      %v4815 = vpop.permute.xlu0 %4814
      %4816 = vrot.lane.b32.xlu0 %v4076, 121
      %v4817 = vpop.permute.xlu0 %4816
      %4818 = vrot.lane.b32.xlu0 %v4077, 121
      %v4819 = vpop.permute.xlu0 %4818
      %v4823 = vsel %vm4096, %v4811, 0
      %v4826 = vsel %vm4096, %v4812, 0
      %v4829 = vsel %vm4096, %v4813, 0
      %v4831 = vsel %vm4106, %v4819, 0
      %4833 = vmatprep.subr.mxu0 0.0
      %4834 = vmatpush1.msra.mxu0 %v4815
      %4835 = vmatprep.subr.mxu0 0.0
      %4836 = vmatpush1.msra.mxu0 %v4817
      %4837 = vmatprep.subr.mxu0 0.0
      %4838 = vmatpush1.msra.mxu0 %v4831
      %4839 = vmatprep.subr.mxu0 0.0
      %4840 = vmatpush1.msra.mxu0 0.0
      %4841 = vmatprep.subr.mxu0 0.0
      %4842 = vmatpush1.msra.mxu0 0.0
      %4843 = vmatprep.subr.mxu0 0.0
      %4844 = vmatpush1.msra.mxu0 0.0
      %4845 = vmatprep.subr.mxu0 0.0
      %4846 = vmatpush1.msra.mxu0 0.0
      %4847 = vmatprep.subr.mxu0 0.0
      %4848 = vmatpush1.msra.mxu0 0.0
      %4849 = vmatprep.subr.mxu0 0.0
      %4850 = vmatpush1.msra.mxu0 0.0
      %4851 = vmatprep.subr.mxu0 0.0
      %4852 = vmatpush1.msra.mxu0 0.0
      %4853 = vmatprep.subr.mxu0 0.0
      %4854 = vmatpush1.msra.mxu0 0.0
      %4855 = vmatprep.subr.mxu0 0.0
      %4856 = vmatpush1.msra.mxu0 0.0
      %4857 = vmatprep.subr.mxu0 0.0
      %4858 = vmatpush1.msra.mxu0 0.0
      %4859 = vmatprep.subr.mxu0 0.0
      %4860 = vmatpush1.msra.mxu0 0.0
      %4861 = vmatprep.subr.mxu0 0.0
      %4862 = vmatpush1.msra.mxu0 0.0
      %4863 = vmatprep.subr.mxu0 0.0
      %4864 = vmatpush1.msra.mxu0 0.0
      %4865 = vmatprep.subr.mxu0 0.0
      %4866 = vmatpush1.msra.mxu0 0.0
      %4867 = vmatprep.subr.mxu0 0.0
      %4868 = vmatpush1.msra.mxu0 0.0
      %4869 = vmatprep.subr.mxu0 0.0
      %4870 = vmatpush1.msra.mxu0 0.0
      %4871 = vmatprep.subr.mxu0 0.0
      %4872 = vmatpush1.msra.mxu0 0.0
      %4873 = vmatprep.subr.mxu0 0.0
      %4874 = vmatpush1.msra.mxu0 0.0
      %4875 = vmatprep.subr.mxu0 0.0
      %4876 = vmatpush1.msra.mxu0 0.0
      %4877 = vmatprep.subr.mxu0 0.0
      %4878 = vmatpush1.msra.mxu0 0.0
      %4879 = vmatprep.subr.mxu0 0.0
      %4880 = vmatpush1.msra.mxu0 0.0
      %4881 = vmatprep.subr.mxu0 0.0
      %4882 = vmatpush1.msra.mxu0 0.0
      %4883 = vmatprep.subr.mxu0 0.0
      %4884 = vmatpush1.msra.mxu0 0.0
      %4885 = vmatprep.subr.mxu0 0.0
      %4886 = vmatpush1.msra.mxu0 0.0
      %4887 = vmatprep.subr.mxu0 0.0
      %4888 = vmatpush1.msra.mxu0 0.0
      %4889 = vmatprep.subr.mxu0 0.0
      %4890 = vmatpush1.msra.mxu0 0.0
      %4891 = vmatprep.subr.mxu0 0.0
      %4892 = vmatpush1.msra.mxu0 0.0
      %4893 = vmatprep.subr.mxu0 0.0
      %4894 = vmatpush1.msra.mxu0 0.0
      %4895 = vmatprep.subr.mxu0 0.0
      %4896 = vmatpush1.msra.mxu0 0.0
      %4897 = vmatprep.mubr.f32.mxu0 0.0
      %4898 = vmatmul.mubr.f32.gmra.mrb[0].mxu0 %v4823
      %v4899 = vpop.f32.mrb[0].mxu0
      %v4900 = vadd.f32 0.0, %v4899
      %v4901 = vpop.f32.mrb[0].mxu0
      %4902 = vmatprep.mubr.f32.mxu0 0.0
      %4903 = vmatmul.mubr.f32.gmra.mrb[0].mxu0 %v4826
      %v4904 = vpop.f32.mrb[0].mxu0
      %v4905 = vadd.f32 0.0, %v4904
      %v4906 = vpop.f32.mrb[0].mxu0
      %4907 = vmatprep.mubr.f32.mxu0 0.0
      %4908 = vmatmul.mubr.f32.gmra.mrb[0].mxu0 %v4829
      %v4909 = vpop.f32.mrb[0].mxu0
      %v4910 = vadd.f32 0.0, %v4909
      %v4911 = vpop.f32.mrb[0].mxu0
      %4912 = vdwg.mxu0
      %v4913 = vadd.f32 %v4807, %v4900
      %v4914 = vadd.f32 %v4808, %v4905
      %v4915 = vadd.f32 %v4809, %v4910
      %v4916 = vld [vmem:[%s14] sm:$0xff]
      %v4917 = vld [vmem:[%s14 + $0x8] sm:$0xff]
      %v4918 = vld [vmem:[%s14 + $0x10] sm:$0x3f]
      %4920 = vset.pattern.permute.xlu0 0
      %4921 = vperm.xlu0 %4920, %v4916
      %v4922 = vpop.permute.xlu0 %4921
      %4925 = vset.pattern.permute.xlu0 0
      %4926 = vperm.xlu0 %4925, %v4917
      %v4927 = vpop.permute.xlu0 %4926
      %4930 = vset.pattern.permute.xlu0 0
      %4931 = vperm.xlu0 %4930, %v4918
      %v4932 = vpop.permute.xlu0 %4931
      %v4934 = vmul.f32 %v4913, %v4922
      %v4935 = vmul.f32 %v4914, %v4927
      %v4936 = vmul.f32 %v4915, %v4932
      %v4937 = vld [vmem:[%s15] sm:$0xff]
      %v4938 = vld [vmem:[%s15 + $0x8] sm:$0xff]
      %v4939 = vld [vmem:[%s15 + $0x10] sm:$0x3f]
      %4941 = vset.pattern.permute.xlu0 0
      %4942 = vperm.xlu0 %4941, %v4937
      %v4943 = vpop.permute.xlu0 %4942
      %4946 = vset.pattern.permute.xlu0 0
      %4947 = vperm.xlu0 %4946, %v4938
      %v4948 = vpop.permute.xlu0 %4947
      %4951 = vset.pattern.permute.xlu0 0
      %4952 = vperm.xlu0 %4951, %v4939
      %v4953 = vpop.permute.xlu0 %4952
      %v4955 = vadd.f32 %v4934, %v4943
      %v4956 = vadd.f32 %v4935, %v4948
      %v4957 = vadd.f32 %v4936, %v4953
      %v4958 = vmax.f32 %v4955, 0.0
      %v4959 = vmax.f32 %v4956, 0.0
      %v4960 = vmax.f32 %v4957, 0.0
      %vm4961 = vcmp.lt.s32.totalorder %v1319, 10
      %vm4962 = vmand %vm1320, %vm4961
      %v4963 = vsel %vm4962, %v4958, 0.0
      %v4964 = vsel %vm4962, %v4959, 0.0
      %v4965 = vsel %vm4962, %v4960, 0.0
      %v4966 = vld [vmem:[%s16] sm:$0x7]
      %v4968 = vsel %vm4096, %v4966, 0
      %v4971 = vsel %vm4106, %v4965, 0
      %4973 = vmatprep.subr.mxu0 0.0
      %4974 = vmatpush1.msra.mxu0 %v4963
      %4975 = vmatprep.subr.mxu0 0.0
      %4976 = vmatpush1.msra.mxu0 %v4964
      %4977 = vmatprep.subr.mxu0 0.0
      %4978 = vmatpush1.msra.mxu0 %v4971
      %4979 = vmatprep.subr.mxu0 0.0
      %4980 = vmatpush1.msra.mxu0 0.0
      %4981 = vmatprep.subr.mxu0 0.0
      %4982 = vmatpush1.msra.mxu0 0.0
      %4983 = vmatprep.subr.mxu0 0.0
      %4984 = vmatpush1.msra.mxu0 0.0
      %4985 = vmatprep.subr.mxu0 0.0
      %4986 = vmatpush1.msra.mxu0 0.0
      %4987 = vmatprep.subr.mxu0 0.0
      %4988 = vmatpush1.msra.mxu0 0.0
      %4989 = vmatprep.subr.mxu0 0.0
      %4990 = vmatpush1.msra.mxu0 0.0
      %4991 = vmatprep.subr.mxu0 0.0
      %4992 = vmatpush1.msra.mxu0 0.0
      %4993 = vmatprep.subr.mxu0 0.0
      %4994 = vmatpush1.msra.mxu0 0.0
      %4995 = vmatprep.subr.mxu0 0.0
      %4996 = vmatpush1.msra.mxu0 0.0
      %4997 = vmatprep.subr.mxu0 0.0
      %4998 = vmatpush1.msra.mxu0 0.0
      %4999 = vmatprep.subr.mxu0 0.0
      %5000 = vmatpush1.msra.mxu0 0.0
      %5001 = vmatprep.subr.mxu0 0.0
      %5002 = vmatpush1.msra.mxu0 0.0
      %5003 = vmatprep.subr.mxu0 0.0
      %5004 = vmatpush1.msra.mxu0 0.0
      %5005 = vmatprep.subr.mxu0 0.0
      %5006 = vmatpush1.msra.mxu0 0.0
      %5007 = vmatprep.subr.mxu0 0.0
      %5008 = vmatpush1.msra.mxu0 0.0
      %5009 = vmatprep.subr.mxu0 0.0
      %5010 = vmatpush1.msra.mxu0 0.0
      %5011 = vmatprep.subr.mxu0 0.0
      %5012 = vmatpush1.msra.mxu0 0.0
      %5013 = vmatprep.subr.mxu0 0.0
      %5014 = vmatpush1.msra.mxu0 0.0
      %5015 = vmatprep.subr.mxu0 0.0
      %5016 = vmatpush1.msra.mxu0 0.0
      %5017 = vmatprep.subr.mxu0 0.0
      %5018 = vmatpush1.msra.mxu0 0.0
      %5019 = vmatprep.subr.mxu0 0.0
      %5020 = vmatpush1.msra.mxu0 0.0
      %5021 = vmatprep.subr.mxu0 0.0
      %5022 = vmatpush1.msra.mxu0 0.0
      %5023 = vmatprep.subr.mxu0 0.0
      %5024 = vmatpush1.msra.mxu0 0.0
      %5025 = vmatprep.subr.mxu0 0.0
      %5026 = vmatpush1.msra.mxu0 0.0
      %5027 = vmatprep.subr.mxu0 0.0
      %5028 = vmatpush1.msra.mxu0 0.0
      %5029 = vmatprep.subr.mxu0 0.0
      %5030 = vmatpush1.msra.mxu0 0.0
      %5031 = vmatprep.subr.mxu0 0.0
      %5032 = vmatpush1.msra.mxu0 0.0
      %5033 = vmatprep.subr.mxu0 0.0
      %5034 = vmatpush1.msra.mxu0 0.0
      %5035 = vmatprep.subr.mxu0 0.0
      %5036 = vmatpush1.msra.mxu0 0.0
      %5037 = vmatprep.mubr.f32.mxu0 0.0
      %5038 = vmatmul.mubr.f32.gmra.mrb[0].mxu0 %v4968
      %v5039 = vpop.f32.mrb[0].mxu0
      %v5040 = vadd.f32 0.0, %v5039
      %v5041 = vpop.f32.mrb[0].mxu0
      %5042 = vdwg.mxu0
      %vm5043 = vcmask 108544
      %v5044 = vsel %vm5043, %v5040, 0.0
      %5045 = vadd.xlane.f32.xlu0 %v5044
      %v5046 = vpop.xlane.xlu0 %5045
      %v5047 = vmul.f32 %v5046, 0.16666667
      %v5048 = vld [vmem:[%s17] sm:$0x7]
      %v5049 = vadd.f32 %v5047, %v5048
      %vm5050 = vcmask 2048
      %5051 = vst.msk [vmem:[%s570] sm:$0x7] %vm5050, %v5049
      %p5052 = scmp.lt.s32.totalorder %s29, 1
      %s5053 = scalar_select %p5052, %s29, 1
      %s5054 = smul.addr %s5053, 4
      %s5055 = scalar_lea.vmem %s18, %s5054
      // Predicated region
      $region93: #{tpu_custom_call.1} parent=91 // pred_check
        %p5056 = pneg %p430
      $region94: #{tpu_custom_call.1} parent=91 // pred_check_branch
        %5058 = sbr.rel (%p5056) target = $region96
      $region95: #{tpu_custom_call.1} parent=91 // pred_region
        _
      $region96: #{tpu_custom_call.1} parent=91 // pred_fallthru
        _
    $region92: #{tpu_custom_call.1} parent=5 // pred_fallthru
      _
    %p5059 = scmp.le.s32.totalorder 2, %s24
    // Predicated region
    $region97: #{tpu_custom_call.1} parent=5 // pred_check
      %p5060 = pneg %p5059
    $region98: #{tpu_custom_call.1} parent=5 // pred_check_branch
      %5062 = sbr.rel (%p5060) target = $region100
    $region99: #{tpu_custom_call.1} parent=5 // pred_region
      %s5063 = ssub.s32 %s24, 2
      // Predicated region
      $region101: #{tpu_custom_call.1} parent=99 // pred_check
        %p5064 = pneg %p436
      $region102: #{tpu_custom_call.1} parent=99 // pred_check_branch
        %5066 = sbr.rel (%p5064) target = $region104
      $region103: #{tpu_custom_call.1} parent=99 // pred_region
        %p5067 = scmp.lt.s32.totalorder %s30, 1
        %s5068 = scalar_select %p5067, %s30, 1
        %s5069 = smul.addr %s5068, 4
        %s5070 = scalar_lea.vmem %s18, %s5069
      $region104: #{tpu_custom_call.1} parent=99 // pred_fallthru
        _
    $region100: #{tpu_custom_call.1} parent=5 // pred_fallthru
      _
  $region6: #{tpu_custom_call.1} parent=0 // loop_footer
    %s28 = sadd.s32 1, %s24
  $region7: #{tpu_custom_call.1} parent=0 // loop_footer_branch
    %23 = sbr.rel target = $region3
  $region8: #{tpu_custom_call.1} parent=0 // loop_exit
    _

</llo_original>
